<compile_context>
chip_gen: v7x
topology: tpu7x:2x2x1
jax: 0.10.0
libtpu: 0.0.40
codegen_flags: <defaults>
</compile_context>

<pallas_src>
import functools

import jax
import jax.numpy as jnp
import numpy as np
from jax.experimental import pallas as pl
from jax.experimental.pallas import tpu as pltpu

LANE = 128                 # lane width: channel dims padded to multiples of this
ROW_ALIGN = 16             # bf16 sublane packing: node/row tiles kept multiples of 16
MAX_AGG_ROWS = 256         # row-tile cap for aggregation / fused-layer kernels
MAX_TRANSFORM_ROWS = 512   # larger row tiles for the small-K transform kernels
MAX_K_TILE = 512           # reduction-tile cap for the adjacency K axis
FULL_K_MAX_ROWS = 512      # graphs up to this many padded nodes keep the full K resident


def _round_up(v, m):
    return ((v + m - 1) // m) * m


def _vmem_limit_bytes():
    """~75% of physical VMEM, capped; safe fallback (48 MiB) if the query fails (v7x-safe)."""
    default = 48 * 1024 * 1024
    try:
        cap = int(pltpu.get_tpu_info().vmem_capacity_bytes)
    except Exception:
        return default
    if cap <= 0:
        return default
    return max(32 * 1024 * 1024, min(cap * 3 // 4, 100 * 1024 * 1024))


VMEM_LIMIT = _vmem_limit_bytes()


def _choose_row_tile(n_pad, cap, min_tiles=2):
    """Largest multiple of ROW_ALIGN dividing n_pad, <= cap, preferring >= min_tiles tiles."""
    limit = min(cap, n_pad)
    if min_tiles > 1:
        limit = min(limit, max(ROW_ALIGN, n_pad // min_tiles))
    limit = max(ROW_ALIGN, (limit // ROW_ALIGN) * ROW_ALIGN)
    for t in range(limit, ROW_ALIGN - 1, -ROW_ALIGN):
        if n_pad % t == 0:
            return t
    return n_pad


def _choose_k_tile(n_pad):
    """Reduction tile along the adjacency columns (must be a multiple of 128 or full)."""
    if n_pad <= FULL_K_MAX_ROWS or n_pad % LANE != 0:
        return n_pad
    for t in range(MAX_K_TILE, LANE - 1, -LANE):
        if n_pad % t == 0:
            return t
    return n_pad


# ---------------------------------------------------------------------------
# Pallas kernels
# ---------------------------------------------------------------------------
def _masked_log_softmax(acc, n_valid):
    """log_softmax over axis 1, restricted to the first n_valid (unpadded) lanes."""
    lane = jax.lax.broadcasted_iota(jnp.int32, acc.shape, 1)
    valid = lane < n_valid
    xm = jnp.where(valid, acc, -jnp.inf)
    m = jnp.max(xm, axis=1, keepdims=True)
    e = jnp.where(valid, jnp.exp(xm - m), 0.0)
    lse = m + jnp.log(jnp.sum(e, axis=1, keepdims=True))
    return jnp.where(valid, acc - lse, 0.0)


def aggregate_kernel(adj_ref, x_ref, out_ref, acc_ref):
    # grid = (row_tile i, relation r, reduction k); out column-block r gets adj[r] @ x.
    k = pl.program_id(2)

    @pl.when(k == 0)
    def _():
        acc_ref[...] = jnp.zeros_like(acc_ref)

    acc_ref[...] += jnp.dot(adj_ref[...], x_ref[...],
                            preferred_element_type=jnp.float32)

    @pl.when(k == pl.num_programs(2) - 1)
    def _():
        out_ref[...] = acc_ref[...].astype(out_ref.dtype)


def transform_kernel(h_ref, x_ref, wcat_ref, wroot_ref, bias_ref, out_ref):
    # hidden = relu(x @ w_root + bias + H @ concat(w_rel)); stored bf16 for the next layer.
    acc = jnp.dot(x_ref[...], wroot_ref[...], preferred_element_type=jnp.float32)
    acc = acc + bias_ref[...]
    acc = acc + jnp.dot(h_ref[...], wcat_ref[...], preferred_element_type=jnp.float32)
    out_ref[...] = jnp.maximum(acc, 0.0).astype(out_ref.dtype)


def transform_final_kernel(h_ref, x_ref, wcat_ref, wroot_ref, bias_ref,
                           logits_ref, logp_ref, *, n_valid):
    acc = jnp.dot(x_ref[...], wroot_ref[...], preferred_element_type=jnp.float32)
    acc = acc + bias_ref[...]
    acc = acc + jnp.dot(h_ref[...], wcat_ref[...], preferred_element_type=jnp.float32)
    logits_ref[...] = acc
    logp_ref[...] = _masked_log_softmax(acc, n_valid)


def fused_layer_kernel(adj_ref, hk_ref, hi_ref, wcat_ref, wroot_ref, bias_ref,
                       out_ref, acc_ref, *, num_rel, c_in):
    # One whole RGCN layer per row tile: per-relation aggregation accumulated over K into
    # VMEM, then root/relation transform + ReLU applied before a single bf16 store.
    k = pl.program_id(1)

    @pl.when(k == 0)
    def _():
        acc_ref[...] = jnp.zeros_like(acc_ref)

    hk = hk_ref[...]
    for r in range(num_rel):
        acc_ref[:, r * c_in:(r + 1) * c_in] += jnp.dot(
            adj_ref[r], hk, preferred_element_type=jnp.float32)

    @pl.when(k == pl.num_programs(1) - 1)
    def _():
        out = jnp.dot(hi_ref[...], wroot_ref[...], preferred_element_type=jnp.float32)
        out = out + bias_ref[...]
        out = out + jnp.dot(acc_ref[...].astype(jnp.bfloat16), wcat_ref[...],
                            preferred_element_type=jnp.float32)
        out_ref[...] = jnp.maximum(out, 0.0).astype(out_ref.dtype)


def fused_final_kernel(adj_ref, hk_ref, hi_ref, wcat_ref, wroot_ref, bias_ref,
                       logits_ref, logp_ref, acc_ref, *, num_rel, c_in, n_valid):
    # Final RGCN layer per row tile with fused masked log_softmax (logits + log-probs).
    k = pl.program_id(1)

    @pl.when(k == 0)
    def _():
        acc_ref[...] = jnp.zeros_like(acc_ref)

    hk = hk_ref[...]
    for r in range(num_rel):
        acc_ref[:, r * c_in:(r + 1) * c_in] += jnp.dot(
            adj_ref[r], hk, preferred_element_type=jnp.float32)

    @pl.when(k == pl.num_programs(1) - 1)
    def _():
        out = jnp.dot(hi_ref[...], wroot_ref[...], preferred_element_type=jnp.float32)
        out = out + bias_ref[...]
        out = out + jnp.dot(acc_ref[...].astype(jnp.bfloat16), wcat_ref[...],
                            preferred_element_type=jnp.float32)
        logits_ref[...] = out
        logp_ref[...] = _masked_log_softmax(out, n_valid)


# ---------------------------------------------------------------------------
# Pallas wrappers
# ---------------------------------------------------------------------------
def aggregate(adj_bf16, x_bf16, *, tile_rows, tile_k):
    """H[:, r*C:(r+1)*C] = adj[r] @ x for all relations, K-tiled, bf16 output."""
    num_rel, n_pad, _ = adj_bf16.shape
    c = x_bf16.shape[1]
    return pl.pallas_call(
        aggregate_kernel,
        out_shape=jax.ShapeDtypeStruct((n_pad, num_rel * c), jnp.bfloat16),
        grid_spec=pltpu.PrefetchScalarGridSpec(
            num_scalar_prefetch=0,
            grid=(n_pad // tile_rows, num_rel, n_pad // tile_k),
            in_specs=[
                # squeezed relation dim -> kernel sees a clean 2-D adj tile
                pl.BlockSpec((None, tile_rows, tile_k), lambda i, r, k: (r, i, k)),
                pl.BlockSpec((tile_k, c), lambda i, r, k: (k, 0)),
            ],
            out_specs=pl.BlockSpec((tile_rows, c), lambda i, r, k: (i, r)),
            scratch_shapes=[pltpu.VMEM((tile_rows, c), jnp.float32)],
        ),
        compiler_params=pltpu.CompilerParams(
            dimension_semantics=("parallel", "parallel", "arbitrary"),
            vmem_limit_bytes=VMEM_LIMIT,
        ),
    )(adj_bf16, x_bf16)


def transform(h_agg, x, p, *, tile_rows):
    n_pad, rc = h_agg.shape
    c = x.shape[1]
    o = p["w_root"].shape[1]
    return pl.pallas_call(
        transform_kernel,
        out_shape=jax.ShapeDtypeStruct((n_pad, o), jnp.bfloat16),
        grid_spec=pltpu.PrefetchScalarGridSpec(
            num_scalar_prefetch=0,
            grid=(n_pad // tile_rows,),
            in_specs=[
                pl.BlockSpec((tile_rows, rc), lambda i: (i, 0)),
                pl.BlockSpec((tile_rows, c), lambda i: (i, 0)),
                pl.BlockSpec((rc, o), lambda i: (0, 0)),
                pl.BlockSpec((c, o), lambda i: (0, 0)),
                pl.BlockSpec((1, o), lambda i: (0, 0)),
            ],
            out_specs=pl.BlockSpec((tile_rows, o), lambda i: (i, 0)),
        ),
        compiler_params=pltpu.CompilerParams(
            dimension_semantics=("parallel",),
            vmem_limit_bytes=VMEM_LIMIT,
        ),
    )(h_agg, x, p["w_cat"], p["w_root"], p["bias2"])


def transform_final(h_agg, x, p, *, n_classes, tile_rows):
    n_pad, rc = h_agg.shape
    c = x.shape[1]
    o = p["w_root"].shape[1]
    kernel = functools.partial(transform_final_kernel, n_valid=n_classes)
    return pl.pallas_call(
        kernel,
        out_shape=(jax.ShapeDtypeStruct((n_pad, o), jnp.float32),
                   jax.ShapeDtypeStruct((n_pad, o), jnp.float32)),
        grid_spec=pltpu.PrefetchScalarGridSpec(
            num_scalar_prefetch=0,
            grid=(n_pad // tile_rows,),
            in_specs=[
                pl.BlockSpec((tile_rows, rc), lambda i: (i, 0)),
                pl.BlockSpec((tile_rows, c), lambda i: (i, 0)),
                pl.BlockSpec((rc, o), lambda i: (0, 0)),
                pl.BlockSpec((c, o), lambda i: (0, 0)),
                pl.BlockSpec((1, o), lambda i: (0, 0)),
            ],
            out_specs=(pl.BlockSpec((tile_rows, o), lambda i: (i, 0)),
                       pl.BlockSpec((tile_rows, o), lambda i: (i, 0))),
        ),
        compiler_params=pltpu.CompilerParams(
            dimension_semantics=("parallel",),
            vmem_limit_bytes=VMEM_LIMIT,
        ),
    )(h_agg, x, p["w_cat"], p["w_root"], p["bias2"])


def fused_layer(adj_bf16, h, p, *, tile_rows, tile_k, final, n_classes=None):
    """Fused aggregation + transform for layers >= 1 (no H round-trip through HBM)."""
    num_rel, n_pad, _ = adj_bf16.shape
    c_in = h.shape[1]
    c_out = p["w_root"].shape[1]
    in_specs = [
        pl.BlockSpec((num_rel, tile_rows, tile_k), lambda i, k: (0, i, k)),
        pl.BlockSpec((tile_k, c_in), lambda i, k: (k, 0)),     # h, K-tiled (aggregation)
        pl.BlockSpec((tile_rows, c_in), lambda i, k: (i, 0)),  # h, row-tiled (root term)
        pl.BlockSpec((num_rel * c_in, c_out), lambda i, k: (0, 0)),
        pl.BlockSpec((c_in, c_out), lambda i, k: (0, 0)),
        pl.BlockSpec((1, c_out), lambda i, k: (0, 0)),
    ]
    scratch = [pltpu.VMEM((tile_rows, num_rel * c_in), jnp.float32)]
    grid = (n_pad // tile_rows, n_pad // tile_k)
    if final:
        kernel = functools.partial(fused_final_kernel, num_rel=num_rel,
                                   c_in=c_in, n_valid=n_classes)
        out_shape = (jax.ShapeDtypeStruct((n_pad, c_out), jnp.float32),
                     jax.ShapeDtypeStruct((n_pad, c_out), jnp.float32))
        out_specs = (pl.BlockSpec((tile_rows, c_out), lambda i, k: (i, 0)),
                     pl.BlockSpec((tile_rows, c_out), lambda i, k: (i, 0)))
    else:
        kernel = functools.partial(fused_layer_kernel, num_rel=num_rel, c_in=c_in)
        out_shape = jax.ShapeDtypeStruct((n_pad, c_out), jnp.bfloat16)
        out_specs = pl.BlockSpec((tile_rows, c_out), lambda i, k: (i, 0))
    return pl.pallas_call(
        kernel,
        out_shape=out_shape,
        grid_spec=pltpu.PrefetchScalarGridSpec(
            num_scalar_prefetch=0, grid=grid,
            in_specs=in_specs, out_specs=out_specs, scratch_shapes=scratch),
        compiler_params=pltpu.CompilerParams(
            dimension_semantics=("parallel", "arbitrary"),
            vmem_limit_bytes=VMEM_LIMIT,
        ),
    )(adj_bf16, h, h, p["w_cat"], p["w_root"], p["bias2"])


# ---------------------------------------------------------------------------
# Model forward (RGCNBlock + KnowRGFD)
# ---------------------------------------------------------------------------
def rgcn_block(params_padded, adj_bf16, x_pad, agg0, *, n_classes,
               agg_rows, agg_k, tr_rows):
    """RGCNConv stack with ReLU between layers; final layer fuses log_softmax."""
    n_layers = len(params_padded)
    h = x_pad
    for i, p in enumerate(params_padded):
        is_last = i == n_layers - 1
        if i == 0:
            # Layer 0 consumes the shared aggregation (identical for both blocks).
            if is_last:
                return transform_final(agg0, h, p, n_classes=n_classes, tile_rows=tr_rows)
            h = transform(agg0, h, p, tile_rows=tr_rows)
        else:
            if is_last:
                return fused_layer(adj_bf16, h, p, tile_rows=agg_rows, tile_k=agg_k,
                                   final=True, n_classes=n_classes)
            h = fused_layer(adj_bf16, h, p, tile_rows=agg_rows, tile_k=agg_k, final=False)


@functools.partial(jax.jit,
                   static_argnames=("n_nodes", "n_classes", "agg_rows", "agg_k", "tr_rows"))
def know_rgfd_forward(local_params, global_params, x_pad, adj_bf16, *,
                      n_nodes, n_classes, agg_rows, agg_k, tr_rows):
    # Layer-0 aggregation (adj[r] @ x) is identical for both blocks — compute it once.
    agg0 = aggregate(adj_bf16, x_pad, tile_rows=agg_rows, tile_k=agg_k)
    logits_l, logp_l = rgcn_block(local_params, adj_bf16, x_pad, agg0,
                                  n_classes=n_classes, agg_rows=agg_rows,
                                  agg_k=agg_k, tr_rows=tr_rows)
    logits_g, logp_g = rgcn_block(global_params, adj_bf16, x_pad, agg0,
                                  n_classes=n_classes, agg_rows=agg_rows,
                                  agg_k=agg_k, tr_rows=tr_rows)
    logits_local = logits_l[:n_nodes, :n_classes]
    logits_global = logits_g[:n_nodes, :n_classes]
    prob_local = logp_l[:n_nodes, :n_classes]
    prob_global = logp_g[:n_nodes, :n_classes]
    # Matches the PyTorch return tuple:
    # (logits_local, logits_global, prob_local, logits_global, logits_global, prob_global)
    return (logits_local, logits_global, prob_local, logits_global,
            logits_global, prob_global)


# ---------------------------------------------------------------------------
# Parameter / graph construction (plain-JAX glue)
# ---------------------------------------------------------------------------
def init_rgcn_block(key, in_dim, hidden_dim, out_dim, num_relations, num_layers):
    params = []
    for i in range(num_layers):
        in_c = in_dim if i == 0 else hidden_dim
        out_c = hidden_dim if i < num_layers - 1 else out_dim
        key, k1, k2 = jax.random.split(key, 3)
        scale = 1.0 / np.sqrt(in_c)
        params.append({
            "w_rel": jax.random.normal(k1, (num_relations, in_c, out_c), jnp.float32) * scale,
            "w_root": jax.random.normal(k2, (in_c, out_c), jnp.float32) * scale,
            "bias": jnp.zeros((out_c,), jnp.float32),
        })
    return params, key


def pad_block_params(params):
    """Zero-pad channels to lane width, concat relation weights along K, cast to bf16."""
    padded = []
    for p in params:
        r, c_in, c_out = p["w_rel"].shape
        ci = _round_up(c_in, LANE)
        co = _round_up(c_out, LANE)
        w_rel_p = jnp.zeros((r, ci, co), jnp.float32).at[:, :c_in, :c_out].set(p["w_rel"])
        padded.append({
            "w_cat": w_rel_p.reshape(r * ci, co).astype(jnp.bfloat16),   # (R*Cin_p, Cout_p)
            "w_root": jnp.zeros((ci, co), jnp.float32)
                      .at[:c_in, :c_out].set(p["w_root"]).astype(jnp.bfloat16),
            "bias2": jnp.zeros((1, co), jnp.float32).at[0, :c_out].set(p["bias"]),
        })
    return padded


def build_normalized_adj(edge_index, edge_type, num_nodes, num_relations):
    """adj[r, dst, src] = 1/deg_r(dst) per edge (mean aggregation per relation)."""
    # TODO(synk): for large sparse graphs, replace this dense adjacency with block-sparse
    # tiles + scalar-prefetched block indices so zero tiles are never streamed.
    src = edge_index[0]
    dst = edge_index[1]
    adj = jnp.zeros((num_relations, num_nodes, num_nodes), jnp.float32)
    adj = adj.at[edge_type, dst, src].add(1.0)
    deg = jnp.sum(adj, axis=-1, keepdims=True)
    return adj / jnp.maximum(deg, 1.0)


def pad_graph(adj, x):
    """Pad nodes (sublane) / features (lane); cast everything streamed to bf16."""
    num_relations, n, _ = adj.shape
    f = x.shape[1]
    n16 = _round_up(n, ROW_ALIGN)
    # Small graphs: minimal (16-aligned) node padding, full K resident.
    # Large graphs: pad nodes to a lane multiple so the K axis can be tiled (v7x VMEM-safe).
    n_pad = n16 if n16 <= FULL_K_MAX_ROWS else _round_up(n, LANE)
    f_pad = _round_up(f, LANE)
    adj_p = jnp.zeros((num_relations, n_pad, n_pad), jnp.float32).at[:, :n, :n].set(adj)
    x_p = jnp.zeros((n_pad, f_pad), jnp.float32).at[:n, :f].set(x)
    return adj_p.astype(jnp.bfloat16), x_p.astype(jnp.bfloat16), n_pad


# Pure-JAX f32 reference for validation.
def _ref_block(params, adj, x):
    h = x
    for i, p in enumerate(params):
        out = h @ p["w_root"] + p["bias"][None, :]
        out = out + jnp.einsum("rij,jc,rco->io", adj, h, p["w_rel"])
        if i < len(params) - 1:
            out = jnp.maximum(out, 0.0)
        h = out
    return h


def run_case(num_nodes, num_edges, num_features, hidden, num_classes,
             num_relations, local_layers, global_layers, seed):
    key = jax.random.PRNGKey(seed)
    key, kx, ks, kd, kt = jax.random.split(key, 5)

    x = jax.random.normal(kx, (num_nodes, num_features), jnp.float32)
    src = jax.random.randint(ks, (num_edges,), 0, num_nodes)
    dst = jax.random.randint(kd, (num_edges,), 0, num_nodes)
    edge_index = jnp.stack([src, dst], axis=0)
    edge_type = jax.random.randint(kt, (num_edges,), 0, num_relations)

    adj = build_normalized_adj(edge_index, edge_type, num_nodes, num_relations)

    local_raw, key = init_rgcn_block(key, num_features, hidden, num_classes,
                                     num_relations, local_layers)
    global_raw, key = init_rgcn_block(key, num_features, hidden, num_classes,
                                      num_relations, global_layers)
    local_params = pad_block_params(local_raw)
    global_params = pad_block_params(global_raw)

    adj_bf16, x_pad, n_pad = pad_graph(adj, x)
    agg_rows = _choose_row_tile(n_pad, MAX_AGG_ROWS)
    tr_rows = _choose_row_tile(n_pad, MAX_TRANSFORM_ROWS)
    agg_k = _choose_k_tile(n_pad)

    outputs = know_rgfd_forward(local_params, global_params, x_pad, adj_bf16,
                                n_nodes=num_nodes, n_classes=num_classes,
                                agg_rows=agg_rows, agg_k=agg_k, tr_rows=tr_rows)
    outputs = jax.block_until_ready(outputs)

    # Validate against a pure-JAX f32 reference of the same math.  Tolerance accounts for
    # bf16 quantization of adjacency, activations, H and weights (f32 accumulation).
    ref_local = _ref_block(local_raw, adj, x)
    ref_global = _ref_block(global_raw, adj, x)
    ref_pl = jax.nn.log_softmax(ref_local, axis=1)
    ref_pg = jax.nn.log_softmax(ref_global, axis=1)

    tol = dict(rtol=5e-2, atol=5e-2)
    np.testing.assert_allclose(np.asarray(outputs[0]), np.asarray(ref_local), **tol)
    np.testing.assert_allclose(np.asarray(outputs[1]), np.asarray(ref_global), **tol)
    np.testing.assert_allclose(np.asarray(outputs[2]), np.asarray(ref_pl), **tol)
    np.testing.assert_allclose(np.asarray(outputs[5]), np.asarray(ref_pg), **tol)


if __name__ == "__main__":
    # Small graph (sizes implied by the module): exercises the full-K-resident path and
    # the shared layer-0 aggregation + fused final layers.
    run_case(num_nodes=16, num_edges=48, num_features=16, hidden=32, num_classes=8,
             num_relations=3, local_layers=2, global_layers=3, seed=0)
    # Larger graph: exercises the K-tiled reduction path (bounded VMEM, v7x-safe).
    run_case(num_nodes=600, num_edges=3000, num_features=16, hidden=32, num_classes=8,
             num_relations=3, local_layers=2, global_layers=3, seed=1)
    print("KERNEL_OK")
</pallas_src>

<mosaic_0001>
module attributes {stable_mosaic.version = 11 : i64} {
  func.func @transform_kernel(%arg0: i32, %arg1: memref<16x384xbf16, #tpu.memory_space<vmem>>, %arg2: memref<16x128xbf16, #tpu.memory_space<vmem>>, %arg3: memref<384x128xbf16, #tpu.memory_space<vmem>>, %arg4: memref<128x128xbf16, #tpu.memory_space<vmem>>, %arg5: memref<1x128xf32, #tpu.memory_space<vmem>>, %arg6: memref<16x128xbf16, #tpu.memory_space<vmem>>) attributes {dimension_semantics = [#tpu.dimension_semantics<parallel>], iteration_bounds = array<i64: 1>, scalar_prefetch = 0 : i64, scratch_operands = 0 : i64, tpu.core_type = #tpu.core_type<tc>, window_params = [{transform_indices = @transform_0, window_bounds = array<i64: 16, 384>}, {transform_indices = @transform_1, window_bounds = array<i64: 16, 128>}, {pipeline_mode = #tpu.pipeline_mode<synchronous>, transform_indices = @transform_2, window_bounds = array<i64: 384, 128>}, {pipeline_mode = #tpu.pipeline_mode<synchronous>, transform_indices = @transform_3, window_bounds = array<i64: 128, 128>}, {pipeline_mode = #tpu.pipeline_mode<synchronous>, transform_indices = @transform_4, window_bounds = array<i64: 1, 128>}, {transform_indices = @transform_5, window_bounds = array<i64: 16, 128>}]} {
    %c0 = arith.constant 0 : index
    %c0_0 = arith.constant 0 : index
    %0 = vector.load %arg2[%c0, %c0_0] : memref<16x128xbf16, #tpu.memory_space<vmem>>, vector<16x128xbf16>
    %c0_1 = arith.constant 0 : index
    %c0_2 = arith.constant 0 : index
    %1 = vector.load %arg4[%c0_1, %c0_2] : memref<128x128xbf16, #tpu.memory_space<vmem>>, vector<128x128xbf16>
    %cst = arith.constant dense<0.000000e+00> : vector<16x128xf32>
    %2 = tpu.matmul %0, %1, %cst {dimension_numbers = #tpu.dot_dimension_numbers<[1], [0], [0], [1], [0, 0, 1, 1], [], []>} : vector<16x128xbf16>, vector<128x128xbf16>, vector<16x128xf32> -> vector<16x128xf32>
    %c0_3 = arith.constant 0 : index
    %c0_4 = arith.constant 0 : index
    %3 = vector.load %arg5[%c0_3, %c0_4] : memref<1x128xf32, #tpu.memory_space<vmem>>, vector<1x128xf32>
    %4 = vector.broadcast %3 : vector<1x128xf32> to vector<16x128xf32>
    %5 = arith.addf %2, %4 : vector<16x128xf32>
    %c0_5 = arith.constant 0 : index
    %c0_6 = arith.constant 0 : index
    %6 = vector.load %arg1[%c0_5, %c0_6] : memref<16x384xbf16, #tpu.memory_space<vmem>>, vector<16x384xbf16>
    %c0_7 = arith.constant 0 : index
    %c0_8 = arith.constant 0 : index
    %7 = vector.load %arg3[%c0_7, %c0_8] : memref<384x128xbf16, #tpu.memory_space<vmem>>, vector<384x128xbf16>
    %cst_9 = arith.constant dense<0.000000e+00> : vector<16x128xf32>
    %8 = tpu.matmul %6, %7, %cst_9 {dimension_numbers = #tpu.dot_dimension_numbers<[1], [0], [0], [1], [0, 0, 1, 1], [], []>} : vector<16x384xbf16>, vector<384x128xbf16>, vector<16x128xf32> -> vector<16x128xf32>
    %9 = arith.addf %5, %8 : vector<16x128xf32>
    %cst_10 = arith.constant 0.000000e+00 : f32
    %10 = vector.broadcast %cst_10 : f32 to vector<16x128xf32>
    %11 = arith.maximumf %9, %10 : vector<16x128xf32>
    %12 = arith.truncf %11 : vector<16x128xf32> to vector<16x128xbf16>
    %c0_11 = arith.constant 0 : index
    %c0_12 = arith.constant 0 : index
    %13 = vector.load %arg6[%c0_11, %c0_12] : memref<16x128xbf16, #tpu.memory_space<vmem>>, vector<16x128xbf16>
    tpu.vector_store %arg6[%c0_11, %c0_12], %12 {strides = array<i32>} : memref<16x128xbf16, #tpu.memory_space<vmem>>, vector<16x128xbf16>,
    return
  }
  func.func @transform_0(%arg0: i32) -> (i32, i32) {
    %c0_i32 = arith.constant 0 : i32
    %c0_i32_0 = arith.constant 0 : i32
    return %arg0, %c0_i32 : i32, i32
  }
  func.func @transform_1(%arg0: i32) -> (i32, i32) {
    %c0_i32 = arith.constant 0 : i32
    %c0_i32_0 = arith.constant 0 : i32
    return %arg0, %c0_i32 : i32, i32
  }
  func.func @transform_2(%arg0: i32) -> (i32, i32) {
    %c0_i32 = arith.constant 0 : i32
    %c0_i32_0 = arith.constant 0 : i32
    %c0_i32_1 = arith.constant 0 : i32
    return %c0_i32, %c0_i32_0 : i32, i32
  }
  func.func @transform_3(%arg0: i32) -> (i32, i32) {
    %c0_i32 = arith.constant 0 : i32
    %c0_i32_0 = arith.constant 0 : i32
    %c0_i32_1 = arith.constant 0 : i32
    return %c0_i32, %c0_i32_0 : i32, i32
  }
  func.func @transform_4(%arg0: i32) -> (i32, i32) {
    %c0_i32 = arith.constant 0 : i32
    %c0_i32_0 = arith.constant 0 : i32
    %c0_i32_1 = arith.constant 0 : i32
    return %c0_i32, %c0_i32_0 : i32, i32
  }
  func.func @transform_5(%arg0: i32) -> (i32, i32) {
    %c0_i32 = arith.constant 0 : i32
    %c0_i32_0 = arith.constant 0 : i32
    return %arg0, %c0_i32 : i32, i32
  }
}

module attributes {stable_mosaic.version = 11 : i64} {
  func.func @fused_final_kernel(%arg0: i32, %arg1: i32, %arg2: memref<3x16x16xbf16, #tpu.memory_space<vmem>>, %arg3: memref<16x128xbf16, #tpu.memory_space<vmem>>, %arg4: memref<16x128xbf16, #tpu.memory_space<vmem>>, %arg5: memref<384x128xbf16, #tpu.memory_space<vmem>>, %arg6: memref<128x128xbf16, #tpu.memory_space<vmem>>, %arg7: memref<1x128xf32, #tpu.memory_space<vmem>>, %arg8: memref<16x128xf32, #tpu.memory_space<vmem>>, %arg9: memref<16x128xf32, #tpu.memory_space<vmem>>, %arg10: memref<16x384xf32, #tpu.memory_space<vmem>>) attributes {dimension_semantics = [#tpu.dimension_semantics<parallel>, #tpu.dimension_semantics<arbitrary>], iteration_bounds = array<i64: 1, 1>, scalar_prefetch = 0 : i64, scratch_operands = 1 : i64, tpu.core_type = #tpu.core_type<tc>, window_params = [{transform_indices = @transform_0, window_bounds = array<i64: 3, 16, 16>}, {transform_indices = @transform_1, window_bounds = array<i64: 16, 128>}, {transform_indices = @transform_2, window_bounds = array<i64: 16, 128>}, {pipeline_mode = #tpu.pipeline_mode<synchronous>, transform_indices = @transform_3, window_bounds = array<i64: 384, 128>}, {pipeline_mode = #tpu.pipeline_mode<synchronous>, transform_indices = @transform_4, window_bounds = array<i64: 128, 128>}, {pipeline_mode = #tpu.pipeline_mode<synchronous>, transform_indices = @transform_5, window_bounds = array<i64: 1, 128>}, {transform_indices = @transform_6, window_bounds = array<i64: 16, 128>}, {transform_indices = @transform_7, window_bounds = array<i64: 16, 128>}]} {
    %c0_i32 = arith.constant 0 : i32
    %0 = arith.cmpi eq, %arg1, %c0_i32 : i32
    %1 = arith.extui %0 : i1 to i32
    %c0_i32_0 = arith.constant 0 : i32
    %2 = arith.cmpi ne, %1, %c0_i32_0 : i32
    scf.if %2 {
      %cst_23 = arith.constant 0.000000e+00 : f32
      %25 = vector.broadcast %cst_23 : f32 to vector<16x384xf32>
      %c0_24 = arith.constant 0 : index
      %c0_25 = arith.constant 0 : index
      %26 = vector.load %arg10[%c0_24, %c0_25] : memref<16x384xf32, #tpu.memory_space<vmem>>, vector<16x384xf32>
      tpu.vector_store %arg10[%c0_24, %c0_25], %25 {strides = array<i32>} : memref<16x384xf32, #tpu.memory_space<vmem>>, vector<16x384xf32>,
    } else {
    }
    %c0 = arith.constant 0 : index
    %c0_1 = arith.constant 0 : index
    %3 = vector.load %arg3[%c0, %c0_1] : memref<16x128xbf16, #tpu.memory_space<vmem>>, vector<16x128xbf16>
    %c0_2 = arith.constant 0 : index
    %c0_3 = arith.constant 0 : index
    %4 = vector.load %arg10[%c0_2, %c0_3] : memref<16x384xf32, #tpu.memory_space<vmem>>, vector<16x128xf32>
    %c0_4 = arith.constant 0 : index
    %c0_5 = arith.constant 0 : index
    %c0_6 = arith.constant 0 : index
    %5 = vector.load %arg2[%c0_4, %c0_5, %c0_6] : memref<3x16x16xbf16, #tpu.memory_space<vmem>>, vector<1x16x16xbf16>
    %6 = vector.shape_cast %5 : vector<1x16x16xbf16> to vector<16x16xbf16>
    %cst = arith.constant dense<0.000000e+00> : vector<16x128xf32>
    %7 = tpu.matmul %6, %3, %cst {dimension_numbers = #tpu.dot_dimension_numbers<[1], [0], [0], [1], [0, 0, 1, 1], [], []>} : vector<16x16xbf16>, vector<16x128xbf16>, vector<16x128xf32> -> vector<16x128xf32>
    %8 = arith.addf %4, %7 : vector<16x128xf32>
    %c0_7 = arith.constant 0 : index
    %c0_8 = arith.constant 0 : index
    %9 = vector.load %arg10[%c0_7, %c0_8] : memref<16x384xf32, #tpu.memory_space<vmem>>, vector<16x128xf32>
    tpu.vector_store %arg10[%c0_7, %c0_8], %8 {strides = array<i32>} : memref<16x384xf32, #tpu.memory_space<vmem>>, vector<16x128xf32>,
    %c0_9 = arith.constant 0 : index
    %c128 = arith.constant 128 : index
    %10 = vector.load %arg10[%c0_9, %c128] : memref<16x384xf32, #tpu.memory_space<vmem>>, vector<16x128xf32>
    %c1 = arith.constant 1 : index
    %c0_10 = arith.constant 0 : index
    %c0_11 = arith.constant 0 : index
    %11 = vector.load %arg2[%c1, %c0_10, %c0_11] : memref<3x16x16xbf16, #tpu.memory_space<vmem>>, vector<1x16x16xbf16>
    %12 = vector.shape_cast %11 : vector<1x16x16xbf16> to vector<16x16xbf16>
    %cst_12 = arith.constant dense<0.000000e+00> : vector<16x128xf32>
    %13 = tpu.matmul %12, %3, %cst_12 {dimension_numbers = #tpu.dot_dimension_numbers<[1], [0], [0], [1], [0, 0, 1, 1], [], []>} : vector<16x16xbf16>, vector<16x128xbf16>, vector<16x128xf32> -> vector<16x128xf32>
    %14 = arith.addf %10, %13 : vector<16x128xf32>
    %c0_13 = arith.constant 0 : index
    %c128_14 = arith.constant 128 : index
    %15 = vector.load %arg10[%c0_13, %c128_14] : memref<16x384xf32, #tpu.memory_space<vmem>>, vector<16x128xf32>
    tpu.vector_store %arg10[%c0_13, %c128_14], %14 {strides = array<i32>} : memref<16x384xf32, #tpu.memory_space<vmem>>, vector<16x128xf32>,
    %c0_15 = arith.constant 0 : index
    %c256 = arith.constant 256 : index
    %16 = vector.load %arg10[%c0_15, %c256] : memref<16x384xf32, #tpu.memory_space<vmem>>, vector<16x128xf32>
    %c2 = arith.constant 2 : index
    %c0_16 = arith.constant 0 : index
    %c0_17 = arith.constant 0 : index
    %17 = vector.load %arg2[%c2, %c0_16, %c0_17] : memref<3x16x16xbf16, #tpu.memory_space<vmem>>, vector<1x16x16xbf16>
    %18 = vector.shape_cast %17 : vector<1x16x16xbf16> to vector<16x16xbf16>
    %cst_18 = arith.constant dense<0.000000e+00> : vector<16x128xf32>
    %19 = tpu.matmul %18, %3, %cst_18 {dimension_numbers = #tpu.dot_dimension_numbers<[1], [0], [0], [1], [0, 0, 1, 1], [], []>} : vector<16x16xbf16>, vector<16x128xbf16>, vector<16x128xf32> -> vector<16x128xf32>
    %20 = arith.addf %16, %19 : vector<16x128xf32>
    %c0_19 = arith.constant 0 : index
    %c256_20 = arith.constant 256 : index
    %21 = vector.load %arg10[%c0_19, %c256_20] : memref<16x384xf32, #tpu.memory_space<vmem>>, vector<16x128xf32>
    tpu.vector_store %arg10[%c0_19, %c256_20], %20 {strides = array<i32>} : memref<16x384xf32, #tpu.memory_space<vmem>>, vector<16x128xf32>,
    %c0_i32_21 = arith.constant 0 : i32
    %22 = arith.cmpi eq, %arg1, %c0_i32_21 : i32
    %23 = arith.extui %22 : i1 to i32
    %c0_i32_22 = arith.constant 0 : i32
    %24 = arith.cmpi ne, %23, %c0_i32_22 : i32
    scf.if %24 {
      %c0_23 = arith.constant 0 : index
      %c0_24 = arith.constant 0 : index
      %25 = vector.load %arg4[%c0_23, %c0_24] : memref<16x128xbf16, #tpu.memory_space<vmem>>, vector<16x128xbf16>
      %c0_25 = arith.constant 0 : index
      %c0_26 = arith.constant 0 : index
      %26 = vector.load %arg6[%c0_25, %c0_26] : memref<128x128xbf16, #tpu.memory_space<vmem>>, vector<128x128xbf16>
      %cst_27 = arith.constant dense<0.000000e+00> : vector<16x128xf32>
      %27 = tpu.matmul %25, %26, %cst_27 {dimension_numbers = #tpu.dot_dimension_numbers<[1], [0], [0], [1], [0, 0, 1, 1], [], []>} : vector<16x128xbf16>, vector<128x128xbf16>, vector<16x128xf32> -> vector<16x128xf32>
      %c0_28 = arith.constant 0 : index
      %c0_29 = arith.constant 0 : index
      %28 = vector.load %arg7[%c0_28, %c0_29] : memref<1x128xf32, #tpu.memory_space<vmem>>, vector<1x128xf32>
      %29 = vector.broadcast %28 : vector<1x128xf32> to vector<16x128xf32>
      %30 = arith.addf %27, %29 : vector<16x128xf32>
      %c0_30 = arith.constant 0 : index
      %c0_31 = arith.constant 0 : index
      %31 = vector.load %arg10[%c0_30, %c0_31] : memref<16x384xf32, #tpu.memory_space<vmem>>, vector<16x384xf32>
      %32 = arith.truncf %31 : vector<16x384xf32> to vector<16x384xbf16>
      %c0_32 = arith.constant 0 : index
      %c0_33 = arith.constant 0 : index
      %33 = vector.load %arg5[%c0_32, %c0_33] : memref<384x128xbf16, #tpu.memory_space<vmem>>, vector<384x128xbf16>
      %cst_34 = arith.constant dense<0.000000e+00> : vector<16x128xf32>
      %34 = tpu.matmul %32, %33, %cst_34 {dimension_numbers = #tpu.dot_dimension_numbers<[1], [0], [0], [1], [0, 0, 1, 1], [], []>} : vector<16x384xbf16>, vector<384x128xbf16>, vector<16x128xf32> -> vector<16x128xf32>
      %35 = arith.addf %30, %34 : vector<16x128xf32>
      %c0_35 = arith.constant 0 : index
      %c0_36 = arith.constant 0 : index
      %36 = vector.load %arg8[%c0_35, %c0_36] : memref<16x128xf32, #tpu.memory_space<vmem>>, vector<16x128xf32>
      tpu.vector_store %arg8[%c0_35, %c0_36], %35 {strides = array<i32>} : memref<16x128xf32, #tpu.memory_space<vmem>>, vector<16x128xf32>,
      %37 = tpu.iota {dimensions = array<i32: 1>} : vector<16x128xi32>
      %c8_i32 = arith.constant 8 : i32
      %38 = vector.broadcast %c8_i32 : i32 to vector<16x128xi32>
      %39 = arith.cmpi slt, %37, %38 : vector<16x128xi32>
      %cst_37 = arith.constant 0xFF800000 : f32
      %40 = vector.broadcast %cst_37 : f32 to vector<16x128xf32>
      %41 = arith.select %39, %35, %40 : vector<16x128xi1>, vector<16x128xf32>
      %cst_38 = arith.constant dense<0xFF800000> : vector<16xf32>
      %42 = vector.multi_reduction <maximumf>, %41, %cst_38 [1] : vector<16x128xf32> to vector<16xf32>
      %43 = vector.shape_cast %42 : vector<16xf32> to vector<16x1xf32>
      %44 = vector.broadcast %43 : vector<16x1xf32> to vector<16x128xf32>
      %45 = arith.subf %41, %44 : vector<16x128xf32>
      %46 = math.exp %45 : vector<16x128xf32>
      %cst_39 = arith.constant 0.000000e+00 : f32
      %47 = vector.broadcast %cst_39 : f32 to vector<16x128xf32>
      %48 = arith.select %39, %46, %47 : vector<16x128xi1>, vector<16x128xf32>
      %cst_40 = arith.constant dense<0.000000e+00> : vector<16xf32>
      %49 = vector.multi_reduction <add>, %48, %cst_40 [1] : vector<16x128xf32> to vector<16xf32>
      %50 = vector.shape_cast %49 : vector<16xf32> to vector<16x1xf32>
      %51 = math.log %50 : vector<16x1xf32>
      %52 = arith.addf %43, %51 : vector<16x1xf32>
      %53 = vector.broadcast %52 : vector<16x1xf32> to vector<16x128xf32>
      %54 = arith.subf %35, %53 : vector<16x128xf32>
      %cst_41 = arith.constant 0.000000e+00 : f32
      %55 = vector.broadcast %cst_41 : f32 to vector<16x128xf32>
      %56 = arith.select %39, %54, %55 : vector<16x128xi1>, vector<16x128xf32>
      %c0_42 = arith.constant 0 : index
      %c0_43 = arith.constant 0 : index
      %57 = vector.load %arg9[%c0_42, %c0_43] : memref<16x128xf32, #tpu.memory_space<vmem>>, vector<16x128xf32>
      tpu.vector_store %arg9[%c0_42, %c0_43], %56 {strides = array<i32>} : memref<16x128xf32, #tpu.memory_space<vmem>>, vector<16x128xf32>,
    } else {
    }
    return
  }
  func.func @transform_0(%arg0: i32, %arg1: i32) -> (i32, i32, i32) {
    %c0_i32 = arith.constant 0 : i32
    %c0_i32_0 = arith.constant 0 : i32
    return %c0_i32, %arg0, %arg1 : i32, i32, i32
  }
  func.func @transform_1(%arg0: i32, %arg1: i32) -> (i32, i32) {
    %c0_i32 = arith.constant 0 : i32
    %c0_i32_0 = arith.constant 0 : i32
    return %arg1, %c0_i32 : i32, i32
  }
  func.func @transform_2(%arg0: i32, %arg1: i32) -> (i32, i32) {
    %c0_i32 = arith.constant 0 : i32
    %c0_i32_0 = arith.constant 0 : i32
    return %arg0, %c0_i32 : i32, i32
  }
  func.func @transform_3(%arg0: i32, %arg1: i32) -> (i32, i32) {
    %c0_i32 = arith.constant 0 : i32
    %c0_i32_0 = arith.constant 0 : i32
    %c0_i32_1 = arith.constant 0 : i32
    return %c0_i32, %c0_i32_0 : i32, i32
  }
  func.func @transform_4(%arg0: i32, %arg1: i32) -> (i32, i32) {
    %c0_i32 = arith.constant 0 : i32
    %c0_i32_0 = arith.constant 0 : i32
    %c0_i32_1 = arith.constant 0 : i32
    return %c0_i32, %c0_i32_0 : i32, i32
  }
  func.func @transform_5(%arg0: i32, %arg1: i32) -> (i32, i32) {
    %c0_i32 = arith.constant 0 : i32
    %c0_i32_0 = arith.constant 0 : i32
    %c0_i32_1 = arith.constant 0 : i32
    return %c0_i32, %c0_i32_0 : i32, i32
  }
  func.func @transform_6(%arg0: i32, %arg1: i32) -> (i32, i32) {
    %c0_i32 = arith.constant 0 : i32
    %c0_i32_0 = arith.constant 0 : i32
    return %arg0, %c0_i32 : i32, i32
  }
  func.func @transform_7(%arg0: i32, %arg1: i32) -> (i32, i32) {
    %c0_i32 = arith.constant 0 : i32
    %c0_i32_0 = arith.constant 0 : i32
    return %arg0, %c0_i32 : i32, i32
  }
}

module attributes {stable_mosaic.version = 11 : i64} {
  func.func @aggregate_kernel(%arg0: i32, %arg1: i32, %arg2: i32, %arg3: memref<1x16x16xbf16, #tpu.memory_space<vmem>>, %arg4: memref<16x128xbf16, #tpu.memory_space<vmem>>, %arg5: memref<16x128xbf16, #tpu.memory_space<vmem>>, %arg6: memref<16x128xf32, #tpu.memory_space<vmem>>) attributes {dimension_semantics = [#tpu.dimension_semantics<parallel>, #tpu.dimension_semantics<parallel>, #tpu.dimension_semantics<arbitrary>], iteration_bounds = array<i64: 1, 3, 1>, scalar_prefetch = 0 : i64, scratch_operands = 1 : i64, tpu.core_type = #tpu.core_type<tc>, window_params = [{transform_indices = @transform_0, window_bounds = array<i64: 1, 16, 16>}, {transform_indices = @transform_1, window_bounds = array<i64: 16, 128>}, {transform_indices = @transform_2, window_bounds = array<i64: 16, 128>}]} {
    %c0_i32 = arith.constant 0 : i32
    %0 = arith.cmpi eq, %arg2, %c0_i32 : i32
    %1 = arith.extui %0 : i1 to i32
    %c0_i32_0 = arith.constant 0 : i32
    %2 = arith.cmpi ne, %1, %c0_i32_0 : i32
    scf.if %2 {
      %cst_11 = arith.constant 0.000000e+00 : f32
      %13 = vector.broadcast %cst_11 : f32 to vector<16x128xf32>
      %c0_12 = arith.constant 0 : index
      %c0_13 = arith.constant 0 : index
      %14 = vector.load %arg6[%c0_12, %c0_13] : memref<16x128xf32, #tpu.memory_space<vmem>>, vector<16x128xf32>
      tpu.vector_store %arg6[%c0_12, %c0_13], %13 {strides = array<i32>} : memref<16x128xf32, #tpu.memory_space<vmem>>, vector<16x128xf32>,
    } else {
    }
    %c0 = arith.constant 0 : index
    %c0_1 = arith.constant 0 : index
    %3 = vector.load %arg6[%c0, %c0_1] : memref<16x128xf32, #tpu.memory_space<vmem>>, vector<16x128xf32>
    %c0_2 = arith.constant 0 : index
    %c0_3 = arith.constant 0 : index
    %c0_4 = arith.constant 0 : index
    %4 = vector.load %arg3[%c0_2, %c0_3, %c0_4] : memref<1x16x16xbf16, #tpu.memory_space<vmem>>, vector<1x16x16xbf16>
    %5 = vector.shape_cast %4 : vector<1x16x16xbf16> to vector<16x16xbf16>
    %c0_5 = arith.constant 0 : index
    %c0_6 = arith.constant 0 : index
    %6 = vector.load %arg4[%c0_5, %c0_6] : memref<16x128xbf16, #tpu.memory_space<vmem>>, vector<16x128xbf16>
    %cst = arith.constant dense<0.000000e+00> : vector<16x128xf32>
    %7 = tpu.matmul %5, %6, %cst {dimension_numbers = #tpu.dot_dimension_numbers<[1], [0], [0], [1], [0, 0, 1, 1], [], []>} : vector<16x16xbf16>, vector<16x128xbf16>, vector<16x128xf32> -> vector<16x128xf32>
    %8 = arith.addf %3, %7 : vector<16x128xf32>
    %c0_7 = arith.constant 0 : index
    %c0_8 = arith.constant 0 : index
    %9 = vector.load %arg6[%c0_7, %c0_8] : memref<16x128xf32, #tpu.memory_space<vmem>>, vector<16x128xf32>
    tpu.vector_store %arg6[%c0_7, %c0_8], %8 {strides = array<i32>} : memref<16x128xf32, #tpu.memory_space<vmem>>, vector<16x128xf32>,
    %c0_i32_9 = arith.constant 0 : i32
    %10 = arith.cmpi eq, %arg2, %c0_i32_9 : i32
    %11 = arith.extui %10 : i1 to i32
    %c0_i32_10 = arith.constant 0 : i32
    %12 = arith.cmpi ne, %11, %c0_i32_10 : i32
    scf.if %12 {
      %c0_11 = arith.constant 0 : index
      %c0_12 = arith.constant 0 : index
      %13 = vector.load %arg6[%c0_11, %c0_12] : memref<16x128xf32, #tpu.memory_space<vmem>>, vector<16x128xf32>
      %14 = arith.truncf %13 : vector<16x128xf32> to vector<16x128xbf16>
      %c0_13 = arith.constant 0 : index
      %c0_14 = arith.constant 0 : index
      %15 = vector.load %arg5[%c0_13, %c0_14] : memref<16x128xbf16, #tpu.memory_space<vmem>>, vector<16x128xbf16>
      tpu.vector_store %arg5[%c0_13, %c0_14], %14 {strides = array<i32>} : memref<16x128xbf16, #tpu.memory_space<vmem>>, vector<16x128xbf16>,
    } else {
    }
    return
  }
  func.func @transform_0(%arg0: i32, %arg1: i32, %arg2: i32) -> (i32, i32, i32) {
    %c0_i32 = arith.constant 0 : i32
    return %arg1, %arg0, %arg2 : i32, i32, i32
  }
  func.func @transform_1(%arg0: i32, %arg1: i32, %arg2: i32) -> (i32, i32) {
    %c0_i32 = arith.constant 0 : i32
    %c0_i32_0 = arith.constant 0 : i32
    return %arg2, %c0_i32 : i32, i32
  }
  func.func @transform_2(%arg0: i32, %arg1: i32, %arg2: i32) -> (i32, i32) {
    %c0_i32 = arith.constant 0 : i32
    return %arg0, %arg1 : i32, i32
  }
}

module attributes {stable_mosaic.version = 11 : i64} {
  func.func @transform_kernel(%arg0: i32, %arg1: memref<16x384xbf16, #tpu.memory_space<vmem>>, %arg2: memref<16x128xbf16, #tpu.memory_space<vmem>>, %arg3: memref<384x128xbf16, #tpu.memory_space<vmem>>, %arg4: memref<128x128xbf16, #tpu.memory_space<vmem>>, %arg5: memref<1x128xf32, #tpu.memory_space<vmem>>, %arg6: memref<16x128xbf16, #tpu.memory_space<vmem>>) attributes {dimension_semantics = [#tpu.dimension_semantics<parallel>], iteration_bounds = array<i64: 1>, scalar_prefetch = 0 : i64, scratch_operands = 0 : i64, tpu.core_type = #tpu.core_type<tc>, window_params = [{transform_indices = @transform_0, window_bounds = array<i64: 16, 384>}, {transform_indices = @transform_1, window_bounds = array<i64: 16, 128>}, {pipeline_mode = #tpu.pipeline_mode<synchronous>, transform_indices = @transform_2, window_bounds = array<i64: 384, 128>}, {pipeline_mode = #tpu.pipeline_mode<synchronous>, transform_indices = @transform_3, window_bounds = array<i64: 128, 128>}, {pipeline_mode = #tpu.pipeline_mode<synchronous>, transform_indices = @transform_4, window_bounds = array<i64: 1, 128>}, {transform_indices = @transform_5, window_bounds = array<i64: 16, 128>}]} {
    %c0 = arith.constant 0 : index
    %c0_0 = arith.constant 0 : index
    %0 = vector.load %arg2[%c0, %c0_0] : memref<16x128xbf16, #tpu.memory_space<vmem>>, vector<16x128xbf16>
    %c0_1 = arith.constant 0 : index
    %c0_2 = arith.constant 0 : index
    %1 = vector.load %arg4[%c0_1, %c0_2] : memref<128x128xbf16, #tpu.memory_space<vmem>>, vector<128x128xbf16>
    %cst = arith.constant dense<0.000000e+00> : vector<16x128xf32>
    %2 = tpu.matmul %0, %1, %cst {dimension_numbers = #tpu.dot_dimension_numbers<[1], [0], [0], [1], [0, 0, 1, 1], [], []>} : vector<16x128xbf16>, vector<128x128xbf16>, vector<16x128xf32> -> vector<16x128xf32>
    %c0_3 = arith.constant 0 : index
    %c0_4 = arith.constant 0 : index
    %3 = vector.load %arg5[%c0_3, %c0_4] : memref<1x128xf32, #tpu.memory_space<vmem>>, vector<1x128xf32>
    %4 = vector.broadcast %3 : vector<1x128xf32> to vector<16x128xf32>
    %5 = arith.addf %2, %4 : vector<16x128xf32>
    %c0_5 = arith.constant 0 : index
    %c0_6 = arith.constant 0 : index
    %6 = vector.load %arg1[%c0_5, %c0_6] : memref<16x384xbf16, #tpu.memory_space<vmem>>, vector<16x384xbf16>
    %c0_7 = arith.constant 0 : index
    %c0_8 = arith.constant 0 : index
    %7 = vector.load %arg3[%c0_7, %c0_8] : memref<384x128xbf16, #tpu.memory_space<vmem>>, vector<384x128xbf16>
    %cst_9 = arith.constant dense<0.000000e+00> : vector<16x128xf32>
    %8 = tpu.matmul %6, %7, %cst_9 {dimension_numbers = #tpu.dot_dimension_numbers<[1], [0], [0], [1], [0, 0, 1, 1], [], []>} : vector<16x384xbf16>, vector<384x128xbf16>, vector<16x128xf32> -> vector<16x128xf32>
    %9 = arith.addf %5, %8 : vector<16x128xf32>
    %cst_10 = arith.constant 0.000000e+00 : f32
    %10 = vector.broadcast %cst_10 : f32 to vector<16x128xf32>
    %11 = arith.maximumf %9, %10 : vector<16x128xf32>
    %12 = arith.truncf %11 : vector<16x128xf32> to vector<16x128xbf16>
    %c0_11 = arith.constant 0 : index
    %c0_12 = arith.constant 0 : index
    %13 = vector.load %arg6[%c0_11, %c0_12] : memref<16x128xbf16, #tpu.memory_space<vmem>>, vector<16x128xbf16>
    tpu.vector_store %arg6[%c0_11, %c0_12], %12 {strides = array<i32>} : memref<16x128xbf16, #tpu.memory_space<vmem>>, vector<16x128xbf16>,
    return
  }
  func.func @transform_0(%arg0: i32) -> (i32, i32) {
    %c0_i32 = arith.constant 0 : i32
    %c0_i32_0 = arith.constant 0 : i32
    return %arg0, %c0_i32 : i32, i32
  }
  func.func @transform_1(%arg0: i32) -> (i32, i32) {
    %c0_i32 = arith.constant 0 : i32
    %c0_i32_0 = arith.constant 0 : i32
    return %arg0, %c0_i32 : i32, i32
  }
  func.func @transform_2(%arg0: i32) -> (i32, i32) {
    %c0_i32 = arith.constant 0 : i32
    %c0_i32_0 = arith.constant 0 : i32
    %c0_i32_1 = arith.constant 0 : i32
    return %c0_i32, %c0_i32_0 : i32, i32
  }
  func.func @transform_3(%arg0: i32) -> (i32, i32) {
    %c0_i32 = arith.constant 0 : i32
    %c0_i32_0 = arith.constant 0 : i32
    %c0_i32_1 = arith.constant 0 : i32
    return %c0_i32, %c0_i32_0 : i32, i32
  }
  func.func @transform_4(%arg0: i32) -> (i32, i32) {
    %c0_i32 = arith.constant 0 : i32
    %c0_i32_0 = arith.constant 0 : i32
    %c0_i32_1 = arith.constant 0 : i32
    return %c0_i32, %c0_i32_0 : i32, i32
  }
  func.func @transform_5(%arg0: i32) -> (i32, i32) {
    %c0_i32 = arith.constant 0 : i32
    %c0_i32_0 = arith.constant 0 : i32
    return %arg0, %c0_i32 : i32, i32
  }
}

module attributes {stable_mosaic.version = 11 : i64} {
  func.func @fused_layer_kernel(%arg0: i32, %arg1: i32, %arg2: memref<3x16x16xbf16, #tpu.memory_space<vmem>>, %arg3: memref<16x128xbf16, #tpu.memory_space<vmem>>, %arg4: memref<16x128xbf16, #tpu.memory_space<vmem>>, %arg5: memref<384x128xbf16, #tpu.memory_space<vmem>>, %arg6: memref<128x128xbf16, #tpu.memory_space<vmem>>, %arg7: memref<1x128xf32, #tpu.memory_space<vmem>>, %arg8: memref<16x128xbf16, #tpu.memory_space<vmem>>, %arg9: memref<16x384xf32, #tpu.memory_space<vmem>>) attributes {dimension_semantics = [#tpu.dimension_semantics<parallel>, #tpu.dimension_semantics<arbitrary>], iteration_bounds = array<i64: 1, 1>, scalar_prefetch = 0 : i64, scratch_operands = 1 : i64, tpu.core_type = #tpu.core_type<tc>, window_params = [{transform_indices = @transform_0, window_bounds = array<i64: 3, 16, 16>}, {transform_indices = @transform_1, window_bounds = array<i64: 16, 128>}, {transform_indices = @transform_2, window_bounds = array<i64: 16, 128>}, {pipeline_mode = #tpu.pipeline_mode<synchronous>, transform_indices = @transform_3, window_bounds = array<i64: 384, 128>}, {pipeline_mode = #tpu.pipeline_mode<synchronous>, transform_indices = @transform_4, window_bounds = array<i64: 128, 128>}, {pipeline_mode = #tpu.pipeline_mode<synchronous>, transform_indices = @transform_5, window_bounds = array<i64: 1, 128>}, {transform_indices = @transform_6, window_bounds = array<i64: 16, 128>}]} {
    %c0_i32 = arith.constant 0 : i32
    %0 = arith.cmpi eq, %arg1, %c0_i32 : i32
    %1 = arith.extui %0 : i1 to i32
    %c0_i32_0 = arith.constant 0 : i32
    %2 = arith.cmpi ne, %1, %c0_i32_0 : i32
    scf.if %2 {
      %cst_23 = arith.constant 0.000000e+00 : f32
      %25 = vector.broadcast %cst_23 : f32 to vector<16x384xf32>
      %c0_24 = arith.constant 0 : index
      %c0_25 = arith.constant 0 : index
      %26 = vector.load %arg9[%c0_24, %c0_25] : memref<16x384xf32, #tpu.memory_space<vmem>>, vector<16x384xf32>
      tpu.vector_store %arg9[%c0_24, %c0_25], %25 {strides = array<i32>} : memref<16x384xf32, #tpu.memory_space<vmem>>, vector<16x384xf32>,
    } else {
    }
    %c0 = arith.constant 0 : index
    %c0_1 = arith.constant 0 : index
    %3 = vector.load %arg3[%c0, %c0_1] : memref<16x128xbf16, #tpu.memory_space<vmem>>, vector<16x128xbf16>
    %c0_2 = arith.constant 0 : index
    %c0_3 = arith.constant 0 : index
    %4 = vector.load %arg9[%c0_2, %c0_3] : memref<16x384xf32, #tpu.memory_space<vmem>>, vector<16x128xf32>
    %c0_4 = arith.constant 0 : index
    %c0_5 = arith.constant 0 : index
    %c0_6 = arith.constant 0 : index
    %5 = vector.load %arg2[%c0_4, %c0_5, %c0_6] : memref<3x16x16xbf16, #tpu.memory_space<vmem>>, vector<1x16x16xbf16>
    %6 = vector.shape_cast %5 : vector<1x16x16xbf16> to vector<16x16xbf16>
    %cst = arith.constant dense<0.000000e+00> : vector<16x128xf32>
    %7 = tpu.matmul %6, %3, %cst {dimension_numbers = #tpu.dot_dimension_numbers<[1], [0], [0], [1], [0, 0, 1, 1], [], []>} : vector<16x16xbf16>, vector<16x128xbf16>, vector<16x128xf32> -> vector<16x128xf32>
    %8 = arith.addf %4, %7 : vector<16x128xf32>
    %c0_7 = arith.constant 0 : index
    %c0_8 = arith.constant 0 : index
    %9 = vector.load %arg9[%c0_7, %c0_8] : memref<16x384xf32, #tpu.memory_space<vmem>>, vector<16x128xf32>
    tpu.vector_store %arg9[%c0_7, %c0_8], %8 {strides = array<i32>} : memref<16x384xf32, #tpu.memory_space<vmem>>, vector<16x128xf32>,
    %c0_9 = arith.constant 0 : index
    %c128 = arith.constant 128 : index
    %10 = vector.load %arg9[%c0_9, %c128] : memref<16x384xf32, #tpu.memory_space<vmem>>, vector<16x128xf32>
    %c1 = arith.constant 1 : index
    %c0_10 = arith.constant 0 : index
    %c0_11 = arith.constant 0 : index
    %11 = vector.load %arg2[%c1, %c0_10, %c0_11] : memref<3x16x16xbf16, #tpu.memory_space<vmem>>, vector<1x16x16xbf16>
    %12 = vector.shape_cast %11 : vector<1x16x16xbf16> to vector<16x16xbf16>
    %cst_12 = arith.constant dense<0.000000e+00> : vector<16x128xf32>
    %13 = tpu.matmul %12, %3, %cst_12 {dimension_numbers = #tpu.dot_dimension_numbers<[1], [0], [0], [1], [0, 0, 1, 1], [], []>} : vector<16x16xbf16>, vector<16x128xbf16>, vector<16x128xf32> -> vector<16x128xf32>
    %14 = arith.addf %10, %13 : vector<16x128xf32>
    %c0_13 = arith.constant 0 : index
    %c128_14 = arith.constant 128 : index
    %15 = vector.load %arg9[%c0_13, %c128_14] : memref<16x384xf32, #tpu.memory_space<vmem>>, vector<16x128xf32>
    tpu.vector_store %arg9[%c0_13, %c128_14], %14 {strides = array<i32>} : memref<16x384xf32, #tpu.memory_space<vmem>>, vector<16x128xf32>,
    %c0_15 = arith.constant 0 : index
    %c256 = arith.constant 256 : index
    %16 = vector.load %arg9[%c0_15, %c256] : memref<16x384xf32, #tpu.memory_space<vmem>>, vector<16x128xf32>
    %c2 = arith.constant 2 : index
    %c0_16 = arith.constant 0 : index
    %c0_17 = arith.constant 0 : index
    %17 = vector.load %arg2[%c2, %c0_16, %c0_17] : memref<3x16x16xbf16, #tpu.memory_space<vmem>>, vector<1x16x16xbf16>
    %18 = vector.shape_cast %17 : vector<1x16x16xbf16> to vector<16x16xbf16>
    %cst_18 = arith.constant dense<0.000000e+00> : vector<16x128xf32>
    %19 = tpu.matmul %18, %3, %cst_18 {dimension_numbers = #tpu.dot_dimension_numbers<[1], [0], [0], [1], [0, 0, 1, 1], [], []>} : vector<16x16xbf16>, vector<16x128xbf16>, vector<16x128xf32> -> vector<16x128xf32>
    %20 = arith.addf %16, %19 : vector<16x128xf32>
    %c0_19 = arith.constant 0 : index
    %c256_20 = arith.constant 256 : index
    %21 = vector.load %arg9[%c0_19, %c256_20] : memref<16x384xf32, #tpu.memory_space<vmem>>, vector<16x128xf32>
    tpu.vector_store %arg9[%c0_19, %c256_20], %20 {strides = array<i32>} : memref<16x384xf32, #tpu.memory_space<vmem>>, vector<16x128xf32>,
    %c0_i32_21 = arith.constant 0 : i32
    %22 = arith.cmpi eq, %arg1, %c0_i32_21 : i32
    %23 = arith.extui %22 : i1 to i32
    %c0_i32_22 = arith.constant 0 : i32
    %24 = arith.cmpi ne, %23, %c0_i32_22 : i32
    scf.if %24 {
      %c0_23 = arith.constant 0 : index
      %c0_24 = arith.constant 0 : index
      %25 = vector.load %arg4[%c0_23, %c0_24] : memref<16x128xbf16, #tpu.memory_space<vmem>>, vector<16x128xbf16>
      %c0_25 = arith.constant 0 : index
      %c0_26 = arith.constant 0 : index
      %26 = vector.load %arg6[%c0_25, %c0_26] : memref<128x128xbf16, #tpu.memory_space<vmem>>, vector<128x128xbf16>
      %cst_27 = arith.constant dense<0.000000e+00> : vector<16x128xf32>
      %27 = tpu.matmul %25, %26, %cst_27 {dimension_numbers = #tpu.dot_dimension_numbers<[1], [0], [0], [1], [0, 0, 1, 1], [], []>} : vector<16x128xbf16>, vector<128x128xbf16>, vector<16x128xf32> -> vector<16x128xf32>
      %c0_28 = arith.constant 0 : index
      %c0_29 = arith.constant 0 : index
      %28 = vector.load %arg7[%c0_28, %c0_29] : memref<1x128xf32, #tpu.memory_space<vmem>>, vector<1x128xf32>
      %29 = vector.broadcast %28 : vector<1x128xf32> to vector<16x128xf32>
      %30 = arith.addf %27, %29 : vector<16x128xf32>
      %c0_30 = arith.constant 0 : index
      %c0_31 = arith.constant 0 : index
      %31 = vector.load %arg9[%c0_30, %c0_31] : memref<16x384xf32, #tpu.memory_space<vmem>>, vector<16x384xf32>
      %32 = arith.truncf %31 : vector<16x384xf32> to vector<16x384xbf16>
      %c0_32 = arith.constant 0 : index
      %c0_33 = arith.constant 0 : index
      %33 = vector.load %arg5[%c0_32, %c0_33] : memref<384x128xbf16, #tpu.memory_space<vmem>>, vector<384x128xbf16>
      %cst_34 = arith.constant dense<0.000000e+00> : vector<16x128xf32>
      %34 = tpu.matmul %32, %33, %cst_34 {dimension_numbers = #tpu.dot_dimension_numbers<[1], [0], [0], [1], [0, 0, 1, 1], [], []>} : vector<16x384xbf16>, vector<384x128xbf16>, vector<16x128xf32> -> vector<16x128xf32>
      %35 = arith.addf %30, %34 : vector<16x128xf32>
      %cst_35 = arith.constant 0.000000e+00 : f32
      %36 = vector.broadcast %cst_35 : f32 to vector<16x128xf32>
      %37 = arith.maximumf %35, %36 : vector<16x128xf32>
      %38 = arith.truncf %37 : vector<16x128xf32> to vector<16x128xbf16>
      %c0_36 = arith.constant 0 : index
      %c0_37 = arith.constant 0 : index
      %39 = vector.load %arg8[%c0_36, %c0_37] : memref<16x128xbf16, #tpu.memory_space<vmem>>, vector<16x128xbf16>
      tpu.vector_store %arg8[%c0_36, %c0_37], %38 {strides = array<i32>} : memref<16x128xbf16, #tpu.memory_space<vmem>>, vector<16x128xbf16>,
    } else {
    }
    return
  }
  func.func @transform_0(%arg0: i32, %arg1: i32) -> (i32, i32, i32) {
    %c0_i32 = arith.constant 0 : i32
    %c0_i32_0 = arith.constant 0 : i32
    return %c0_i32, %arg0, %arg1 : i32, i32, i32
  }
  func.func @transform_1(%arg0: i32, %arg1: i32) -> (i32, i32) {
    %c0_i32 = arith.constant 0 : i32
    %c0_i32_0 = arith.constant 0 : i32
    return %arg1, %c0_i32 : i32, i32
  }
  func.func @transform_2(%arg0: i32, %arg1: i32) -> (i32, i32) {
    %c0_i32 = arith.constant 0 : i32
    %c0_i32_0 = arith.constant 0 : i32
    return %arg0, %c0_i32 : i32, i32
  }
  func.func @transform_3(%arg0: i32, %arg1: i32) -> (i32, i32) {
    %c0_i32 = arith.constant 0 : i32
    %c0_i32_0 = arith.constant 0 : i32
    %c0_i32_1 = arith.constant 0 : i32
    return %c0_i32, %c0_i32_0 : i32, i32
  }
  func.func @transform_4(%arg0: i32, %arg1: i32) -> (i32, i32) {
    %c0_i32 = arith.constant 0 : i32
    %c0_i32_0 = arith.constant 0 : i32
    %c0_i32_1 = arith.constant 0 : i32
    return %c0_i32, %c0_i32_0 : i32, i32
  }
  func.func @transform_5(%arg0: i32, %arg1: i32) -> (i32, i32) {
    %c0_i32 = arith.constant 0 : i32
    %c0_i32_0 = arith.constant 0 : i32
    %c0_i32_1 = arith.constant 0 : i32
    return %c0_i32, %c0_i32_0 : i32, i32
  }
  func.func @transform_6(%arg0: i32, %arg1: i32) -> (i32, i32) {
    %c0_i32 = arith.constant 0 : i32
    %c0_i32_0 = arith.constant 0 : i32
    return %arg0, %c0_i32 : i32, i32
  }
}

</mosaic_0001>

<llo_original>
// kernel: know_rgfd_forward.6
$region0: #{know_rgfd_forward.6}
  #allocation0 [shape = 'u32[]', space=smem, size = 0x4, offset = 0x4, fixed_abs, tag = 'smem constant byte address 0x4 - core index']
  #allocation1 [shape = 'u32[144,128]{1,0:T(1,128)}', space=vmem, size = 0x12000, scoped, tag = 'internal scratch']
  #allocation2 [shape = 'f32[16,128]{1,0:T(8,128)}', space=vmem, size = 0x2000, scoped, tag = 'scratch operand']
  %s0 = inlined_call_operand.vmem [shape: bf16[3,16,16], index: 0, kind: input, shape index: {}]
  %s1 = inlined_call_operand.vmem [shape: bf16[16,128], index: 1, kind: input, shape index: {}]
  %s2 = inlined_call_operand.vmem [shape: bf16[16,384], index: 2, kind: output, shape index: {}]
  %s3 = sld [smem:[#allocation0]]
  $region86: #{know_rgfd_forward.6} parent=0
    _
  %s5 = ssub.s32 1, %s3
  %s6 = scalar_select 0, %s5, %s3
  $region1: #{know_rgfd_forward.6} parent=0
    #allocation3 [shape = 'u8[8192]{0}', space=vmem, size = 0x2000, scoped, tag = 'output window, operand 0']
    loop: start=0, step=1, limit=5
    $region2: #{know_rgfd_forward.6} parent=1 // loop_pre_header
      _
    $region3: #{know_rgfd_forward.6} parent=1 // loop_header
      %s8 = sphi 0, %s12
      %p9 = scmp.ge.s32.totalorder %s8, 5
      %s15 = sphi 0, %s34
      %s16 = sphi 0, %s30
      %s17 = sphi 0, %s26
      %s18 = sphi 0, %s15
      %s19 = sphi 0, %s16
      %s20 = sphi 0, %s17
      %s21 = sphi 0, %s18
      %s22 = sphi 0, %s19
      %s23 = sphi 0, %s20
      %s41 = sphi 0, %s43
      %s44 = sphi 0, %s41
      %s45 = sphi 0, %s44
      %s61 = sphi 0, %s45
      %s67 = sphi 0, %s69
      %s70 = sphi 0, %s67
      %s71 = sphi 0, %s70
      %s87 = sphi 0, %s71
      %s95 = sphi 0, %s97
      %s98 = sphi 0, %s95
      %s99 = sphi 0, %s98
      %s115 = sphi 0, %s99
    $region4: #{know_rgfd_forward.6} parent=1 // loop_header_branch
      %11 = sbr.rel (%p9) target = $region8
    $region5: #{know_rgfd_forward.6} parent=1 // loop_body
      %s13 = ssub.s32 %s8, 1
      %s14 = ssub.s32 %s8, 2
      %s24 = sadd.s32 1, %s17
      %p25 = scmp.ge.s32.totalorder %s24, 1
      %s26 = scalar_select %p25, 0, %s24
      %s27 = sadd.s32 1, %s16
      %s28 = scalar_select %p25, %s27, %s16
      %p29 = scmp.ge.s32.totalorder %s28, 3
      %s30 = scalar_select %p29, 0, %s28
      %s31 = sadd.s32 1, %s15
      %s32 = scalar_select %p29, %s31, %s15
      %p33 = scmp.ge.s32.totalorder %s32, 1
      %s34 = scalar_select %p33, 0, %s32
      %s35 = ssub.s32 %s16, %s30
      %s36 = ssub.s32 %s15, %s34
      %s37 = sor.u32 %s35, %s36
      %s38 = ssub.s32 %s17, %s26
      %s39 = sor.u32 %s37, %s38
      %p40 = scmp.eq.s32.totalorder %s39, 0
      %s42 = sadd.s32 %s41, 1
      %s43 = scalar_select %p40, %s41, %s42
      %p46 = pneg %p40
      %p47 = scmp.eq.s32.totalorder %s8, 2
      %p48 = por %p46, %p47
      %p49 = scmp.ne.s32.totalorder %s41, %s44
      %p50 = scmp.eq.s32.totalorder %s8, 0
      %p51 = por %p49, %p50
      %p52 = scmp.ne.s32.totalorder %s41, %s44
      %p53 = scmp.eq.s32.totalorder %s13, 2
      %p54 = por %p52, %p53
      %p55 = scmp.ne.s32.totalorder %s44, %s45
      %p56 = scmp.eq.s32.totalorder %s13, 0
      %p57 = por %p55, %p56
      %p58 = scmp.ne.s32.totalorder %s44, %s45
      %p59 = scmp.eq.s32.totalorder %s14, 2
      %p60 = por %p58, %p59
      %p62 = scmp.ne.s32.totalorder %s45, %s61
      %p63 = scmp.eq.s32.totalorder %s14, 0
      %p64 = por %p62, %p63
      %s65 = ssub.s32 %s17, %s26
      %p66 = scmp.eq.s32.totalorder %s65, 0
      %s68 = sadd.s32 %s67, 1
      %s69 = scalar_select %p66, %s67, %s68
      %p72 = pneg %p66
      %p73 = scmp.eq.s32.totalorder %s8, 2
      %p74 = por %p72, %p73
      %p75 = scmp.ne.s32.totalorder %s67, %s70
      %p76 = scmp.eq.s32.totalorder %s8, 0
      %p77 = por %p75, %p76
      %p78 = scmp.ne.s32.totalorder %s67, %s70
      %p79 = scmp.eq.s32.totalorder %s13, 2
      %p80 = por %p78, %p79
      %p81 = scmp.ne.s32.totalorder %s70, %s71
      %p82 = scmp.eq.s32.totalorder %s13, 0
      %p83 = por %p81, %p82
      %p84 = scmp.ne.s32.totalorder %s70, %s71
      %p85 = scmp.eq.s32.totalorder %s14, 2
      %p86 = por %p84, %p85
      %p88 = scmp.ne.s32.totalorder %s71, %s87
      %p89 = scmp.eq.s32.totalorder %s14, 0
      %p90 = por %p88, %p89
      %s91 = ssub.s32 %s15, %s34
      %s92 = ssub.s32 %s16, %s30
      %s93 = sor.u32 %s91, %s92
      %p94 = scmp.eq.s32.totalorder %s93, 0
      %s96 = sadd.s32 %s95, 1
      %s97 = scalar_select %p94, %s95, %s96
      %p100 = pneg %p94
      %p101 = scmp.eq.s32.totalorder %s8, 2
      %p102 = por %p100, %p101
      %p103 = scmp.ne.s32.totalorder %s95, %s98
      %p104 = scmp.eq.s32.totalorder %s8, 0
      %p105 = por %p103, %p104
      %p106 = scmp.ne.s32.totalorder %s95, %s98
      %p107 = scmp.eq.s32.totalorder %s13, 2
      %p108 = por %p106, %p107
      %p109 = scmp.ne.s32.totalorder %s98, %s99
      %p110 = scmp.eq.s32.totalorder %s13, 0
      %p111 = por %p109, %p110
      %p112 = scmp.ne.s32.totalorder %s98, %s99
      %p113 = scmp.eq.s32.totalorder %s14, 2
      %p114 = por %p112, %p113
      %p116 = scmp.ne.s32.totalorder %s99, %s115
      %p117 = scmp.eq.s32.totalorder %s14, 0
      %p118 = por %p116, %p117
      %p119 = scmp.le.s32.totalorder 1, %s8
      %p120 = scmp.lt.s32.totalorder %s8, 4
      %p121 = pnand %p119, %p120
      %p122 = pneg %p121
      // Predicated region
      $region9: #{know_rgfd_forward.6} parent=5 // pred_check
        _
      $region10: #{know_rgfd_forward.6} parent=5 // pred_check_branch
        %124 = sbr.rel (%p121) target = $region12
      $region11: #{know_rgfd_forward.6} parent=5 // pred_region
        %s125 = ssub.s32 %s8, 1
        // Predicated region
        $region13: #{know_rgfd_forward.6} parent=11 // pred_check
          %p126 = pneg %p83
        $region14: #{know_rgfd_forward.6} parent=11 // pred_check_branch
          %128 = sbr.rel (%p126) target = $region16
        $region15: #{know_rgfd_forward.6} parent=11 // pred_region
          %s129 = smul.u32 2, %s20
          %p130 = scmp.lt.s32.totalorder %s129, 1
          %s131 = scalar_select %p130, %s129, 1
          %s132 = smul.addr %s131, 4
          %s133 = scalar_lea.vmem %s1, %s132
          %s134 = smul.u32 2, %s20
        $region16: #{know_rgfd_forward.6} parent=11 // pred_fallthru
          _
      $region12: #{know_rgfd_forward.6} parent=5 // pred_fallthru
        _
      %p135 = scmp.lt.s32.totalorder %s8, 3
      // Predicated region
      $region17: #{know_rgfd_forward.6} parent=5 // pred_check
        %p136 = pneg %p135
      $region18: #{know_rgfd_forward.6} parent=5 // pred_check_branch
        %138 = sbr.rel (%p136) target = $region20
      $region19: #{know_rgfd_forward.6} parent=5 // pred_region
        // Predicated region
        $region21: #{know_rgfd_forward.6} parent=19 // pred_check
          %p139 = pneg %p51
        $region22: #{know_rgfd_forward.6} parent=19 // pred_check_branch
          %141 = sbr.rel (%p139) target = $region24
        $region23: #{know_rgfd_forward.6} parent=19 // pred_region
          %s142 = smul.u32 2, %s15
          %p143 = scmp.lt.s32.totalorder %s16, 2
          %s144 = scalar_select %p143, %s16, 2
          %p145 = scmp.lt.s32.totalorder %s142, 1
          %s146 = scalar_select %p145, %s142, 1
          %p147 = scmp.lt.s32.totalorder %s17, 0
          %s148 = scalar_select %p147, %s17, 0
          %s149 = sadd.s32 %s148, %s146
          %s150 = smul.addr %s144, 2
          %s151 = sadd.s32 %s149, %s150
          %s152 = smul.addr %s151, 4
          %s153 = scalar_lea.vmem %s0, %s152
          %s154 = smul.u32 2, %s15
        $region24: #{know_rgfd_forward.6} parent=19 // pred_fallthru
          _
      $region20: #{know_rgfd_forward.6} parent=5 // pred_fallthru
        _
      %p155 = scmp.le.s32.totalorder 1, %s8
      %p156 = scmp.lt.s32.totalorder %s8, 4
      %p157 = pnand %p155, %p156
      %p158 = pneg %p157
      // Predicated region
      $region25: #{know_rgfd_forward.6} parent=5 // pred_check
        _
      $region26: #{know_rgfd_forward.6} parent=5 // pred_check_branch
        %160 = sbr.rel (%p157) target = $region28
      $region27: #{know_rgfd_forward.6} parent=5 // pred_region
        %s161 = ssub.s32 %s8, 1
        %s162 = smul.u32 2, %s18
        %p163 = scmp.lt.s32.totalorder %s19, 2
        %s164 = scalar_select %p163, %s19, 2
        %p165 = scmp.lt.s32.totalorder %s162, 1
        %s166 = scalar_select %p165, %s162, 1
        %p167 = scmp.lt.s32.totalorder %s20, 0
        %s168 = scalar_select %p167, %s20, 0
        %s169 = sadd.s32 %s168, %s166
        %s170 = smul.addr %s164, 2
        %s171 = sadd.s32 %s169, %s170
        %s172 = smul.addr %s171, 4
        %s173 = scalar_lea.vmem %s0, %s172
        %p174 = pneg %p57
        %p175 = pneg %p54
        %s176 = smul.u32 2, %s20
        %p177 = scmp.lt.s32.totalorder %s176, 1
        %s178 = scalar_select %p177, %s176, 1
        %s179 = smul.addr %s178, 4
        %s180 = scalar_lea.vmem %s1, %s179
        %p181 = pneg %p83
        %p182 = pneg %p80
        %p183 = pneg %p111
        %p184 = pneg %p108
        %s185 = sand.u32 %s98, 1
        %s186 = sand.u32 %s98, 1
        %s187 = smul.addr %s186, 8
        %s188 = scalar_lea.vmem [#allocation3], %s187
        %s189 = smul.u32 2, %s18
        %p190 = scmp.lt.s32.totalorder %s19, 2
        %s191 = scalar_select %p190, %s19, 2
        %p192 = scmp.lt.s32.totalorder %s189, 1
        %s193 = scalar_select %p192, %s189, 1
        %p194 = scmp.lt.s32.totalorder %s20, 0
        %s195 = scalar_select %p194, %s20, 0
        %s196 = sadd.s32 %s195, %s193
        %s197 = smul.addr %s191, 2
        %s198 = sadd.s32 %s196, %s197
        %s199 = smul.addr %s198, 4
        %s200 = scalar_lea.vmem %s0, %s199
        %s201 = smul.u32 2, %s18
        %s202 = smul.u32 2, %s20
        %p203 = scmp.lt.s32.totalorder %s202, 1
        %s204 = scalar_select %p203, %s202, 1
        %s205 = smul.addr %s204, 4
        %s206 = scalar_lea.vmem %s1, %s205
        %s207 = smul.u32 2, %s20
        %s208 = smul.u32 2, %s18
        %p210 = scmp.eq.s32.totalorder %s20, 0
        // Predicated region
        $region29: #{know_rgfd_forward.6} parent=27 // pred_check
          %p211 = pneg %p210
        $region30: #{know_rgfd_forward.6} parent=27 // pred_check_branch
          %213 = sbr.rel (%p211) target = $region32
        $region31: #{know_rgfd_forward.6} parent=27 // pred_region
          %214 = vst [vmem:[#allocation2] sm:$0xff] 0.0
          %215 = vst [vmem:[#allocation2 + $0x8] sm:$0xff] 0.0
        $region32: #{know_rgfd_forward.6} parent=27 // pred_fallthru
          _
        %v216 = vld [vmem:[#allocation2] sm:$0xff]
        %v217 = vld [vmem:[#allocation2 + $0x8] sm:$0xff]
        %v218 = vld [vmem:[%s200] sm:$0xf]
        %v219 = vld [vmem:[%s200 + $0x4] sm:$0xf]
        %v220 = vld [vmem:[%s206] sm:$0xf]
        %v221 = vld [vmem:[%s206 + $0x4] sm:$0xf]
        %v224 = vunpack.c.l.b16 %v218
        %v225 = vunpack.c.l.b16 %v219
        %v226 = vpack.c.b16 %v225, %v224
        %v229 = vunpack.c.l.b16 %v220
        %v230 = vunpack.c.l.b16 %v221
        %v231 = vpack.c.b16 %v230, %v229
        %vm233 = vcmask 130048
        %v235 = vsel %vm233, %v226, 0
        %237 = vmatprep.subr.bf16.mxu0 0
        %238 = vmatpush1.bf16.msra.mxu0 %v231
        %239 = vmatprep.subr.bf16.mxu0 0
        %240 = vmatpush1.bf16.msra.mxu0 0
        %241 = vmatprep.subr.bf16.mxu0 0
        %242 = vmatpush1.bf16.msra.mxu0 0
        %243 = vmatprep.subr.bf16.mxu0 0
        %244 = vmatpush1.bf16.msra.mxu0 0
        %245 = vmatprep.subr.bf16.mxu0 0
        %246 = vmatpush1.bf16.msra.mxu0 0
        %247 = vmatprep.subr.bf16.mxu0 0
        %248 = vmatpush1.bf16.msra.mxu0 0
        %249 = vmatprep.subr.bf16.mxu0 0
        %250 = vmatpush1.bf16.msra.mxu0 0
        %251 = vmatprep.subr.bf16.mxu0 0
        %252 = vmatpush1.bf16.msra.mxu0 0
        %253 = vmatprep.subr.bf16.mxu0 0
        %254 = vmatpush1.bf16.msra.mxu0 0
        %255 = vmatprep.subr.bf16.mxu0 0
        %256 = vmatpush1.bf16.msra.mxu0 0
        %257 = vmatprep.subr.bf16.mxu0 0
        %258 = vmatpush1.bf16.msra.mxu0 0
        %259 = vmatprep.subr.bf16.mxu0 0
        %260 = vmatpush1.bf16.msra.mxu0 0
        %261 = vmatprep.subr.bf16.mxu0 0
        %262 = vmatpush1.bf16.msra.mxu0 0
        %263 = vmatprep.subr.bf16.mxu0 0
        %264 = vmatpush1.bf16.msra.mxu0 0
        %265 = vmatprep.subr.bf16.mxu0 0
        %266 = vmatpush1.bf16.msra.mxu0 0
        %267 = vmatprep.subr.bf16.mxu0 0
        %268 = vmatpush1.bf16.msra.mxu0 0
        %269 = vmatprep.mubr.bf16.mxu0 0
        %270 = vmatmul.mubr.bf16.gmra.mrb[0].mxu0 %v235
        %v271 = vpop.f32.mrb[0].mxu0
        %v272 = vadd.f32 0.0, %v271
        %v273 = vpop.f32.mrb[0].mxu0
        %v274 = vpop.f32.mrb[0].mxu0
        %v275 = vadd.f32 0.0, %v274
        %v276 = vpop.f32.mrb[0].mxu0
        %277 = vdwg.mxu0
        %v278 = vadd.f32 %v216, %v272
        %v279 = vadd.f32 %v217, %v275
        %280 = vst [vmem:[#allocation2] sm:$0xff] %v278
        %281 = vst [vmem:[#allocation2 + $0x8] sm:$0xff] %v279
        // Predicated region
        $region33: #{know_rgfd_forward.6} parent=27 // pred_check
          %p282 = pneg %p210
        $region34: #{know_rgfd_forward.6} parent=27 // pred_check_branch
          %284 = sbr.rel (%p282) target = $region36
        $region35: #{know_rgfd_forward.6} parent=27 // pred_region
          %v285 = vld [vmem:[#allocation2] sm:$0xff]
          %v286 = vld [vmem:[#allocation2 + $0x8] sm:$0xff]
          %v287 = vpack.c.bf16 %v286, %v285
          %v289 = vunpack.c.l.b16 %v287
          %v290 = vunpack.c.h.b16 %v287
          %v291 = vpack.c.b16 %v289, %v289
          %v292 = vpack.c.b16 %v290, %v290
          %295 = vst [vmem:[%s188] sm:$0xf] %v291
          %296 = vst [vmem:[%s188 + $0x4] sm:$0xf] %v292
        $region36: #{know_rgfd_forward.6} parent=27 // pred_fallthru
          _
        %s297 = sand.u32 %s98, 1
        %s298 = sand.u32 %s98, 1
        %s299 = smul.addr %s298, 8
        %s300 = scalar_lea.vmem [#allocation3], %s299
        // Predicated region
        $region37: #{know_rgfd_forward.6} parent=27 // pred_check
          %p301 = pneg %p108
        $region38: #{know_rgfd_forward.6} parent=27 // pred_check_branch
          %303 = sbr.rel (%p301) target = $region40
        $region39: #{know_rgfd_forward.6} parent=27 // pred_region
          %s304 = smul.u32 2, %s18
          %s305 = smul.addr %s304, 3
          %s306 = sadd.s32 %s19, %s305
          %s307 = smul.addr %s306, 4
          %s308 = scalar_lea.vmem %s2, %s307
          // Predicated region
          $region41: #{know_rgfd_forward.6} parent=39 // pred_check
            _
          $region42: #{know_rgfd_forward.6} parent=39 // pred_check_branch
            %310 = sbr.rel (0) target = $region44
          $region43: #{know_rgfd_forward.6} parent=39 // pred_region
            // Predicated region
            $region45: #{know_rgfd_forward.6} parent=43 // pred_check
              _
            $region46: #{know_rgfd_forward.6} parent=43 // pred_check_branch
              %312 = sbr.rel target = $region48
            $region47: #{know_rgfd_forward.6} parent=43 // pred_region
              // Predicated region
              $region60: #{know_rgfd_forward.6} parent=47 // pred_check
                _
              $region61: #{know_rgfd_forward.6} parent=47 // pred_check_branch
                %329 = sbr.rel (0) target = $region63
              $region62: #{know_rgfd_forward.6} parent=47 // pred_region
                loop: start=0, step=1, limit=1
                $region64: #{know_rgfd_forward.6} parent=62 // loop_pre_header
                  _
                $region65: #{know_rgfd_forward.6} parent=62 // loop_header
                  %s331 = sphi 0, %s335
                  %p332 = scmp.ge.s32.totalorder %s331, 1
                  %s336 = sphi %s300, %s300
                  %s337 = sphi %s308, %s308
                $region66: #{know_rgfd_forward.6} parent=62 // loop_header_branch
                  %334 = sbr.rel (%p332) target = $region70
                $region67: #{know_rgfd_forward.6} parent=62 // loop_body
                  _
                $region68: #{know_rgfd_forward.6} parent=62 // loop_footer
                  %s335 = sadd.s32 1, %s331
                $region69: #{know_rgfd_forward.6} parent=62 // loop_footer_branch
                  %330 = sbr.rel target = $region65
                $region70: #{know_rgfd_forward.6} parent=62 // loop_exit
                  _
                loop: start=0, step=1, limit=1
                $region71: #{know_rgfd_forward.6} parent=62 // loop_pre_header
                  _
                $region72: #{know_rgfd_forward.6} parent=62 // loop_header
                  %s340 = sphi 0, %s344
                  %p341 = scmp.ge.s32.totalorder %s340, 1
                  %s345 = sphi %s300, %s300
                  %s346 = sphi %s308, %s308
                $region73: #{know_rgfd_forward.6} parent=62 // loop_header_branch
                  %343 = sbr.rel (%p341) target = $region77
                $region74: #{know_rgfd_forward.6} parent=62 // loop_body
                  %v347 = vld [vmem:[%s345] sm:$0xf]
                  %348 = vst [vmem:[%s346] sm:$0xf] %v347
                  %v349 = vld [vmem:[%s345 + $0x4] sm:$0xf]
                  %350 = vst [vmem:[%s346 + $0xc] sm:$0xf] %v349
                $region75: #{know_rgfd_forward.6} parent=62 // loop_footer
                  %s344 = sadd.s32 1, %s340
                $region76: #{know_rgfd_forward.6} parent=62 // loop_footer_branch
                  %339 = sbr.rel target = $region72
                $region77: #{know_rgfd_forward.6} parent=62 // loop_exit
                  _
              $region63: #{know_rgfd_forward.6} parent=47 // pred_fallthru
                _
            $region48: #{know_rgfd_forward.6} parent=43 // pred_fallthru
              _
            // Predicated region
            $region49: #{know_rgfd_forward.6} parent=43 // pred_check
              _
            $region50: #{know_rgfd_forward.6} parent=43 // pred_check_branch
              %314 = sbr.rel (0) target = $region52
            $region51: #{know_rgfd_forward.6} parent=43 // pred_region
              loop: start=0, step=1, limit=1
              $region53: #{know_rgfd_forward.6} parent=51 // loop_pre_header
                _
              $region54: #{know_rgfd_forward.6} parent=51 // loop_header
                %s317 = sphi 0, %s321
                %p318 = scmp.ge.s32.totalorder %s317, 1
                %s322 = sphi %s300, %s300
                %s323 = sphi %s308, %s308
              $region55: #{know_rgfd_forward.6} parent=51 // loop_header_branch
                %320 = sbr.rel (%p318) target = $region59
              $region56: #{know_rgfd_forward.6} parent=51 // loop_body
                %v324 = vld [vmem:[%s322] sm:$0xf]
                %325 = vst [vmem:[%s323] sm:$0xf] %v324
                %v326 = vld [vmem:[%s322 + $0x4] sm:$0xf]
                %327 = vst [vmem:[%s323 + $0xc] sm:$0xf] %v326
              $region57: #{know_rgfd_forward.6} parent=51 // loop_footer
                %s321 = sadd.s32 1, %s317
              $region58: #{know_rgfd_forward.6} parent=51 // loop_footer_branch
                %316 = sbr.rel target = $region54
              $region59: #{know_rgfd_forward.6} parent=51 // loop_exit
                _
            $region52: #{know_rgfd_forward.6} parent=43 // pred_fallthru
              _
          $region44: #{know_rgfd_forward.6} parent=39 // pred_fallthru
            _
          %351 = vnop
        $region40: #{know_rgfd_forward.6} parent=27 // pred_fallthru
          _
      $region28: #{know_rgfd_forward.6} parent=5 // pred_fallthru
        _
      %p352 = scmp.le.s32.totalorder 2, %s8
      // Predicated region
      $region78: #{know_rgfd_forward.6} parent=5 // pred_check
        %p353 = pneg %p352
      $region79: #{know_rgfd_forward.6} parent=5 // pred_check_branch
        %355 = sbr.rel (%p353) target = $region81
      $region80: #{know_rgfd_forward.6} parent=5 // pred_region
        %s356 = ssub.s32 %s8, 2
        // Predicated region
        $region82: #{know_rgfd_forward.6} parent=80 // pred_check
          %p357 = pneg %p114
        $region83: #{know_rgfd_forward.6} parent=80 // pred_check_branch
          %359 = sbr.rel (%p357) target = $region85
        $region84: #{know_rgfd_forward.6} parent=80 // pred_region
          %s360 = sand.u32 %s99, 1
          %s361 = sand.u32 %s99, 1
          %s362 = smul.addr %s361, 8
          %s363 = scalar_lea.vmem [#allocation3], %s362
        $region85: #{know_rgfd_forward.6} parent=80 // pred_fallthru
          _
      $region81: #{know_rgfd_forward.6} parent=5 // pred_fallthru
        _
    $region6: #{know_rgfd_forward.6} parent=1 // loop_footer
      %s12 = sadd.s32 1, %s8
    $region7: #{know_rgfd_forward.6} parent=1 // loop_footer_branch
      %7 = sbr.rel target = $region3
    $region8: #{know_rgfd_forward.6} parent=1 // loop_exit
      _

// kernel: know_rgfd_forward.7
$region0: #{know_rgfd_forward.7}
  #allocation0 [shape = 'u32[]', space=smem, size = 0x4, offset = 0x4, fixed_abs, tag = 'smem constant byte address 0x4 - core index']
  #allocation1 [shape = 'u32[144,128]{1,0:T(1,128)}', space=vmem, size = 0x12000, scoped, tag = 'internal scratch']
  %s0 = inlined_call_operand.vmem [shape: bf16[16,384], index: 0, kind: input, shape index: {}]
  %s1 = inlined_call_operand.vmem [shape: bf16[16,128], index: 1, kind: input, shape index: {}]
  %s2 = inlined_call_operand.hbm [shape: bf16[384,128], index: 2, kind: input, shape index: {}]
  %s3 = inlined_call_operand.vmem [shape: bf16[128,128], index: 3, kind: input, shape index: {}]
  %s4 = inlined_call_operand.vmem [shape: f32[1,128], index: 4, kind: input, shape index: {}]
  %s5 = inlined_call_operand.vmem [shape: bf16[16,128], index: 5, kind: output, shape index: {}]
  %s6 = sld [smem:[#allocation0]]
  $region34: #{know_rgfd_forward.7} parent=0
    _
  %s8 = ssub.s32 1, %s6
  %s9 = scalar_select 0, %s8, %s6
  $region1: #{know_rgfd_forward.7} parent=0
    #allocation2 [shape = 'u8[98304]{0}', space=vmem, size = 0x18000, scoped, tag = 'input window, operand 2, single buffered']
    #allocation3 [shape = 's32[1]{0}', space=sflag, size = 0x4, scoped, tag = 'scoped memory for know_rgfd_forward.7']
    %10 = vsyncpa [#allocation3], 0
    // Predicated region
    $region2: #{know_rgfd_forward.7} parent=1 // pred_check
      _
    $region3: #{know_rgfd_forward.7} parent=1 // pred_check_branch
      %12 = sbr.rel (0) target = $region5
    $region4: #{know_rgfd_forward.7} parent=1 // pred_region
      _
    $region5: #{know_rgfd_forward.7} parent=1 // pred_fallthru
      _
    // Predicated region
    $region6: #{know_rgfd_forward.7} parent=1 // pred_check
      _
    $region7: #{know_rgfd_forward.7} parent=1 // pred_check_branch
      %14 = sbr.rel (0) target = $region9
    $region8: #{know_rgfd_forward.7} parent=1 // pred_region
      _
    $region9: #{know_rgfd_forward.7} parent=1 // pred_fallthru
      _
    // Predicated region
    $region10: #{know_rgfd_forward.7} parent=1 // pred_check
      _
    $region11: #{know_rgfd_forward.7} parent=1 // pred_check_branch
      %16 = sbr.rel (0) target = $region13
    $region12: #{know_rgfd_forward.7} parent=1 // pred_region
      %s18 = ssub.s32 3072, 3072
      %19 = vsyncadd [#allocation3], %s18
      %s20 = sshll.u32 [#allocation2], 4
      %s21 = int_to_ptr.vmem [resolvable:$true] %s20
      %26 = dma.hbm_to_vmem [thread:$0]  %s2, 3072, %s21, [#allocation3], 64, 64, 4
    $region13: #{know_rgfd_forward.7} parent=1 // pred_fallthru
      _
    // Predicated region
    $region14: #{know_rgfd_forward.7} parent=1 // pred_check
      _
    $region15: #{know_rgfd_forward.7} parent=1 // pred_check_branch
      %28 = sbr.rel (0) target = $region17
    $region16: #{know_rgfd_forward.7} parent=1 // pred_region
      _
    $region17: #{know_rgfd_forward.7} parent=1 // pred_fallthru
      _
    // Predicated region
    $region18: #{know_rgfd_forward.7} parent=1 // pred_check
      _
    $region19: #{know_rgfd_forward.7} parent=1 // pred_check_branch
      %30 = sbr.rel (0) target = $region21
    $region20: #{know_rgfd_forward.7} parent=1 // pred_region
      _
    $region21: #{know_rgfd_forward.7} parent=1 // pred_fallthru
      _
    // Predicated region
    $region22: #{know_rgfd_forward.7} parent=1 // pred_check
      _
    $region23: #{know_rgfd_forward.7} parent=1 // pred_check_branch
      %32 = sbr.rel (0) target = $region25
    $region24: #{know_rgfd_forward.7} parent=1 // pred_region
      %33 = dma.done [#allocation3], 3072
    $region25: #{know_rgfd_forward.7} parent=1 // pred_fallthru
      _
    %v35 = vld [vmem:[%s1] sm:$0xf]
    %v36 = vld [vmem:[%s1 + $0x4] sm:$0xf]
    %v37 = vld [vmem:[%s3] sm:$0xf]
    %v38 = vld [vmem:[%s3 + $0x4] sm:$0xf]
    %v39 = vld [vmem:[%s3 + $0x8] sm:$0xf]
    %v40 = vld [vmem:[%s3 + $0xc] sm:$0xf]
    %v41 = vld [vmem:[%s3 + $0x10] sm:$0xf]
    %v42 = vld [vmem:[%s3 + $0x14] sm:$0xf]
    %v43 = vld [vmem:[%s3 + $0x18] sm:$0xf]
    %v44 = vld [vmem:[%s3 + $0x1c] sm:$0xf]
    %v45 = vld [vmem:[%s3 + $0x20] sm:$0xf]
    %v46 = vld [vmem:[%s3 + $0x24] sm:$0xf]
    %v47 = vld [vmem:[%s3 + $0x28] sm:$0xf]
    %v48 = vld [vmem:[%s3 + $0x2c] sm:$0xf]
    %v49 = vld [vmem:[%s3 + $0x30] sm:$0xf]
    %v50 = vld [vmem:[%s3 + $0x34] sm:$0xf]
    %v51 = vld [vmem:[%s3 + $0x38] sm:$0xf]
    %v52 = vld [vmem:[%s3 + $0x3c] sm:$0xf]
    %v53 = vld [vmem:[%s4] sm:$0x1]
    %v55 = vlaneseq
    %v56 = vshrl.u32 %v55, 7
    %v57 = vsub.s32 0, %v56
    %v58 = vrot.slane %v53, %v57
    %v62 = vunpack.c.l.b16 %v35
    %v63 = vunpack.c.l.b16 %v36
    %v64 = vpack.c.b16 %v63, %v62
    %v82 = vunpack.c.l.b16 %v37
    %v83 = vunpack.c.l.b16 %v38
    %v84 = vunpack.c.l.b16 %v39
    %v85 = vunpack.c.l.b16 %v40
    %v86 = vunpack.c.l.b16 %v41
    %v87 = vunpack.c.l.b16 %v42
    %v88 = vunpack.c.l.b16 %v43
    %v89 = vunpack.c.l.b16 %v44
    %v90 = vunpack.c.l.b16 %v45
    %v91 = vunpack.c.l.b16 %v46
    %v92 = vunpack.c.l.b16 %v47
    %v93 = vunpack.c.l.b16 %v48
    %v94 = vunpack.c.l.b16 %v49
    %v95 = vunpack.c.l.b16 %v50
    %v96 = vunpack.c.l.b16 %v51
    %v97 = vunpack.c.l.b16 %v52
    %v98 = vpack.c.b16 %v83, %v82
    %v99 = vpack.c.b16 %v85, %v84
    %v100 = vpack.c.b16 %v87, %v86
    %v101 = vpack.c.b16 %v89, %v88
    %v102 = vpack.c.b16 %v91, %v90
    %v103 = vpack.c.b16 %v93, %v92
    %v104 = vpack.c.b16 %v95, %v94
    %v105 = vpack.c.b16 %v97, %v96
    %114 = vmatprep.subr.bf16.mxu0 0
    %115 = vmatpush1.bf16.msra.mxu0 %v98
    %116 = vmatprep.subr.bf16.mxu0 0
    %117 = vmatpush1.bf16.msra.mxu0 %v99
    %118 = vmatprep.subr.bf16.mxu0 0
    %119 = vmatpush1.bf16.msra.mxu0 %v100
    %120 = vmatprep.subr.bf16.mxu0 0
    %121 = vmatpush1.bf16.msra.mxu0 %v101
    %122 = vmatprep.subr.bf16.mxu0 0
    %123 = vmatpush1.bf16.msra.mxu0 %v102
    %124 = vmatprep.subr.bf16.mxu0 0
    %125 = vmatpush1.bf16.msra.mxu0 %v103
    %126 = vmatprep.subr.bf16.mxu0 0
    %127 = vmatpush1.bf16.msra.mxu0 %v104
    %128 = vmatprep.subr.bf16.mxu0 0
    %129 = vmatpush1.bf16.msra.mxu0 %v105
    %130 = vmatprep.subr.bf16.mxu0 0
    %131 = vmatpush1.bf16.msra.mxu0 0
    %132 = vmatprep.subr.bf16.mxu0 0
    %133 = vmatpush1.bf16.msra.mxu0 0
    %134 = vmatprep.subr.bf16.mxu0 0
    %135 = vmatpush1.bf16.msra.mxu0 0
    %136 = vmatprep.subr.bf16.mxu0 0
    %137 = vmatpush1.bf16.msra.mxu0 0
    %138 = vmatprep.subr.bf16.mxu0 0
    %139 = vmatpush1.bf16.msra.mxu0 0
    %140 = vmatprep.subr.bf16.mxu0 0
    %141 = vmatpush1.bf16.msra.mxu0 0
    %142 = vmatprep.subr.bf16.mxu0 0
    %143 = vmatpush1.bf16.msra.mxu0 0
    %144 = vmatprep.subr.bf16.mxu0 0
    %145 = vmatpush1.bf16.msra.mxu0 0
    %146 = vmatprep.mubr.bf16.mxu0 0
    %147 = vmatmul.mubr.bf16.gmra.mrb[0].mxu0 %v64
    %v148 = vpop.f32.mrb[0].mxu0
    %v149 = vadd.f32 %v58, %v148
    %v150 = vpop.f32.mrb[0].mxu0
    %v151 = vpop.f32.mrb[0].mxu0
    %v152 = vadd.f32 %v58, %v151
    %v153 = vpop.f32.mrb[0].mxu0
    %154 = vdwg.mxu0
    %v155 = vld [vmem:[%s0] sm:$0xff]
    %v156 = vld [vmem:[%s0 + $0x8] sm:$0xf]
    %v157 = vld [vmem:[%s0 + $0xc] sm:$0xff]
    %v158 = vld [vmem:[%s0 + $0x14] sm:$0xf]
    %v159 = vld [vmem:[#allocation2] sm:$0xf]
    %v160 = vld [vmem:[#allocation2 + $0x4] sm:$0xf]
    %v161 = vld [vmem:[#allocation2 + $0x8] sm:$0xf]
    %v162 = vld [vmem:[#allocation2 + $0xc] sm:$0xf]
    %v163 = vld [vmem:[#allocation2 + $0x10] sm:$0xf]
    %v164 = vld [vmem:[#allocation2 + $0x14] sm:$0xf]
    %v165 = vld [vmem:[#allocation2 + $0x18] sm:$0xf]
    %v166 = vld [vmem:[#allocation2 + $0x1c] sm:$0xf]
    %v167 = vld [vmem:[#allocation2 + $0x20] sm:$0xf]
    %v168 = vld [vmem:[#allocation2 + $0x24] sm:$0xf]
    %v169 = vld [vmem:[#allocation2 + $0x28] sm:$0xf]
    %v170 = vld [vmem:[#allocation2 + $0x2c] sm:$0xf]
    %v171 = vld [vmem:[#allocation2 + $0x30] sm:$0xf]
    %v172 = vld [vmem:[#allocation2 + $0x34] sm:$0xf]
    %v173 = vld [vmem:[#allocation2 + $0x38] sm:$0xf]
    %v174 = vld [vmem:[#allocation2 + $0x3c] sm:$0xf]
    %v175 = vld [vmem:[#allocation2 + $0x40] sm:$0xf]
    %v176 = vld [vmem:[#allocation2 + $0x44] sm:$0xf]
    %v177 = vld [vmem:[#allocation2 + $0x48] sm:$0xf]
    %v178 = vld [vmem:[#allocation2 + $0x4c] sm:$0xf]
    %v179 = vld [vmem:[#allocation2 + $0x50] sm:$0xf]
    %v180 = vld [vmem:[#allocation2 + $0x54] sm:$0xf]
    %v181 = vld [vmem:[#allocation2 + $0x58] sm:$0xf]
    %v182 = vld [vmem:[#allocation2 + $0x5c] sm:$0xf]
    %v183 = vld [vmem:[#allocation2 + $0x60] sm:$0xf]
    %v184 = vld [vmem:[#allocation2 + $0x64] sm:$0xf]
    %v185 = vld [vmem:[#allocation2 + $0x68] sm:$0xf]
    %v186 = vld [vmem:[#allocation2 + $0x6c] sm:$0xf]
    %v187 = vld [vmem:[#allocation2 + $0x70] sm:$0xf]
    %v188 = vld [vmem:[#allocation2 + $0x74] sm:$0xf]
    %v189 = vld [vmem:[#allocation2 + $0x78] sm:$0xf]
    %v190 = vld [vmem:[#allocation2 + $0x7c] sm:$0xf]
    %v191 = vld [vmem:[#allocation2 + $0x80] sm:$0xf]
    %v192 = vld [vmem:[#allocation2 + $0x84] sm:$0xf]
    %v193 = vld [vmem:[#allocation2 + $0x88] sm:$0xf]
    %v194 = vld [vmem:[#allocation2 + $0x8c] sm:$0xf]
    %v195 = vld [vmem:[#allocation2 + $0x90] sm:$0xf]
    %v196 = vld [vmem:[#allocation2 + $0x94] sm:$0xf]
    %v197 = vld [vmem:[#allocation2 + $0x98] sm:$0xf]
    %v198 = vld [vmem:[#allocation2 + $0x9c] sm:$0xf]
    %v199 = vld [vmem:[#allocation2 + $0xa0] sm:$0xf]
    %v200 = vld [vmem:[#allocation2 + $0xa4] sm:$0xf]
    %v201 = vld [vmem:[#allocation2 + $0xa8] sm:$0xf]
    %v202 = vld [vmem:[#allocation2 + $0xac] sm:$0xf]
    %v203 = vld [vmem:[#allocation2 + $0xb0] sm:$0xf]
    %v204 = vld [vmem:[#allocation2 + $0xb4] sm:$0xf]
    %v205 = vld [vmem:[#allocation2 + $0xb8] sm:$0xf]
    %v206 = vld [vmem:[#allocation2 + $0xbc] sm:$0xf]
    %v211 = vunpack.c.l.b16 %v155
    %v212 = vunpack.c.h.b16 %v155
    %v213 = vunpack.c.l.b16 %v156
    %v214 = vunpack.c.l.b16 %v157
    %v215 = vunpack.c.h.b16 %v157
    %v216 = vunpack.c.l.b16 %v158
    %v217 = vpack.c.b16 %v214, %v211
    %v218 = vpack.c.b16 %v215, %v212
    %v219 = vpack.c.b16 %v216, %v213
    %v271 = vunpack.c.l.b16 %v159
    %v272 = vunpack.c.l.b16 %v160
    %v273 = vunpack.c.l.b16 %v161
    %v274 = vunpack.c.l.b16 %v162
    %v275 = vunpack.c.l.b16 %v163
    %v276 = vunpack.c.l.b16 %v164
    %v277 = vunpack.c.l.b16 %v165
    %v278 = vunpack.c.l.b16 %v166
    %v279 = vunpack.c.l.b16 %v167
    %v280 = vunpack.c.l.b16 %v168
    %v281 = vunpack.c.l.b16 %v169
    %v282 = vunpack.c.l.b16 %v170
    %v283 = vunpack.c.l.b16 %v171
    %v284 = vunpack.c.l.b16 %v172
    %v285 = vunpack.c.l.b16 %v173
    %v286 = vunpack.c.l.b16 %v174
    %v287 = vunpack.c.l.b16 %v175
    %v288 = vunpack.c.l.b16 %v176
    %v289 = vunpack.c.l.b16 %v177
    %v290 = vunpack.c.l.b16 %v178
    %v291 = vunpack.c.l.b16 %v179
    %v292 = vunpack.c.l.b16 %v180
    %v293 = vunpack.c.l.b16 %v181
    %v294 = vunpack.c.l.b16 %v182
    %v295 = vunpack.c.l.b16 %v183
    %v296 = vunpack.c.l.b16 %v184
    %v297 = vunpack.c.l.b16 %v185
    %v298 = vunpack.c.l.b16 %v186
    %v299 = vunpack.c.l.b16 %v187
    %v300 = vunpack.c.l.b16 %v188
    %v301 = vunpack.c.l.b16 %v189
    %v302 = vunpack.c.l.b16 %v190
    %v303 = vunpack.c.l.b16 %v191
    %v304 = vunpack.c.l.b16 %v192
    %v305 = vunpack.c.l.b16 %v193
    %v306 = vunpack.c.l.b16 %v194
    %v307 = vunpack.c.l.b16 %v195
    %v308 = vunpack.c.l.b16 %v196
    %v309 = vunpack.c.l.b16 %v197
    %v310 = vunpack.c.l.b16 %v198
    %v311 = vunpack.c.l.b16 %v199
    %v312 = vunpack.c.l.b16 %v200
    %v313 = vunpack.c.l.b16 %v201
    %v314 = vunpack.c.l.b16 %v202
    %v315 = vunpack.c.l.b16 %v203
    %v316 = vunpack.c.l.b16 %v204
    %v317 = vunpack.c.l.b16 %v205
    %v318 = vunpack.c.l.b16 %v206
    %v319 = vpack.c.b16 %v272, %v271
    %v320 = vpack.c.b16 %v274, %v273
    %v321 = vpack.c.b16 %v276, %v275
    %v322 = vpack.c.b16 %v278, %v277
    %v323 = vpack.c.b16 %v280, %v279
    %v324 = vpack.c.b16 %v282, %v281
    %v325 = vpack.c.b16 %v284, %v283
    %v326 = vpack.c.b16 %v286, %v285
    %v327 = vpack.c.b16 %v288, %v287
    %v328 = vpack.c.b16 %v290, %v289
    %v329 = vpack.c.b16 %v292, %v291
    %v330 = vpack.c.b16 %v294, %v293
    %v331 = vpack.c.b16 %v296, %v295
    %v332 = vpack.c.b16 %v298, %v297
    %v333 = vpack.c.b16 %v300, %v299
    %v334 = vpack.c.b16 %v302, %v301
    %v335 = vpack.c.b16 %v304, %v303
    %v336 = vpack.c.b16 %v306, %v305
    %v337 = vpack.c.b16 %v308, %v307
    %v338 = vpack.c.b16 %v310, %v309
    %v339 = vpack.c.b16 %v312, %v311
    %v340 = vpack.c.b16 %v314, %v313
    %v341 = vpack.c.b16 %v316, %v315
    %v342 = vpack.c.b16 %v318, %v317
    %367 = vmatprep.subr.bf16.mxu0 0
    %368 = vmatpush1.bf16.msra.mxu0 %v319
    %369 = vmatprep.subr.bf16.mxu0 0
    %370 = vmatpush1.bf16.msra.mxu0 %v320
    %371 = vmatprep.subr.bf16.mxu0 0
    %372 = vmatpush1.bf16.msra.mxu0 %v321
    %373 = vmatprep.subr.bf16.mxu0 0
    %374 = vmatpush1.bf16.msra.mxu0 %v322
    %375 = vmatprep.subr.bf16.mxu0 0
    %376 = vmatpush1.bf16.msra.mxu0 %v323
    %377 = vmatprep.subr.bf16.mxu0 0
    %378 = vmatpush1.bf16.msra.mxu0 %v324
    %379 = vmatprep.subr.bf16.mxu0 0
    %380 = vmatpush1.bf16.msra.mxu0 %v325
    %381 = vmatprep.subr.bf16.mxu0 0
    %382 = vmatpush1.bf16.msra.mxu0 %v326
    %383 = vmatprep.subr.bf16.mxu0 0
    %384 = vmatpush1.bf16.msra.mxu0 %v327
    %385 = vmatprep.subr.bf16.mxu0 0
    %386 = vmatpush1.bf16.msra.mxu0 %v328
    %387 = vmatprep.subr.bf16.mxu0 0
    %388 = vmatpush1.bf16.msra.mxu0 %v329
    %389 = vmatprep.subr.bf16.mxu0 0
    %390 = vmatpush1.bf16.msra.mxu0 %v330
    %391 = vmatprep.subr.bf16.mxu0 0
    %392 = vmatpush1.bf16.msra.mxu0 %v331
    %393 = vmatprep.subr.bf16.mxu0 0
    %394 = vmatpush1.bf16.msra.mxu0 %v332
    %395 = vmatprep.subr.bf16.mxu0 0
    %396 = vmatpush1.bf16.msra.mxu0 %v333
    %397 = vmatprep.subr.bf16.mxu0 0
    %398 = vmatpush1.bf16.msra.mxu0 %v334
    %399 = vmatprep.mubr.bf16.mxu0 %v218
    %400 = vmatmul.mubr.bf16.gmra.mrb[0].mxu0 %v217
    %v401 = vpop.f32.mrb[0].mxu0
    %v402 = vadd.f32 0.0, %v401
    %v403 = vpop.f32.mrb[0].mxu0
    %v404 = vpop.f32.mrb[0].mxu0
    %v405 = vadd.f32 0.0, %v404
    %v406 = vpop.f32.mrb[0].mxu0
    %407 = vdwg.mxu0
    %408 = vmatprep.subr.bf16.mxu0 0
    %409 = vmatpush1.bf16.msra.mxu0 %v335
    %410 = vmatprep.subr.bf16.mxu0 0
    %411 = vmatpush1.bf16.msra.mxu0 %v336
    %412 = vmatprep.subr.bf16.mxu0 0
    %413 = vmatpush1.bf16.msra.mxu0 %v337
    %414 = vmatprep.subr.bf16.mxu0 0
    %415 = vmatpush1.bf16.msra.mxu0 %v338
    %416 = vmatprep.subr.bf16.mxu0 0
    %417 = vmatpush1.bf16.msra.mxu0 %v339
    %418 = vmatprep.subr.bf16.mxu0 0
    %419 = vmatpush1.bf16.msra.mxu0 %v340
    %420 = vmatprep.subr.bf16.mxu0 0
    %421 = vmatpush1.bf16.msra.mxu0 %v341
    %422 = vmatprep.subr.bf16.mxu0 0
    %423 = vmatpush1.bf16.msra.mxu0 %v342
    %424 = vmatprep.subr.bf16.mxu0 0
    %425 = vmatpush1.bf16.msra.mxu0 0
    %426 = vmatprep.subr.bf16.mxu0 0
    %427 = vmatpush1.bf16.msra.mxu0 0
    %428 = vmatprep.subr.bf16.mxu0 0
    %429 = vmatpush1.bf16.msra.mxu0 0
    %430 = vmatprep.subr.bf16.mxu0 0
    %431 = vmatpush1.bf16.msra.mxu0 0
    %432 = vmatprep.subr.bf16.mxu0 0
    %433 = vmatpush1.bf16.msra.mxu0 0
    %434 = vmatprep.subr.bf16.mxu0 0
    %435 = vmatpush1.bf16.msra.mxu0 0
    %436 = vmatprep.subr.bf16.mxu0 0
    %437 = vmatpush1.bf16.msra.mxu0 0
    %438 = vmatprep.subr.bf16.mxu0 0
    %439 = vmatpush1.bf16.msra.mxu0 0
    %440 = vmatprep.mubr.bf16.mxu0 0
    %441 = vmatmul.mubr.bf16.gmra.mrb[0].mxu0 %v219
    %v442 = vpop.f32.mrb[0].mxu0
    %v443 = vadd.f32 %v402, %v442
    %v444 = vpop.f32.mrb[0].mxu0
    %v445 = vpop.f32.mrb[0].mxu0
    %v446 = vadd.f32 %v405, %v445
    %v447 = vpop.f32.mrb[0].mxu0
    %448 = vdwg.mxu0
    %v449 = vadd.f32 %v149, %v443
    %v450 = vadd.f32 %v152, %v446
    %v451 = vmax.f32 %v449, 0.0
    %v452 = vmax.f32 %v450, 0.0
    %v453 = vpack.c.bf16 %v452, %v451
    %v455 = vunpack.c.l.b16 %v453
    %v456 = vunpack.c.h.b16 %v453
    %v457 = vpack.c.b16 %v455, %v455
    %v458 = vpack.c.b16 %v456, %v456
    %461 = vst [vmem:[%s5] sm:$0xf] %v457
    %462 = vst [vmem:[%s5 + $0x4] sm:$0xf] %v458
    // Predicated region
    $region26: #{know_rgfd_forward.7} parent=1 // pred_check
      _
    $region27: #{know_rgfd_forward.7} parent=1 // pred_check_branch
      %464 = sbr.rel (0) target = $region29
    $region28: #{know_rgfd_forward.7} parent=1 // pred_region
      _
    $region29: #{know_rgfd_forward.7} parent=1 // pred_fallthru
      _
    // Predicated region
    $region30: #{know_rgfd_forward.7} parent=1 // pred_check
      _
    $region31: #{know_rgfd_forward.7} parent=1 // pred_check_branch
      %466 = sbr.rel (0) target = $region33
    $region32: #{know_rgfd_forward.7} parent=1 // pred_region
      _
    $region33: #{know_rgfd_forward.7} parent=1 // pred_fallthru
      _
    %467 = vsyncpa [#allocation3], 1

// kernel: know_rgfd_forward.8
$region0: #{know_rgfd_forward.8}
  #allocation0 [shape = 'u32[]', space=smem, size = 0x4, offset = 0x4, fixed_abs, tag = 'smem constant byte address 0x4 - core index']
  #allocation1 [shape = 'u32[144,128]{1,0:T(1,128)}', space=vmem, size = 0x12000, scoped, tag = 'internal scratch']
  #allocation2 [shape = 'f32[16,384]{1,0:T(8,128)}', space=vmem, size = 0x6000, scoped, tag = 'scratch operand']
  %s0 = inlined_call_operand.vmem [shape: bf16[3,16,16], index: 0, kind: input, shape index: {}]
  %s1 = inlined_call_operand.vmem [shape: bf16[16,128], index: 1, kind: input, shape index: {}, may-alias: {1,2}]
  %s2 = inlined_call_operand.vmem [shape: bf16[16,128], index: 2, kind: input, shape index: {}, may-alias: {1,2}]
  %s3 = inlined_call_operand.vmem [shape: bf16[384,128], index: 3, kind: input, shape index: {}]
  %s4 = inlined_call_operand.vmem [shape: bf16[128,128], index: 4, kind: input, shape index: {}]
  %s5 = inlined_call_operand.vmem [shape: f32[1,128], index: 5, kind: input, shape index: {}]
  %s6 = inlined_call_operand.vmem [shape: f32[16,128], index: 6, kind: output, shape index: {0}]
  %s7 = inlined_call_operand.vmem [shape: f32[16,128], index: 7, kind: output, shape index: {1}]
  %8 = xla_tuple %s6, %s7
  %s9 = sld [smem:[#allocation0]]
  $region50: #{know_rgfd_forward.8} parent=0
    _
  %s11 = ssub.s32 1, %s9
  %s12 = scalar_select 0, %s11, %s9
  // Predicated region
  $region2: #{know_rgfd_forward.8} parent=0 // pred_check
    _
  $region3: #{know_rgfd_forward.8} parent=0 // pred_check_branch
    %14 = sbr.rel (0) target = $region5
  $region4: #{know_rgfd_forward.8} parent=0 // pred_region
    _
  $region5: #{know_rgfd_forward.8} parent=0 // pred_fallthru
    _
  // Predicated region
  $region6: #{know_rgfd_forward.8} parent=0 // pred_check
    _
  $region7: #{know_rgfd_forward.8} parent=0 // pred_check_branch
    %16 = sbr.rel (0) target = $region9
  $region8: #{know_rgfd_forward.8} parent=0 // pred_region
    _
  $region9: #{know_rgfd_forward.8} parent=0 // pred_fallthru
    _
  // Predicated region
  $region10: #{know_rgfd_forward.8} parent=0 // pred_check
    _
  $region11: #{know_rgfd_forward.8} parent=0 // pred_check_branch
    %18 = sbr.rel (0) target = $region13
  $region12: #{know_rgfd_forward.8} parent=0 // pred_region
    _
  $region13: #{know_rgfd_forward.8} parent=0 // pred_fallthru
    _
  // Predicated region
  $region14: #{know_rgfd_forward.8} parent=0 // pred_check
    _
  $region15: #{know_rgfd_forward.8} parent=0 // pred_check_branch
    %20 = sbr.rel (0) target = $region17
  $region16: #{know_rgfd_forward.8} parent=0 // pred_region
    _
  $region17: #{know_rgfd_forward.8} parent=0 // pred_fallthru
    _
  // Predicated region
  $region18: #{know_rgfd_forward.8} parent=0 // pred_check
    _
  $region19: #{know_rgfd_forward.8} parent=0 // pred_check_branch
    %22 = sbr.rel (0) target = $region21
  $region20: #{know_rgfd_forward.8} parent=0 // pred_region
    _
  $region21: #{know_rgfd_forward.8} parent=0 // pred_fallthru
    _
  // Predicated region
  $region22: #{know_rgfd_forward.8} parent=0 // pred_check
    _
  $region23: #{know_rgfd_forward.8} parent=0 // pred_check_branch
    %24 = sbr.rel (0) target = $region25
  $region24: #{know_rgfd_forward.8} parent=0 // pred_region
    _
  $region25: #{know_rgfd_forward.8} parent=0 // pred_fallthru
    _
  %p26 = scmp.eq.s32.totalorder 0, 0
  // Predicated region
  $region26: #{know_rgfd_forward.8} parent=0 // pred_check
    %p27 = pneg %p26
  $region27: #{know_rgfd_forward.8} parent=0 // pred_check_branch
    %29 = sbr.rel (%p27) target = $region29
  $region28: #{know_rgfd_forward.8} parent=0 // pred_region
    %30 = vst [vmem:[#allocation2] sm:$0xff] 0.0
    %31 = vst [vmem:[#allocation2 + $0x8] sm:$0xff] 0.0
    %32 = vst [vmem:[#allocation2 + $0x10] sm:$0xff] 0.0
    %33 = vst [vmem:[#allocation2 + $0x18] sm:$0xff] 0.0
    %34 = vst [vmem:[#allocation2 + $0x20] sm:$0xff] 0.0
    %35 = vst [vmem:[#allocation2 + $0x28] sm:$0xff] 0.0
  $region29: #{know_rgfd_forward.8} parent=0 // pred_fallthru
    _
  %v36 = vld [vmem:[%s1] sm:$0xf]
  %v37 = vld [vmem:[%s1 + $0x4] sm:$0xf]
  %v38 = vld [vmem:[#allocation2] sm:$0xff]
  %v39 = vld [vmem:[#allocation2 + $0x18] sm:$0xff]
  %v40 = vld [vmem:[%s0] sm:$0xf]
  %v41 = vld [vmem:[%s0 + $0x4] sm:$0xf]
  %v44 = vunpack.c.l.b16 %v40
  %v45 = vunpack.c.l.b16 %v41
  %v46 = vpack.c.b16 %v45, %v44
  %v49 = vunpack.c.l.b16 %v36
  %v50 = vunpack.c.l.b16 %v37
  %v51 = vpack.c.b16 %v50, %v49
  %vm53 = vcmask 130048
  %v55 = vsel %vm53, %v46, 0
  %57 = vmatprep.subr.bf16.mxu0 0
  %58 = vmatpush1.bf16.msra.mxu0 %v51
  %59 = vmatprep.subr.bf16.mxu0 0
  %60 = vmatpush1.bf16.msra.mxu0 0
  %61 = vmatprep.subr.bf16.mxu0 0
  %62 = vmatpush1.bf16.msra.mxu0 0
  %63 = vmatprep.subr.bf16.mxu0 0
  %64 = vmatpush1.bf16.msra.mxu0 0
  %65 = vmatprep.subr.bf16.mxu0 0
  %66 = vmatpush1.bf16.msra.mxu0 0
  %67 = vmatprep.subr.bf16.mxu0 0
  %68 = vmatpush1.bf16.msra.mxu0 0
  %69 = vmatprep.subr.bf16.mxu0 0
  %70 = vmatpush1.bf16.msra.mxu0 0
  %71 = vmatprep.subr.bf16.mxu0 0
  %72 = vmatpush1.bf16.msra.mxu0 0
  %73 = vmatprep.subr.bf16.mxu0 0
  %74 = vmatpush1.bf16.msra.mxu0 0
  %75 = vmatprep.subr.bf16.mxu0 0
  %76 = vmatpush1.bf16.msra.mxu0 0
  %77 = vmatprep.subr.bf16.mxu0 0
  %78 = vmatpush1.bf16.msra.mxu0 0
  %79 = vmatprep.subr.bf16.mxu0 0
  %80 = vmatpush1.bf16.msra.mxu0 0
  %81 = vmatprep.subr.bf16.mxu0 0
  %82 = vmatpush1.bf16.msra.mxu0 0
  %83 = vmatprep.subr.bf16.mxu0 0
  %84 = vmatpush1.bf16.msra.mxu0 0
  %85 = vmatprep.subr.bf16.mxu0 0
  %86 = vmatpush1.bf16.msra.mxu0 0
  %87 = vmatprep.subr.bf16.mxu0 0
  %88 = vmatpush1.bf16.msra.mxu0 0
  %89 = vmatprep.mubr.bf16.mxu0 0
  %90 = vmatmul.mubr.bf16.gmra.mrb[0].mxu0 %v55
  %v91 = vpop.f32.mrb[0].mxu0
  %v92 = vadd.f32 0.0, %v91
  %v93 = vpop.f32.mrb[0].mxu0
  %v94 = vpop.f32.mrb[0].mxu0
  %v95 = vadd.f32 0.0, %v94
  %v96 = vpop.f32.mrb[0].mxu0
  %97 = vdwg.mxu0
  %v98 = vadd.f32 %v38, %v92
  %v99 = vadd.f32 %v39, %v95
  %100 = vst [vmem:[#allocation2] sm:$0xff] %v98
  %101 = vst [vmem:[#allocation2 + $0x18] sm:$0xff] %v99
  %v102 = vld [vmem:[#allocation2 + $0x8] sm:$0xff]
  %v103 = vld [vmem:[#allocation2 + $0x20] sm:$0xff]
  %s104 = scalar_lea.vmem %s0, 8
  %v105 = vld [vmem:[%s104] sm:$0xf]
  %v106 = vld [vmem:[%s104 + $0x4] sm:$0xf]
  %v109 = vunpack.c.l.b16 %v105
  %v110 = vunpack.c.l.b16 %v106
  %v111 = vpack.c.b16 %v110, %v109
  %v113 = vsel %vm53, %v111, 0
  %115 = vmatprep.subr.bf16.mxu0 0
  %116 = vmatpush1.bf16.msra.mxu0 %v51
  %117 = vmatprep.subr.bf16.mxu0 0
  %118 = vmatpush1.bf16.msra.mxu0 0
  %119 = vmatprep.subr.bf16.mxu0 0
  %120 = vmatpush1.bf16.msra.mxu0 0
  %121 = vmatprep.subr.bf16.mxu0 0
  %122 = vmatpush1.bf16.msra.mxu0 0
  %123 = vmatprep.subr.bf16.mxu0 0
  %124 = vmatpush1.bf16.msra.mxu0 0
  %125 = vmatprep.subr.bf16.mxu0 0
  %126 = vmatpush1.bf16.msra.mxu0 0
  %127 = vmatprep.subr.bf16.mxu0 0
  %128 = vmatpush1.bf16.msra.mxu0 0
  %129 = vmatprep.subr.bf16.mxu0 0
  %130 = vmatpush1.bf16.msra.mxu0 0
  %131 = vmatprep.subr.bf16.mxu0 0
  %132 = vmatpush1.bf16.msra.mxu0 0
  %133 = vmatprep.subr.bf16.mxu0 0
  %134 = vmatpush1.bf16.msra.mxu0 0
  %135 = vmatprep.subr.bf16.mxu0 0
  %136 = vmatpush1.bf16.msra.mxu0 0
  %137 = vmatprep.subr.bf16.mxu0 0
  %138 = vmatpush1.bf16.msra.mxu0 0
  %139 = vmatprep.subr.bf16.mxu0 0
  %140 = vmatpush1.bf16.msra.mxu0 0
  %141 = vmatprep.subr.bf16.mxu0 0
  %142 = vmatpush1.bf16.msra.mxu0 0
  %143 = vmatprep.subr.bf16.mxu0 0
  %144 = vmatpush1.bf16.msra.mxu0 0
  %145 = vmatprep.subr.bf16.mxu0 0
  %146 = vmatpush1.bf16.msra.mxu0 0
  %147 = vmatprep.mubr.bf16.mxu0 0
  %148 = vmatmul.mubr.bf16.gmra.mrb[0].mxu0 %v113
  %v149 = vpop.f32.mrb[0].mxu0
  %v150 = vadd.f32 0.0, %v149
  %v151 = vpop.f32.mrb[0].mxu0
  %v152 = vpop.f32.mrb[0].mxu0
  %v153 = vadd.f32 0.0, %v152
  %v154 = vpop.f32.mrb[0].mxu0
  %155 = vdwg.mxu0
  %v156 = vadd.f32 %v102, %v150
  %v157 = vadd.f32 %v103, %v153
  %158 = vst [vmem:[#allocation2 + $0x8] sm:$0xff] %v156
  %159 = vst [vmem:[#allocation2 + $0x20] sm:$0xff] %v157
  %v160 = vld [vmem:[#allocation2 + $0x10] sm:$0xff]
  %v161 = vld [vmem:[#allocation2 + $0x28] sm:$0xff]
  %s162 = scalar_lea.vmem %s0, 16
  %v163 = vld [vmem:[%s162] sm:$0xf]
  %v164 = vld [vmem:[%s162 + $0x4] sm:$0xf]
  %v167 = vunpack.c.l.b16 %v163
  %v168 = vunpack.c.l.b16 %v164
  %v169 = vpack.c.b16 %v168, %v167
  %v171 = vsel %vm53, %v169, 0
  %173 = vmatprep.subr.bf16.mxu0 0
  %174 = vmatpush1.bf16.msra.mxu0 %v51
  %175 = vmatprep.subr.bf16.mxu0 0
  %176 = vmatpush1.bf16.msra.mxu0 0
  %177 = vmatprep.subr.bf16.mxu0 0
  %178 = vmatpush1.bf16.msra.mxu0 0
  %179 = vmatprep.subr.bf16.mxu0 0
  %180 = vmatpush1.bf16.msra.mxu0 0
  %181 = vmatprep.subr.bf16.mxu0 0
  %182 = vmatpush1.bf16.msra.mxu0 0
  %183 = vmatprep.subr.bf16.mxu0 0
  %184 = vmatpush1.bf16.msra.mxu0 0
  %185 = vmatprep.subr.bf16.mxu0 0
  %186 = vmatpush1.bf16.msra.mxu0 0
  %187 = vmatprep.subr.bf16.mxu0 0
  %188 = vmatpush1.bf16.msra.mxu0 0
  %189 = vmatprep.subr.bf16.mxu0 0
  %190 = vmatpush1.bf16.msra.mxu0 0
  %191 = vmatprep.subr.bf16.mxu0 0
  %192 = vmatpush1.bf16.msra.mxu0 0
  %193 = vmatprep.subr.bf16.mxu0 0
  %194 = vmatpush1.bf16.msra.mxu0 0
  %195 = vmatprep.subr.bf16.mxu0 0
  %196 = vmatpush1.bf16.msra.mxu0 0
  %197 = vmatprep.subr.bf16.mxu0 0
  %198 = vmatpush1.bf16.msra.mxu0 0
  %199 = vmatprep.subr.bf16.mxu0 0
  %200 = vmatpush1.bf16.msra.mxu0 0
  %201 = vmatprep.subr.bf16.mxu0 0
  %202 = vmatpush1.bf16.msra.mxu0 0
  %203 = vmatprep.subr.bf16.mxu0 0
  %204 = vmatpush1.bf16.msra.mxu0 0
  %205 = vmatprep.mubr.bf16.mxu0 0
  %206 = vmatmul.mubr.bf16.gmra.mrb[0].mxu0 %v171
  %v207 = vpop.f32.mrb[0].mxu0
  %v208 = vadd.f32 0.0, %v207
  %v209 = vpop.f32.mrb[0].mxu0
  %v210 = vpop.f32.mrb[0].mxu0
  %v211 = vadd.f32 0.0, %v210
  %v212 = vpop.f32.mrb[0].mxu0
  %213 = vdwg.mxu0
  %v214 = vadd.f32 %v160, %v208
  %v215 = vadd.f32 %v161, %v211
  %216 = vst [vmem:[#allocation2 + $0x10] sm:$0xff] %v214
  %217 = vst [vmem:[#allocation2 + $0x28] sm:$0xff] %v215
  // Predicated region
  $region30: #{know_rgfd_forward.8} parent=0 // pred_check
    %p218 = pneg %p26
  $region31: #{know_rgfd_forward.8} parent=0 // pred_check_branch
    %220 = sbr.rel (%p218) target = $region33
  $region32: #{know_rgfd_forward.8} parent=0 // pred_region
    %v221 = vld [vmem:[%s2] sm:$0xf]
    %v222 = vld [vmem:[%s2 + $0x4] sm:$0xf]
    %v223 = vld [vmem:[%s4] sm:$0xf]
    %v224 = vld [vmem:[%s4 + $0x4] sm:$0xf]
    %v225 = vld [vmem:[%s4 + $0x8] sm:$0xf]
    %v226 = vld [vmem:[%s4 + $0xc] sm:$0xf]
    %v227 = vld [vmem:[%s4 + $0x10] sm:$0xf]
    %v228 = vld [vmem:[%s4 + $0x14] sm:$0xf]
    %v229 = vld [vmem:[%s4 + $0x18] sm:$0xf]
    %v230 = vld [vmem:[%s4 + $0x1c] sm:$0xf]
    %v231 = vld [vmem:[%s4 + $0x20] sm:$0xf]
    %v232 = vld [vmem:[%s4 + $0x24] sm:$0xf]
    %v233 = vld [vmem:[%s4 + $0x28] sm:$0xf]
    %v234 = vld [vmem:[%s4 + $0x2c] sm:$0xf]
    %v235 = vld [vmem:[%s4 + $0x30] sm:$0xf]
    %v236 = vld [vmem:[%s4 + $0x34] sm:$0xf]
    %v237 = vld [vmem:[%s4 + $0x38] sm:$0xf]
    %v238 = vld [vmem:[%s4 + $0x3c] sm:$0xf]
    %v239 = vld [vmem:[%s5] sm:$0x1]
    %v241 = vlaneseq
    %v242 = vshrl.u32 %v241, 7
    %v243 = vsub.s32 0, %v242
    %v244 = vrot.slane %v239, %v243
    %v248 = vunpack.c.l.b16 %v221
    %v249 = vunpack.c.l.b16 %v222
    %v250 = vpack.c.b16 %v249, %v248
    %v268 = vunpack.c.l.b16 %v223
    %v269 = vunpack.c.l.b16 %v224
    %v270 = vunpack.c.l.b16 %v225
    %v271 = vunpack.c.l.b16 %v226
    %v272 = vunpack.c.l.b16 %v227
    %v273 = vunpack.c.l.b16 %v228
    %v274 = vunpack.c.l.b16 %v229
    %v275 = vunpack.c.l.b16 %v230
    %v276 = vunpack.c.l.b16 %v231
    %v277 = vunpack.c.l.b16 %v232
    %v278 = vunpack.c.l.b16 %v233
    %v279 = vunpack.c.l.b16 %v234
    %v280 = vunpack.c.l.b16 %v235
    %v281 = vunpack.c.l.b16 %v236
    %v282 = vunpack.c.l.b16 %v237
    %v283 = vunpack.c.l.b16 %v238
    %v284 = vpack.c.b16 %v269, %v268
    %v285 = vpack.c.b16 %v271, %v270
    %v286 = vpack.c.b16 %v273, %v272
    %v287 = vpack.c.b16 %v275, %v274
    %v288 = vpack.c.b16 %v277, %v276
    %v289 = vpack.c.b16 %v279, %v278
    %v290 = vpack.c.b16 %v281, %v280
    %v291 = vpack.c.b16 %v283, %v282
    %300 = vmatprep.subr.bf16.mxu0 0
    %301 = vmatpush1.bf16.msra.mxu0 %v284
    %302 = vmatprep.subr.bf16.mxu0 0
    %303 = vmatpush1.bf16.msra.mxu0 %v285
    %304 = vmatprep.subr.bf16.mxu0 0
    %305 = vmatpush1.bf16.msra.mxu0 %v286
    %306 = vmatprep.subr.bf16.mxu0 0
    %307 = vmatpush1.bf16.msra.mxu0 %v287
    %308 = vmatprep.subr.bf16.mxu0 0
    %309 = vmatpush1.bf16.msra.mxu0 %v288
    %310 = vmatprep.subr.bf16.mxu0 0
    %311 = vmatpush1.bf16.msra.mxu0 %v289
    %312 = vmatprep.subr.bf16.mxu0 0
    %313 = vmatpush1.bf16.msra.mxu0 %v290
    %314 = vmatprep.subr.bf16.mxu0 0
    %315 = vmatpush1.bf16.msra.mxu0 %v291
    %316 = vmatprep.subr.bf16.mxu0 0
    %317 = vmatpush1.bf16.msra.mxu0 0
    %318 = vmatprep.subr.bf16.mxu0 0
    %319 = vmatpush1.bf16.msra.mxu0 0
    %320 = vmatprep.subr.bf16.mxu0 0
    %321 = vmatpush1.bf16.msra.mxu0 0
    %322 = vmatprep.subr.bf16.mxu0 0
    %323 = vmatpush1.bf16.msra.mxu0 0
    %324 = vmatprep.subr.bf16.mxu0 0
    %325 = vmatpush1.bf16.msra.mxu0 0
    %326 = vmatprep.subr.bf16.mxu0 0
    %327 = vmatpush1.bf16.msra.mxu0 0
    %328 = vmatprep.subr.bf16.mxu0 0
    %329 = vmatpush1.bf16.msra.mxu0 0
    %330 = vmatprep.subr.bf16.mxu0 0
    %331 = vmatpush1.bf16.msra.mxu0 0
    %332 = vmatprep.mubr.bf16.mxu0 0
    %333 = vmatmul.mubr.bf16.gmra.mrb[0].mxu0 %v250
    %v334 = vpop.f32.mrb[0].mxu0
    %v335 = vadd.f32 %v244, %v334
    %v336 = vpop.f32.mrb[0].mxu0
    %v337 = vpop.f32.mrb[0].mxu0
    %v338 = vadd.f32 %v244, %v337
    %v339 = vpop.f32.mrb[0].mxu0
    %340 = vdwg.mxu0
    %v341 = vld [vmem:[#allocation2] sm:$0xff]
    %v342 = vld [vmem:[#allocation2 + $0x8] sm:$0xff]
    %v343 = vld [vmem:[#allocation2 + $0x10] sm:$0xff]
    %v344 = vld [vmem:[#allocation2 + $0x18] sm:$0xff]
    %v345 = vld [vmem:[#allocation2 + $0x20] sm:$0xff]
    %v346 = vld [vmem:[#allocation2 + $0x28] sm:$0xff]
    %v347 = vpack.c.bf16 %v344, %v341
    %v348 = vpack.c.bf16 %v345, %v342
    %v349 = vpack.c.bf16 %v346, %v343
    %v350 = vld [vmem:[%s3] sm:$0xf]
    %v351 = vld [vmem:[%s3 + $0x4] sm:$0xf]
    %v352 = vld [vmem:[%s3 + $0x8] sm:$0xf]
    %v353 = vld [vmem:[%s3 + $0xc] sm:$0xf]
    %v354 = vld [vmem:[%s3 + $0x10] sm:$0xf]
    %v355 = vld [vmem:[%s3 + $0x14] sm:$0xf]
    %v356 = vld [vmem:[%s3 + $0x18] sm:$0xf]
    %v357 = vld [vmem:[%s3 + $0x1c] sm:$0xf]
    %v358 = vld [vmem:[%s3 + $0x20] sm:$0xf]
    %v359 = vld [vmem:[%s3 + $0x24] sm:$0xf]
    %v360 = vld [vmem:[%s3 + $0x28] sm:$0xf]
    %v361 = vld [vmem:[%s3 + $0x2c] sm:$0xf]
    %v362 = vld [vmem:[%s3 + $0x30] sm:$0xf]
    %v363 = vld [vmem:[%s3 + $0x34] sm:$0xf]
    %v364 = vld [vmem:[%s3 + $0x38] sm:$0xf]
    %v365 = vld [vmem:[%s3 + $0x3c] sm:$0xf]
    %v366 = vld [vmem:[%s3 + $0x40] sm:$0xf]
    %v367 = vld [vmem:[%s3 + $0x44] sm:$0xf]
    %v368 = vld [vmem:[%s3 + $0x48] sm:$0xf]
    %v369 = vld [vmem:[%s3 + $0x4c] sm:$0xf]
    %v370 = vld [vmem:[%s3 + $0x50] sm:$0xf]
    %v371 = vld [vmem:[%s3 + $0x54] sm:$0xf]
    %v372 = vld [vmem:[%s3 + $0x58] sm:$0xf]
    %v373 = vld [vmem:[%s3 + $0x5c] sm:$0xf]
    %v374 = vld [vmem:[%s3 + $0x60] sm:$0xf]
    %v375 = vld [vmem:[%s3 + $0x64] sm:$0xf]
    %v376 = vld [vmem:[%s3 + $0x68] sm:$0xf]
    %v377 = vld [vmem:[%s3 + $0x6c] sm:$0xf]
    %v378 = vld [vmem:[%s3 + $0x70] sm:$0xf]
    %v379 = vld [vmem:[%s3 + $0x74] sm:$0xf]
    %v380 = vld [vmem:[%s3 + $0x78] sm:$0xf]
    %v381 = vld [vmem:[%s3 + $0x7c] sm:$0xf]
    %v382 = vld [vmem:[%s3 + $0x80] sm:$0xf]
    %v383 = vld [vmem:[%s3 + $0x84] sm:$0xf]
    %v384 = vld [vmem:[%s3 + $0x88] sm:$0xf]
    %v385 = vld [vmem:[%s3 + $0x8c] sm:$0xf]
    %v386 = vld [vmem:[%s3 + $0x90] sm:$0xf]
    %v387 = vld [vmem:[%s3 + $0x94] sm:$0xf]
    %v388 = vld [vmem:[%s3 + $0x98] sm:$0xf]
    %v389 = vld [vmem:[%s3 + $0x9c] sm:$0xf]
    %v390 = vld [vmem:[%s3 + $0xa0] sm:$0xf]
    %v391 = vld [vmem:[%s3 + $0xa4] sm:$0xf]
    %v392 = vld [vmem:[%s3 + $0xa8] sm:$0xf]
    %v393 = vld [vmem:[%s3 + $0xac] sm:$0xf]
    %v394 = vld [vmem:[%s3 + $0xb0] sm:$0xf]
    %v395 = vld [vmem:[%s3 + $0xb4] sm:$0xf]
    %v396 = vld [vmem:[%s3 + $0xb8] sm:$0xf]
    %v397 = vld [vmem:[%s3 + $0xbc] sm:$0xf]
    %v446 = vunpack.c.l.b16 %v350
    %v447 = vunpack.c.l.b16 %v351
    %v448 = vunpack.c.l.b16 %v352
    %v449 = vunpack.c.l.b16 %v353
    %v450 = vunpack.c.l.b16 %v354
    %v451 = vunpack.c.l.b16 %v355
    %v452 = vunpack.c.l.b16 %v356
    %v453 = vunpack.c.l.b16 %v357
    %v454 = vunpack.c.l.b16 %v358
    %v455 = vunpack.c.l.b16 %v359
    %v456 = vunpack.c.l.b16 %v360
    %v457 = vunpack.c.l.b16 %v361
    %v458 = vunpack.c.l.b16 %v362
    %v459 = vunpack.c.l.b16 %v363
    %v460 = vunpack.c.l.b16 %v364
    %v461 = vunpack.c.l.b16 %v365
    %v462 = vunpack.c.l.b16 %v366
    %v463 = vunpack.c.l.b16 %v367
    %v464 = vunpack.c.l.b16 %v368
    %v465 = vunpack.c.l.b16 %v369
    %v466 = vunpack.c.l.b16 %v370
    %v467 = vunpack.c.l.b16 %v371
    %v468 = vunpack.c.l.b16 %v372
    %v469 = vunpack.c.l.b16 %v373
    %v470 = vunpack.c.l.b16 %v374
    %v471 = vunpack.c.l.b16 %v375
    %v472 = vunpack.c.l.b16 %v376
    %v473 = vunpack.c.l.b16 %v377
    %v474 = vunpack.c.l.b16 %v378
    %v475 = vunpack.c.l.b16 %v379
    %v476 = vunpack.c.l.b16 %v380
    %v477 = vunpack.c.l.b16 %v381
    %v478 = vunpack.c.l.b16 %v382
    %v479 = vunpack.c.l.b16 %v383
    %v480 = vunpack.c.l.b16 %v384
    %v481 = vunpack.c.l.b16 %v385
    %v482 = vunpack.c.l.b16 %v386
    %v483 = vunpack.c.l.b16 %v387
    %v484 = vunpack.c.l.b16 %v388
    %v485 = vunpack.c.l.b16 %v389
    %v486 = vunpack.c.l.b16 %v390
    %v487 = vunpack.c.l.b16 %v391
    %v488 = vunpack.c.l.b16 %v392
    %v489 = vunpack.c.l.b16 %v393
    %v490 = vunpack.c.l.b16 %v394
    %v491 = vunpack.c.l.b16 %v395
    %v492 = vunpack.c.l.b16 %v396
    %v493 = vunpack.c.l.b16 %v397
    %v494 = vpack.c.b16 %v447, %v446
    %v495 = vpack.c.b16 %v449, %v448
    %v496 = vpack.c.b16 %v451, %v450
    %v497 = vpack.c.b16 %v453, %v452
    %v498 = vpack.c.b16 %v455, %v454
    %v499 = vpack.c.b16 %v457, %v456
    %v500 = vpack.c.b16 %v459, %v458
    %v501 = vpack.c.b16 %v461, %v460
    %v502 = vpack.c.b16 %v463, %v462
    %v503 = vpack.c.b16 %v465, %v464
    %v504 = vpack.c.b16 %v467, %v466
    %v505 = vpack.c.b16 %v469, %v468
    %v506 = vpack.c.b16 %v471, %v470
    %v507 = vpack.c.b16 %v473, %v472
    %v508 = vpack.c.b16 %v475, %v474
    %v509 = vpack.c.b16 %v477, %v476
    %v510 = vpack.c.b16 %v479, %v478
    %v511 = vpack.c.b16 %v481, %v480
    %v512 = vpack.c.b16 %v483, %v482
    %v513 = vpack.c.b16 %v485, %v484
    %v514 = vpack.c.b16 %v487, %v486
    %v515 = vpack.c.b16 %v489, %v488
    %v516 = vpack.c.b16 %v491, %v490
    %v517 = vpack.c.b16 %v493, %v492
    %542 = vmatprep.subr.bf16.mxu0 0
    %543 = vmatpush1.bf16.msra.mxu0 %v494
    %544 = vmatprep.subr.bf16.mxu0 0
    %545 = vmatpush1.bf16.msra.mxu0 %v495
    %546 = vmatprep.subr.bf16.mxu0 0
    %547 = vmatpush1.bf16.msra.mxu0 %v496
    %548 = vmatprep.subr.bf16.mxu0 0
    %549 = vmatpush1.bf16.msra.mxu0 %v497
    %550 = vmatprep.subr.bf16.mxu0 0
    %551 = vmatpush1.bf16.msra.mxu0 %v498
    %552 = vmatprep.subr.bf16.mxu0 0
    %553 = vmatpush1.bf16.msra.mxu0 %v499
    %554 = vmatprep.subr.bf16.mxu0 0
    %555 = vmatpush1.bf16.msra.mxu0 %v500
    %556 = vmatprep.subr.bf16.mxu0 0
    %557 = vmatpush1.bf16.msra.mxu0 %v501
    %558 = vmatprep.subr.bf16.mxu0 0
    %559 = vmatpush1.bf16.msra.mxu0 %v502
    %560 = vmatprep.subr.bf16.mxu0 0
    %561 = vmatpush1.bf16.msra.mxu0 %v503
    %562 = vmatprep.subr.bf16.mxu0 0
    %563 = vmatpush1.bf16.msra.mxu0 %v504
    %564 = vmatprep.subr.bf16.mxu0 0
    %565 = vmatpush1.bf16.msra.mxu0 %v505
    %566 = vmatprep.subr.bf16.mxu0 0
    %567 = vmatpush1.bf16.msra.mxu0 %v506
    %568 = vmatprep.subr.bf16.mxu0 0
    %569 = vmatpush1.bf16.msra.mxu0 %v507
    %570 = vmatprep.subr.bf16.mxu0 0
    %571 = vmatpush1.bf16.msra.mxu0 %v508
    %572 = vmatprep.subr.bf16.mxu0 0
    %573 = vmatpush1.bf16.msra.mxu0 %v509
    %574 = vmatprep.mubr.bf16.mxu0 %v348
    %575 = vmatmul.mubr.bf16.gmra.mrb[0].mxu0 %v347
    %v576 = vpop.f32.mrb[0].mxu0
    %v577 = vadd.f32 0.0, %v576
    %v578 = vpop.f32.mrb[0].mxu0
    %v579 = vpop.f32.mrb[0].mxu0
    %v580 = vadd.f32 0.0, %v579
    %v581 = vpop.f32.mrb[0].mxu0
    %582 = vdwg.mxu0
    %583 = vmatprep.subr.bf16.mxu0 0
    %584 = vmatpush1.bf16.msra.mxu0 %v510
    %585 = vmatprep.subr.bf16.mxu0 0
    %586 = vmatpush1.bf16.msra.mxu0 %v511
    %587 = vmatprep.subr.bf16.mxu0 0
    %588 = vmatpush1.bf16.msra.mxu0 %v512
    %589 = vmatprep.subr.bf16.mxu0 0
    %590 = vmatpush1.bf16.msra.mxu0 %v513
    %591 = vmatprep.subr.bf16.mxu0 0
    %592 = vmatpush1.bf16.msra.mxu0 %v514
    %593 = vmatprep.subr.bf16.mxu0 0
    %594 = vmatpush1.bf16.msra.mxu0 %v515
    %595 = vmatprep.subr.bf16.mxu0 0
    %596 = vmatpush1.bf16.msra.mxu0 %v516
    %597 = vmatprep.subr.bf16.mxu0 0
    %598 = vmatpush1.bf16.msra.mxu0 %v517
    %599 = vmatprep.subr.bf16.mxu0 0
    %600 = vmatpush1.bf16.msra.mxu0 0
    %601 = vmatprep.subr.bf16.mxu0 0
    %602 = vmatpush1.bf16.msra.mxu0 0
    %603 = vmatprep.subr.bf16.mxu0 0
    %604 = vmatpush1.bf16.msra.mxu0 0
    %605 = vmatprep.subr.bf16.mxu0 0
    %606 = vmatpush1.bf16.msra.mxu0 0
    %607 = vmatprep.subr.bf16.mxu0 0
    %608 = vmatpush1.bf16.msra.mxu0 0
    %609 = vmatprep.subr.bf16.mxu0 0
    %610 = vmatpush1.bf16.msra.mxu0 0
    %611 = vmatprep.subr.bf16.mxu0 0
    %612 = vmatpush1.bf16.msra.mxu0 0
    %613 = vmatprep.subr.bf16.mxu0 0
    %614 = vmatpush1.bf16.msra.mxu0 0
    %615 = vmatprep.mubr.bf16.mxu0 0
    %616 = vmatmul.mubr.bf16.gmra.mrb[0].mxu0 %v349
    %v617 = vpop.f32.mrb[0].mxu0
    %v618 = vadd.f32 %v577, %v617
    %v619 = vpop.f32.mrb[0].mxu0
    %v620 = vpop.f32.mrb[0].mxu0
    %v621 = vadd.f32 %v580, %v620
    %v622 = vpop.f32.mrb[0].mxu0
    %623 = vdwg.mxu0
    %v624 = vadd.f32 %v335, %v618
    %v625 = vadd.f32 %v338, %v621
    %626 = vst [vmem:[%s6] sm:$0xff] %v624
    %627 = vst [vmem:[%s6 + $0x8] sm:$0xff] %v625
    %v628 = vlaneseq
    %v629 = vand.u32 %v628, 127
    %vm630 = vcmp.lt.s32.totalorder %v629, 8
    %v631 = vsel %vm630, %v624, -inf
    %v632 = vsel %vm630, %v625, -inf
    %633 = vmax.xlane.f32.xlu0 %v631
    %v634 = vpop.xlane.xlu0 %633
    %635 = vmax.xlane.f32.xlu0 %v632
    %v636 = vpop.xlane.xlu0 %635
    %v637 = vsub.f32 %v631, %v634
    %v638 = vsub.f32 %v632, %v636
    %v639 = vmul.f32 %v637, 1.442695
    %v640 = vpow.pop %v639
    %v641 = vmul.f32 %v638, 1.442695
    %v642 = vpow.pop %v641
    %v643 = vsel %vm630, %v640, 0.0
    %v644 = vsel %vm630, %v642, 0.0
    %645 = vadd.xlane.f32.xlu0 %v643
    %v646 = vpop.xlane.xlu0 %645
    %647 = vadd.xlane.f32.xlu0 %v644
    %v648 = vpop.xlane.xlu0 %647
    %v649 = vlog2.pop %v646
    %v650 = vmul.f32 %v649, 0.6931472
    %v651 = vlog2.pop %v648
    %v652 = vmul.f32 %v651, 0.6931472
    %v653 = vadd.f32 %v634, %v650
    %v654 = vadd.f32 %v636, %v652
    %v655 = vsub.f32 %v624, %v653
    %v656 = vsub.f32 %v625, %v654
    %v657 = vsel %vm630, %v655, 0.0
    %v658 = vsel %vm630, %v656, 0.0
    %659 = vst [vmem:[%s7] sm:$0xff] %v657
    %660 = vst [vmem:[%s7 + $0x8] sm:$0xff] %v658
  $region33: #{know_rgfd_forward.8} parent=0 // pred_fallthru
    _
  // Predicated region
  $region34: #{know_rgfd_forward.8} parent=0 // pred_check
    _
  $region35: #{know_rgfd_forward.8} parent=0 // pred_check_branch
    %662 = sbr.rel (0) target = $region37
  $region36: #{know_rgfd_forward.8} parent=0 // pred_region
    _
  $region37: #{know_rgfd_forward.8} parent=0 // pred_fallthru
    _
  // Predicated region
  $region38: #{know_rgfd_forward.8} parent=0 // pred_check
    _
  $region39: #{know_rgfd_forward.8} parent=0 // pred_check_branch
    %664 = sbr.rel (0) target = $region41
  $region40: #{know_rgfd_forward.8} parent=0 // pred_region
    _
  $region41: #{know_rgfd_forward.8} parent=0 // pred_fallthru
    _
  // Predicated region
  $region42: #{know_rgfd_forward.8} parent=0 // pred_check
    _
  $region43: #{know_rgfd_forward.8} parent=0 // pred_check_branch
    %666 = sbr.rel (0) target = $region45
  $region44: #{know_rgfd_forward.8} parent=0 // pred_region
    _
  $region45: #{know_rgfd_forward.8} parent=0 // pred_fallthru
    _
  // Predicated region
  $region46: #{know_rgfd_forward.8} parent=0 // pred_check
    _
  $region47: #{know_rgfd_forward.8} parent=0 // pred_check_branch
    %668 = sbr.rel (0) target = $region49
  $region48: #{know_rgfd_forward.8} parent=0 // pred_region
    _
  $region49: #{know_rgfd_forward.8} parent=0 // pred_fallthru
    _

// kernel: know_rgfd_forward.9
$region0: #{know_rgfd_forward.9}
  #allocation0 [shape = 'u32[]', space=smem, size = 0x4, offset = 0x4, fixed_abs, tag = 'smem constant byte address 0x4 - core index']
  #allocation1 [shape = 'u32[144,128]{1,0:T(1,128)}', space=vmem, size = 0x12000, scoped, tag = 'internal scratch']
  %s0 = inlined_call_operand.vmem [shape: bf16[16,384], index: 0, kind: input, shape index: {}]
  %s1 = inlined_call_operand.vmem [shape: bf16[16,128], index: 1, kind: input, shape index: {}]
  %s2 = inlined_call_operand.vmem [shape: bf16[384,128], index: 2, kind: input, shape index: {}]
  %s3 = inlined_call_operand.vmem [shape: bf16[128,128], index: 3, kind: input, shape index: {}]
  %s4 = inlined_call_operand.vmem [shape: f32[1,128], index: 4, kind: input, shape index: {}]
  %s5 = inlined_call_operand.vmem [shape: bf16[16,128], index: 5, kind: output, shape index: {}]
  %s6 = sld [smem:[#allocation0]]
  $region30: #{know_rgfd_forward.9} parent=0
    _
  %s8 = ssub.s32 1, %s6
  %s9 = scalar_select 0, %s8, %s6
  // Predicated region
  $region2: #{know_rgfd_forward.9} parent=0 // pred_check
    _
  $region3: #{know_rgfd_forward.9} parent=0 // pred_check_branch
    %11 = sbr.rel (0) target = $region5
  $region4: #{know_rgfd_forward.9} parent=0 // pred_region
    _
  $region5: #{know_rgfd_forward.9} parent=0 // pred_fallthru
    _
  // Predicated region
  $region6: #{know_rgfd_forward.9} parent=0 // pred_check
    _
  $region7: #{know_rgfd_forward.9} parent=0 // pred_check_branch
    %13 = sbr.rel (0) target = $region9
  $region8: #{know_rgfd_forward.9} parent=0 // pred_region
    _
  $region9: #{know_rgfd_forward.9} parent=0 // pred_fallthru
    _
  // Predicated region
  $region10: #{know_rgfd_forward.9} parent=0 // pred_check
    _
  $region11: #{know_rgfd_forward.9} parent=0 // pred_check_branch
    %15 = sbr.rel (0) target = $region13
  $region12: #{know_rgfd_forward.9} parent=0 // pred_region
    _
  $region13: #{know_rgfd_forward.9} parent=0 // pred_fallthru
    _
  // Predicated region
  $region14: #{know_rgfd_forward.9} parent=0 // pred_check
    _
  $region15: #{know_rgfd_forward.9} parent=0 // pred_check_branch
    %17 = sbr.rel (0) target = $region17
  $region16: #{know_rgfd_forward.9} parent=0 // pred_region
    _
  $region17: #{know_rgfd_forward.9} parent=0 // pred_fallthru
    _
  // Predicated region
  $region18: #{know_rgfd_forward.9} parent=0 // pred_check
    _
  $region19: #{know_rgfd_forward.9} parent=0 // pred_check_branch
    %19 = sbr.rel (0) target = $region21
  $region20: #{know_rgfd_forward.9} parent=0 // pred_region
    _
  $region21: #{know_rgfd_forward.9} parent=0 // pred_fallthru
    _
  %v21 = vld [vmem:[%s1] sm:$0xf]
  %v22 = vld [vmem:[%s1 + $0x4] sm:$0xf]
  %v23 = vld [vmem:[%s3] sm:$0xf]
  %v24 = vld [vmem:[%s3 + $0x4] sm:$0xf]
  %v25 = vld [vmem:[%s3 + $0x8] sm:$0xf]
  %v26 = vld [vmem:[%s3 + $0xc] sm:$0xf]
  %v27 = vld [vmem:[%s3 + $0x10] sm:$0xf]
  %v28 = vld [vmem:[%s3 + $0x14] sm:$0xf]
  %v29 = vld [vmem:[%s3 + $0x18] sm:$0xf]
  %v30 = vld [vmem:[%s3 + $0x1c] sm:$0xf]
  %v31 = vld [vmem:[%s3 + $0x20] sm:$0xf]
  %v32 = vld [vmem:[%s3 + $0x24] sm:$0xf]
  %v33 = vld [vmem:[%s3 + $0x28] sm:$0xf]
  %v34 = vld [vmem:[%s3 + $0x2c] sm:$0xf]
  %v35 = vld [vmem:[%s3 + $0x30] sm:$0xf]
  %v36 = vld [vmem:[%s3 + $0x34] sm:$0xf]
  %v37 = vld [vmem:[%s3 + $0x38] sm:$0xf]
  %v38 = vld [vmem:[%s3 + $0x3c] sm:$0xf]
  %v39 = vld [vmem:[%s4] sm:$0x1]
  %v41 = vlaneseq
  %v42 = vshrl.u32 %v41, 7
  %v43 = vsub.s32 0, %v42
  %v44 = vrot.slane %v39, %v43
  %v48 = vunpack.c.l.b16 %v21
  %v49 = vunpack.c.l.b16 %v22
  %v50 = vpack.c.b16 %v49, %v48
  %v68 = vunpack.c.l.b16 %v23
  %v69 = vunpack.c.l.b16 %v24
  %v70 = vunpack.c.l.b16 %v25
  %v71 = vunpack.c.l.b16 %v26
  %v72 = vunpack.c.l.b16 %v27
  %v73 = vunpack.c.l.b16 %v28
  %v74 = vunpack.c.l.b16 %v29
  %v75 = vunpack.c.l.b16 %v30
  %v76 = vunpack.c.l.b16 %v31
  %v77 = vunpack.c.l.b16 %v32
  %v78 = vunpack.c.l.b16 %v33
  %v79 = vunpack.c.l.b16 %v34
  %v80 = vunpack.c.l.b16 %v35
  %v81 = vunpack.c.l.b16 %v36
  %v82 = vunpack.c.l.b16 %v37
  %v83 = vunpack.c.l.b16 %v38
  %v84 = vpack.c.b16 %v69, %v68
  %v85 = vpack.c.b16 %v71, %v70
  %v86 = vpack.c.b16 %v73, %v72
  %v87 = vpack.c.b16 %v75, %v74
  %v88 = vpack.c.b16 %v77, %v76
  %v89 = vpack.c.b16 %v79, %v78
  %v90 = vpack.c.b16 %v81, %v80
  %v91 = vpack.c.b16 %v83, %v82
  %100 = vmatprep.subr.bf16.mxu0 0
  %101 = vmatpush1.bf16.msra.mxu0 %v84
  %102 = vmatprep.subr.bf16.mxu0 0
  %103 = vmatpush1.bf16.msra.mxu0 %v85
  %104 = vmatprep.subr.bf16.mxu0 0
  %105 = vmatpush1.bf16.msra.mxu0 %v86
  %106 = vmatprep.subr.bf16.mxu0 0
  %107 = vmatpush1.bf16.msra.mxu0 %v87
  %108 = vmatprep.subr.bf16.mxu0 0
  %109 = vmatpush1.bf16.msra.mxu0 %v88
  %110 = vmatprep.subr.bf16.mxu0 0
  %111 = vmatpush1.bf16.msra.mxu0 %v89
  %112 = vmatprep.subr.bf16.mxu0 0
  %113 = vmatpush1.bf16.msra.mxu0 %v90
  %114 = vmatprep.subr.bf16.mxu0 0
  %115 = vmatpush1.bf16.msra.mxu0 %v91
  %116 = vmatprep.subr.bf16.mxu0 0
  %117 = vmatpush1.bf16.msra.mxu0 0
  %118 = vmatprep.subr.bf16.mxu0 0
  %119 = vmatpush1.bf16.msra.mxu0 0
  %120 = vmatprep.subr.bf16.mxu0 0
  %121 = vmatpush1.bf16.msra.mxu0 0
  %122 = vmatprep.subr.bf16.mxu0 0
  %123 = vmatpush1.bf16.msra.mxu0 0
  %124 = vmatprep.subr.bf16.mxu0 0
  %125 = vmatpush1.bf16.msra.mxu0 0
  %126 = vmatprep.subr.bf16.mxu0 0
  %127 = vmatpush1.bf16.msra.mxu0 0
  %128 = vmatprep.subr.bf16.mxu0 0
  %129 = vmatpush1.bf16.msra.mxu0 0
  %130 = vmatprep.subr.bf16.mxu0 0
  %131 = vmatpush1.bf16.msra.mxu0 0
  %132 = vmatprep.mubr.bf16.mxu0 0
  %133 = vmatmul.mubr.bf16.gmra.mrb[0].mxu0 %v50
  %v134 = vpop.f32.mrb[0].mxu0
  %v135 = vadd.f32 %v44, %v134
  %v136 = vpop.f32.mrb[0].mxu0
  %v137 = vpop.f32.mrb[0].mxu0
  %v138 = vadd.f32 %v44, %v137
  %v139 = vpop.f32.mrb[0].mxu0
  %140 = vdwg.mxu0
  %v141 = vld [vmem:[%s0] sm:$0xff]
  %v142 = vld [vmem:[%s0 + $0x8] sm:$0xf]
  %v143 = vld [vmem:[%s0 + $0xc] sm:$0xff]
  %v144 = vld [vmem:[%s0 + $0x14] sm:$0xf]
  %v145 = vld [vmem:[%s2] sm:$0xf]
  %v146 = vld [vmem:[%s2 + $0x4] sm:$0xf]
  %v147 = vld [vmem:[%s2 + $0x8] sm:$0xf]
  %v148 = vld [vmem:[%s2 + $0xc] sm:$0xf]
  %v149 = vld [vmem:[%s2 + $0x10] sm:$0xf]
  %v150 = vld [vmem:[%s2 + $0x14] sm:$0xf]
  %v151 = vld [vmem:[%s2 + $0x18] sm:$0xf]
  %v152 = vld [vmem:[%s2 + $0x1c] sm:$0xf]
  %v153 = vld [vmem:[%s2 + $0x20] sm:$0xf]
  %v154 = vld [vmem:[%s2 + $0x24] sm:$0xf]
  %v155 = vld [vmem:[%s2 + $0x28] sm:$0xf]
  %v156 = vld [vmem:[%s2 + $0x2c] sm:$0xf]
  %v157 = vld [vmem:[%s2 + $0x30] sm:$0xf]
  %v158 = vld [vmem:[%s2 + $0x34] sm:$0xf]
  %v159 = vld [vmem:[%s2 + $0x38] sm:$0xf]
  %v160 = vld [vmem:[%s2 + $0x3c] sm:$0xf]
  %v161 = vld [vmem:[%s2 + $0x40] sm:$0xf]
  %v162 = vld [vmem:[%s2 + $0x44] sm:$0xf]
  %v163 = vld [vmem:[%s2 + $0x48] sm:$0xf]
  %v164 = vld [vmem:[%s2 + $0x4c] sm:$0xf]
  %v165 = vld [vmem:[%s2 + $0x50] sm:$0xf]
  %v166 = vld [vmem:[%s2 + $0x54] sm:$0xf]
  %v167 = vld [vmem:[%s2 + $0x58] sm:$0xf]
  %v168 = vld [vmem:[%s2 + $0x5c] sm:$0xf]
  %v169 = vld [vmem:[%s2 + $0x60] sm:$0xf]
  %v170 = vld [vmem:[%s2 + $0x64] sm:$0xf]
  %v171 = vld [vmem:[%s2 + $0x68] sm:$0xf]
  %v172 = vld [vmem:[%s2 + $0x6c] sm:$0xf]
  %v173 = vld [vmem:[%s2 + $0x70] sm:$0xf]
  %v174 = vld [vmem:[%s2 + $0x74] sm:$0xf]
  %v175 = vld [vmem:[%s2 + $0x78] sm:$0xf]
  %v176 = vld [vmem:[%s2 + $0x7c] sm:$0xf]
  %v177 = vld [vmem:[%s2 + $0x80] sm:$0xf]
  %v178 = vld [vmem:[%s2 + $0x84] sm:$0xf]
  %v179 = vld [vmem:[%s2 + $0x88] sm:$0xf]
  %v180 = vld [vmem:[%s2 + $0x8c] sm:$0xf]
  %v181 = vld [vmem:[%s2 + $0x90] sm:$0xf]
  %v182 = vld [vmem:[%s2 + $0x94] sm:$0xf]
  %v183 = vld [vmem:[%s2 + $0x98] sm:$0xf]
  %v184 = vld [vmem:[%s2 + $0x9c] sm:$0xf]
  %v185 = vld [vmem:[%s2 + $0xa0] sm:$0xf]
  %v186 = vld [vmem:[%s2 + $0xa4] sm:$0xf]
  %v187 = vld [vmem:[%s2 + $0xa8] sm:$0xf]
  %v188 = vld [vmem:[%s2 + $0xac] sm:$0xf]
  %v189 = vld [vmem:[%s2 + $0xb0] sm:$0xf]
  %v190 = vld [vmem:[%s2 + $0xb4] sm:$0xf]
  %v191 = vld [vmem:[%s2 + $0xb8] sm:$0xf]
  %v192 = vld [vmem:[%s2 + $0xbc] sm:$0xf]
  %v197 = vunpack.c.l.b16 %v141
  %v198 = vunpack.c.h.b16 %v141
  %v199 = vunpack.c.l.b16 %v142
  %v200 = vunpack.c.l.b16 %v143
  %v201 = vunpack.c.h.b16 %v143
  %v202 = vunpack.c.l.b16 %v144
  %v203 = vpack.c.b16 %v200, %v197
  %v204 = vpack.c.b16 %v201, %v198
  %v205 = vpack.c.b16 %v202, %v199
  %v257 = vunpack.c.l.b16 %v145
  %v258 = vunpack.c.l.b16 %v146
  %v259 = vunpack.c.l.b16 %v147
  %v260 = vunpack.c.l.b16 %v148
  %v261 = vunpack.c.l.b16 %v149
  %v262 = vunpack.c.l.b16 %v150
  %v263 = vunpack.c.l.b16 %v151
  %v264 = vunpack.c.l.b16 %v152
  %v265 = vunpack.c.l.b16 %v153
  %v266 = vunpack.c.l.b16 %v154
  %v267 = vunpack.c.l.b16 %v155
  %v268 = vunpack.c.l.b16 %v156
  %v269 = vunpack.c.l.b16 %v157
  %v270 = vunpack.c.l.b16 %v158
  %v271 = vunpack.c.l.b16 %v159
  %v272 = vunpack.c.l.b16 %v160
  %v273 = vunpack.c.l.b16 %v161
  %v274 = vunpack.c.l.b16 %v162
  %v275 = vunpack.c.l.b16 %v163
  %v276 = vunpack.c.l.b16 %v164
  %v277 = vunpack.c.l.b16 %v165
  %v278 = vunpack.c.l.b16 %v166
  %v279 = vunpack.c.l.b16 %v167
  %v280 = vunpack.c.l.b16 %v168
  %v281 = vunpack.c.l.b16 %v169
  %v282 = vunpack.c.l.b16 %v170
  %v283 = vunpack.c.l.b16 %v171
  %v284 = vunpack.c.l.b16 %v172
  %v285 = vunpack.c.l.b16 %v173
  %v286 = vunpack.c.l.b16 %v174
  %v287 = vunpack.c.l.b16 %v175
  %v288 = vunpack.c.l.b16 %v176
  %v289 = vunpack.c.l.b16 %v177
  %v290 = vunpack.c.l.b16 %v178
  %v291 = vunpack.c.l.b16 %v179
  %v292 = vunpack.c.l.b16 %v180
  %v293 = vunpack.c.l.b16 %v181
  %v294 = vunpack.c.l.b16 %v182
  %v295 = vunpack.c.l.b16 %v183
  %v296 = vunpack.c.l.b16 %v184
  %v297 = vunpack.c.l.b16 %v185
  %v298 = vunpack.c.l.b16 %v186
  %v299 = vunpack.c.l.b16 %v187
  %v300 = vunpack.c.l.b16 %v188
  %v301 = vunpack.c.l.b16 %v189
  %v302 = vunpack.c.l.b16 %v190
  %v303 = vunpack.c.l.b16 %v191
  %v304 = vunpack.c.l.b16 %v192
  %v305 = vpack.c.b16 %v258, %v257
  %v306 = vpack.c.b16 %v260, %v259
  %v307 = vpack.c.b16 %v262, %v261
  %v308 = vpack.c.b16 %v264, %v263
  %v309 = vpack.c.b16 %v266, %v265
  %v310 = vpack.c.b16 %v268, %v267
  %v311 = vpack.c.b16 %v270, %v269
  %v312 = vpack.c.b16 %v272, %v271
  %v313 = vpack.c.b16 %v274, %v273
  %v314 = vpack.c.b16 %v276, %v275
  %v315 = vpack.c.b16 %v278, %v277
  %v316 = vpack.c.b16 %v280, %v279
  %v317 = vpack.c.b16 %v282, %v281
  %v318 = vpack.c.b16 %v284, %v283
  %v319 = vpack.c.b16 %v286, %v285
  %v320 = vpack.c.b16 %v288, %v287
  %v321 = vpack.c.b16 %v290, %v289
  %v322 = vpack.c.b16 %v292, %v291
  %v323 = vpack.c.b16 %v294, %v293
  %v324 = vpack.c.b16 %v296, %v295
  %v325 = vpack.c.b16 %v298, %v297
  %v326 = vpack.c.b16 %v300, %v299
  %v327 = vpack.c.b16 %v302, %v301
  %v328 = vpack.c.b16 %v304, %v303
  %353 = vmatprep.subr.bf16.mxu0 0
  %354 = vmatpush1.bf16.msra.mxu0 %v305
  %355 = vmatprep.subr.bf16.mxu0 0
  %356 = vmatpush1.bf16.msra.mxu0 %v306
  %357 = vmatprep.subr.bf16.mxu0 0
  %358 = vmatpush1.bf16.msra.mxu0 %v307
  %359 = vmatprep.subr.bf16.mxu0 0
  %360 = vmatpush1.bf16.msra.mxu0 %v308
  %361 = vmatprep.subr.bf16.mxu0 0
  %362 = vmatpush1.bf16.msra.mxu0 %v309
  %363 = vmatprep.subr.bf16.mxu0 0
  %364 = vmatpush1.bf16.msra.mxu0 %v310
  %365 = vmatprep.subr.bf16.mxu0 0
  %366 = vmatpush1.bf16.msra.mxu0 %v311
  %367 = vmatprep.subr.bf16.mxu0 0
  %368 = vmatpush1.bf16.msra.mxu0 %v312
  %369 = vmatprep.subr.bf16.mxu0 0
  %370 = vmatpush1.bf16.msra.mxu0 %v313
  %371 = vmatprep.subr.bf16.mxu0 0
  %372 = vmatpush1.bf16.msra.mxu0 %v314
  %373 = vmatprep.subr.bf16.mxu0 0
  %374 = vmatpush1.bf16.msra.mxu0 %v315
  %375 = vmatprep.subr.bf16.mxu0 0
  %376 = vmatpush1.bf16.msra.mxu0 %v316
  %377 = vmatprep.subr.bf16.mxu0 0
  %378 = vmatpush1.bf16.msra.mxu0 %v317
  %379 = vmatprep.subr.bf16.mxu0 0
  %380 = vmatpush1.bf16.msra.mxu0 %v318
  %381 = vmatprep.subr.bf16.mxu0 0
  %382 = vmatpush1.bf16.msra.mxu0 %v319
  %383 = vmatprep.subr.bf16.mxu0 0
  %384 = vmatpush1.bf16.msra.mxu0 %v320
  %385 = vmatprep.mubr.bf16.mxu0 %v204
  %386 = vmatmul.mubr.bf16.gmra.mrb[0].mxu0 %v203
  %v387 = vpop.f32.mrb[0].mxu0
  %v388 = vadd.f32 0.0, %v387
  %v389 = vpop.f32.mrb[0].mxu0
  %v390 = vpop.f32.mrb[0].mxu0
  %v391 = vadd.f32 0.0, %v390
  %v392 = vpop.f32.mrb[0].mxu0
  %393 = vdwg.mxu0
  %394 = vmatprep.subr.bf16.mxu0 0
  %395 = vmatpush1.bf16.msra.mxu0 %v321
  %396 = vmatprep.subr.bf16.mxu0 0
  %397 = vmatpush1.bf16.msra.mxu0 %v322
  %398 = vmatprep.subr.bf16.mxu0 0
  %399 = vmatpush1.bf16.msra.mxu0 %v323
  %400 = vmatprep.subr.bf16.mxu0 0
  %401 = vmatpush1.bf16.msra.mxu0 %v324
  %402 = vmatprep.subr.bf16.mxu0 0
  %403 = vmatpush1.bf16.msra.mxu0 %v325
  %404 = vmatprep.subr.bf16.mxu0 0
  %405 = vmatpush1.bf16.msra.mxu0 %v326
  %406 = vmatprep.subr.bf16.mxu0 0
  %407 = vmatpush1.bf16.msra.mxu0 %v327
  %408 = vmatprep.subr.bf16.mxu0 0
  %409 = vmatpush1.bf16.msra.mxu0 %v328
  %410 = vmatprep.subr.bf16.mxu0 0
  %411 = vmatpush1.bf16.msra.mxu0 0
  %412 = vmatprep.subr.bf16.mxu0 0
  %413 = vmatpush1.bf16.msra.mxu0 0
  %414 = vmatprep.subr.bf16.mxu0 0
  %415 = vmatpush1.bf16.msra.mxu0 0
  %416 = vmatprep.subr.bf16.mxu0 0
  %417 = vmatpush1.bf16.msra.mxu0 0
  %418 = vmatprep.subr.bf16.mxu0 0
  %419 = vmatpush1.bf16.msra.mxu0 0
  %420 = vmatprep.subr.bf16.mxu0 0
  %421 = vmatpush1.bf16.msra.mxu0 0
  %422 = vmatprep.subr.bf16.mxu0 0
  %423 = vmatpush1.bf16.msra.mxu0 0
  %424 = vmatprep.subr.bf16.mxu0 0
  %425 = vmatpush1.bf16.msra.mxu0 0
  %426 = vmatprep.mubr.bf16.mxu0 0
  %427 = vmatmul.mubr.bf16.gmra.mrb[0].mxu0 %v205
  %v428 = vpop.f32.mrb[0].mxu0
  %v429 = vadd.f32 %v388, %v428
  %v430 = vpop.f32.mrb[0].mxu0
  %v431 = vpop.f32.mrb[0].mxu0
  %v432 = vadd.f32 %v391, %v431
  %v433 = vpop.f32.mrb[0].mxu0
  %434 = vdwg.mxu0
  %v435 = vadd.f32 %v135, %v429
  %v436 = vadd.f32 %v138, %v432
  %v437 = vmax.f32 %v435, 0.0
  %v438 = vmax.f32 %v436, 0.0
  %v439 = vpack.c.bf16 %v438, %v437
  %v441 = vunpack.c.l.b16 %v439
  %v442 = vunpack.c.h.b16 %v439
  %v443 = vpack.c.b16 %v441, %v441
  %v444 = vpack.c.b16 %v442, %v442
  %447 = vst [vmem:[%s5] sm:$0xf] %v443
  %448 = vst [vmem:[%s5 + $0x4] sm:$0xf] %v444
  // Predicated region
  $region22: #{know_rgfd_forward.9} parent=0 // pred_check
    _
  $region23: #{know_rgfd_forward.9} parent=0 // pred_check_branch
    %450 = sbr.rel (0) target = $region25
  $region24: #{know_rgfd_forward.9} parent=0 // pred_region
    _
  $region25: #{know_rgfd_forward.9} parent=0 // pred_fallthru
    _
  // Predicated region
  $region26: #{know_rgfd_forward.9} parent=0 // pred_check
    _
  $region27: #{know_rgfd_forward.9} parent=0 // pred_check_branch
    %452 = sbr.rel (0) target = $region29
  $region28: #{know_rgfd_forward.9} parent=0 // pred_region
    _
  $region29: #{know_rgfd_forward.9} parent=0 // pred_fallthru
    _

// kernel: know_rgfd_forward.10
$region0: #{know_rgfd_forward.10}
  #allocation0 [shape = 'u32[]', space=smem, size = 0x4, offset = 0x4, fixed_abs, tag = 'smem constant byte address 0x4 - core index']
  #allocation1 [shape = 'u32[144,128]{1,0:T(1,128)}', space=vmem, size = 0x12000, scoped, tag = 'internal scratch']
  #allocation2 [shape = 'f32[16,384]{1,0:T(8,128)}', space=vmem, size = 0x6000, scoped, tag = 'scratch operand']
  %s0 = inlined_call_operand.vmem [shape: bf16[3,16,16], index: 0, kind: input, shape index: {}]
  %s1 = inlined_call_operand.vmem [shape: bf16[16,128], index: 1, kind: input, shape index: {}, may-alias: {1,2}]
  %s2 = inlined_call_operand.vmem [shape: bf16[16,128], index: 2, kind: input, shape index: {}, may-alias: {1,2}]
  %s3 = inlined_call_operand.vmem [shape: bf16[384,128], index: 3, kind: input, shape index: {}]
  %s4 = inlined_call_operand.vmem [shape: bf16[128,128], index: 4, kind: input, shape index: {}]
  %s5 = inlined_call_operand.vmem [shape: f32[1,128], index: 5, kind: input, shape index: {}]
  %s6 = inlined_call_operand.vmem [shape: bf16[16,128], index: 6, kind: output, shape index: {}]
  %s7 = sld [smem:[#allocation0]]
  $region42: #{know_rgfd_forward.10} parent=0
    _
  %s9 = ssub.s32 1, %s7
  %s10 = scalar_select 0, %s9, %s7
  // Predicated region
  $region2: #{know_rgfd_forward.10} parent=0 // pred_check
    _
  $region3: #{know_rgfd_forward.10} parent=0 // pred_check_branch
    %12 = sbr.rel (0) target = $region5
  $region4: #{know_rgfd_forward.10} parent=0 // pred_region
    _
  $region5: #{know_rgfd_forward.10} parent=0 // pred_fallthru
    _
  // Predicated region
  $region6: #{know_rgfd_forward.10} parent=0 // pred_check
    _
  $region7: #{know_rgfd_forward.10} parent=0 // pred_check_branch
    %14 = sbr.rel (0) target = $region9
  $region8: #{know_rgfd_forward.10} parent=0 // pred_region
    _
  $region9: #{know_rgfd_forward.10} parent=0 // pred_fallthru
    _
  // Predicated region
  $region10: #{know_rgfd_forward.10} parent=0 // pred_check
    _
  $region11: #{know_rgfd_forward.10} parent=0 // pred_check_branch
    %16 = sbr.rel (0) target = $region13
  $region12: #{know_rgfd_forward.10} parent=0 // pred_region
    _
  $region13: #{know_rgfd_forward.10} parent=0 // pred_fallthru
    _
  // Predicated region
  $region14: #{know_rgfd_forward.10} parent=0 // pred_check
    _
  $region15: #{know_rgfd_forward.10} parent=0 // pred_check_branch
    %18 = sbr.rel (0) target = $region17
  $region16: #{know_rgfd_forward.10} parent=0 // pred_region
    _
  $region17: #{know_rgfd_forward.10} parent=0 // pred_fallthru
    _
  // Predicated region
  $region18: #{know_rgfd_forward.10} parent=0 // pred_check
    _
  $region19: #{know_rgfd_forward.10} parent=0 // pred_check_branch
    %20 = sbr.rel (0) target = $region21
  $region20: #{know_rgfd_forward.10} parent=0 // pred_region
    _
  $region21: #{know_rgfd_forward.10} parent=0 // pred_fallthru
    _
  // Predicated region
  $region22: #{know_rgfd_forward.10} parent=0 // pred_check
    _
  $region23: #{know_rgfd_forward.10} parent=0 // pred_check_branch
    %22 = sbr.rel (0) target = $region25
  $region24: #{know_rgfd_forward.10} parent=0 // pred_region
    _
  $region25: #{know_rgfd_forward.10} parent=0 // pred_fallthru
    _
  %p24 = scmp.eq.s32.totalorder 0, 0
  // Predicated region
  $region26: #{know_rgfd_forward.10} parent=0 // pred_check
    %p25 = pneg %p24
  $region27: #{know_rgfd_forward.10} parent=0 // pred_check_branch
    %27 = sbr.rel (%p25) target = $region29
  $region28: #{know_rgfd_forward.10} parent=0 // pred_region
    %28 = vst [vmem:[#allocation2] sm:$0xff] 0.0
    %29 = vst [vmem:[#allocation2 + $0x8] sm:$0xff] 0.0
    %30 = vst [vmem:[#allocation2 + $0x10] sm:$0xff] 0.0
    %31 = vst [vmem:[#allocation2 + $0x18] sm:$0xff] 0.0
    %32 = vst [vmem:[#allocation2 + $0x20] sm:$0xff] 0.0
    %33 = vst [vmem:[#allocation2 + $0x28] sm:$0xff] 0.0
  $region29: #{know_rgfd_forward.10} parent=0 // pred_fallthru
    _
  %v34 = vld [vmem:[%s1] sm:$0xf]
  %v35 = vld [vmem:[%s1 + $0x4] sm:$0xf]
  %v36 = vld [vmem:[#allocation2] sm:$0xff]
  %v37 = vld [vmem:[#allocation2 + $0x18] sm:$0xff]
  %v38 = vld [vmem:[%s0] sm:$0xf]
  %v39 = vld [vmem:[%s0 + $0x4] sm:$0xf]
  %v42 = vunpack.c.l.b16 %v38
  %v43 = vunpack.c.l.b16 %v39
  %v44 = vpack.c.b16 %v43, %v42
  %v47 = vunpack.c.l.b16 %v34
  %v48 = vunpack.c.l.b16 %v35
  %v49 = vpack.c.b16 %v48, %v47
  %vm51 = vcmask 130048
  %v53 = vsel %vm51, %v44, 0
  %55 = vmatprep.subr.bf16.mxu0 0
  %56 = vmatpush1.bf16.msra.mxu0 %v49
  %57 = vmatprep.subr.bf16.mxu0 0
  %58 = vmatpush1.bf16.msra.mxu0 0
  %59 = vmatprep.subr.bf16.mxu0 0
  %60 = vmatpush1.bf16.msra.mxu0 0
  %61 = vmatprep.subr.bf16.mxu0 0
  %62 = vmatpush1.bf16.msra.mxu0 0
  %63 = vmatprep.subr.bf16.mxu0 0
  %64 = vmatpush1.bf16.msra.mxu0 0
  %65 = vmatprep.subr.bf16.mxu0 0
  %66 = vmatpush1.bf16.msra.mxu0 0
  %67 = vmatprep.subr.bf16.mxu0 0
  %68 = vmatpush1.bf16.msra.mxu0 0
  %69 = vmatprep.subr.bf16.mxu0 0
  %70 = vmatpush1.bf16.msra.mxu0 0
  %71 = vmatprep.subr.bf16.mxu0 0
  %72 = vmatpush1.bf16.msra.mxu0 0
  %73 = vmatprep.subr.bf16.mxu0 0
  %74 = vmatpush1.bf16.msra.mxu0 0
  %75 = vmatprep.subr.bf16.mxu0 0
  %76 = vmatpush1.bf16.msra.mxu0 0
  %77 = vmatprep.subr.bf16.mxu0 0
  %78 = vmatpush1.bf16.msra.mxu0 0
  %79 = vmatprep.subr.bf16.mxu0 0
  %80 = vmatpush1.bf16.msra.mxu0 0
  %81 = vmatprep.subr.bf16.mxu0 0
  %82 = vmatpush1.bf16.msra.mxu0 0
  %83 = vmatprep.subr.bf16.mxu0 0
  %84 = vmatpush1.bf16.msra.mxu0 0
  %85 = vmatprep.subr.bf16.mxu0 0
  %86 = vmatpush1.bf16.msra.mxu0 0
  %87 = vmatprep.mubr.bf16.mxu0 0
  %88 = vmatmul.mubr.bf16.gmra.mrb[0].mxu0 %v53
  %v89 = vpop.f32.mrb[0].mxu0
  %v90 = vadd.f32 0.0, %v89
  %v91 = vpop.f32.mrb[0].mxu0
  %v92 = vpop.f32.mrb[0].mxu0
  %v93 = vadd.f32 0.0, %v92
  %v94 = vpop.f32.mrb[0].mxu0
  %95 = vdwg.mxu0
  %v96 = vadd.f32 %v36, %v90
  %v97 = vadd.f32 %v37, %v93
  %98 = vst [vmem:[#allocation2] sm:$0xff] %v96
  %99 = vst [vmem:[#allocation2 + $0x18] sm:$0xff] %v97
  %v100 = vld [vmem:[#allocation2 + $0x8] sm:$0xff]
  %v101 = vld [vmem:[#allocation2 + $0x20] sm:$0xff]
  %s102 = scalar_lea.vmem %s0, 8
  %v103 = vld [vmem:[%s102] sm:$0xf]
  %v104 = vld [vmem:[%s102 + $0x4] sm:$0xf]
  %v107 = vunpack.c.l.b16 %v103
  %v108 = vunpack.c.l.b16 %v104
  %v109 = vpack.c.b16 %v108, %v107
  %v111 = vsel %vm51, %v109, 0
  %113 = vmatprep.subr.bf16.mxu0 0
  %114 = vmatpush1.bf16.msra.mxu0 %v49
  %115 = vmatprep.subr.bf16.mxu0 0
  %116 = vmatpush1.bf16.msra.mxu0 0
  %117 = vmatprep.subr.bf16.mxu0 0
  %118 = vmatpush1.bf16.msra.mxu0 0
  %119 = vmatprep.subr.bf16.mxu0 0
  %120 = vmatpush1.bf16.msra.mxu0 0
  %121 = vmatprep.subr.bf16.mxu0 0
  %122 = vmatpush1.bf16.msra.mxu0 0
  %123 = vmatprep.subr.bf16.mxu0 0
  %124 = vmatpush1.bf16.msra.mxu0 0
  %125 = vmatprep.subr.bf16.mxu0 0
  %126 = vmatpush1.bf16.msra.mxu0 0
  %127 = vmatprep.subr.bf16.mxu0 0
  %128 = vmatpush1.bf16.msra.mxu0 0
  %129 = vmatprep.subr.bf16.mxu0 0
  %130 = vmatpush1.bf16.msra.mxu0 0
  %131 = vmatprep.subr.bf16.mxu0 0
  %132 = vmatpush1.bf16.msra.mxu0 0
  %133 = vmatprep.subr.bf16.mxu0 0
  %134 = vmatpush1.bf16.msra.mxu0 0
  %135 = vmatprep.subr.bf16.mxu0 0
  %136 = vmatpush1.bf16.msra.mxu0 0
  %137 = vmatprep.subr.bf16.mxu0 0
  %138 = vmatpush1.bf16.msra.mxu0 0
  %139 = vmatprep.subr.bf16.mxu0 0
  %140 = vmatpush1.bf16.msra.mxu0 0
  %141 = vmatprep.subr.bf16.mxu0 0
  %142 = vmatpush1.bf16.msra.mxu0 0
  %143 = vmatprep.subr.bf16.mxu0 0
  %144 = vmatpush1.bf16.msra.mxu0 0
  %145 = vmatprep.mubr.bf16.mxu0 0
  %146 = vmatmul.mubr.bf16.gmra.mrb[0].mxu0 %v111
  %v147 = vpop.f32.mrb[0].mxu0
  %v148 = vadd.f32 0.0, %v147
  %v149 = vpop.f32.mrb[0].mxu0
  %v150 = vpop.f32.mrb[0].mxu0
  %v151 = vadd.f32 0.0, %v150
  %v152 = vpop.f32.mrb[0].mxu0
  %153 = vdwg.mxu0
  %v154 = vadd.f32 %v100, %v148
  %v155 = vadd.f32 %v101, %v151
  %156 = vst [vmem:[#allocation2 + $0x8] sm:$0xff] %v154
  %157 = vst [vmem:[#allocation2 + $0x20] sm:$0xff] %v155
  %v158 = vld [vmem:[#allocation2 + $0x10] sm:$0xff]
  %v159 = vld [vmem:[#allocation2 + $0x28] sm:$0xff]
  %s160 = scalar_lea.vmem %s0, 16
  %v161 = vld [vmem:[%s160] sm:$0xf]
  %v162 = vld [vmem:[%s160 + $0x4] sm:$0xf]
  %v165 = vunpack.c.l.b16 %v161
  %v166 = vunpack.c.l.b16 %v162
  %v167 = vpack.c.b16 %v166, %v165
  %v169 = vsel %vm51, %v167, 0
  %171 = vmatprep.subr.bf16.mxu0 0
  %172 = vmatpush1.bf16.msra.mxu0 %v49
  %173 = vmatprep.subr.bf16.mxu0 0
  %174 = vmatpush1.bf16.msra.mxu0 0
  %175 = vmatprep.subr.bf16.mxu0 0
  %176 = vmatpush1.bf16.msra.mxu0 0
  %177 = vmatprep.subr.bf16.mxu0 0
  %178 = vmatpush1.bf16.msra.mxu0 0
  %179 = vmatprep.subr.bf16.mxu0 0
  %180 = vmatpush1.bf16.msra.mxu0 0
  %181 = vmatprep.subr.bf16.mxu0 0
  %182 = vmatpush1.bf16.msra.mxu0 0
  %183 = vmatprep.subr.bf16.mxu0 0
  %184 = vmatpush1.bf16.msra.mxu0 0
  %185 = vmatprep.subr.bf16.mxu0 0
  %186 = vmatpush1.bf16.msra.mxu0 0
  %187 = vmatprep.subr.bf16.mxu0 0
  %188 = vmatpush1.bf16.msra.mxu0 0
  %189 = vmatprep.subr.bf16.mxu0 0
  %190 = vmatpush1.bf16.msra.mxu0 0
  %191 = vmatprep.subr.bf16.mxu0 0
  %192 = vmatpush1.bf16.msra.mxu0 0
  %193 = vmatprep.subr.bf16.mxu0 0
  %194 = vmatpush1.bf16.msra.mxu0 0
  %195 = vmatprep.subr.bf16.mxu0 0
  %196 = vmatpush1.bf16.msra.mxu0 0
  %197 = vmatprep.subr.bf16.mxu0 0
  %198 = vmatpush1.bf16.msra.mxu0 0
  %199 = vmatprep.subr.bf16.mxu0 0
  %200 = vmatpush1.bf16.msra.mxu0 0
  %201 = vmatprep.subr.bf16.mxu0 0
  %202 = vmatpush1.bf16.msra.mxu0 0
  %203 = vmatprep.mubr.bf16.mxu0 0
  %204 = vmatmul.mubr.bf16.gmra.mrb[0].mxu0 %v169
  %v205 = vpop.f32.mrb[0].mxu0
  %v206 = vadd.f32 0.0, %v205
  %v207 = vpop.f32.mrb[0].mxu0
  %v208 = vpop.f32.mrb[0].mxu0
  %v209 = vadd.f32 0.0, %v208
  %v210 = vpop.f32.mrb[0].mxu0
  %211 = vdwg.mxu0
  %v212 = vadd.f32 %v158, %v206
  %v213 = vadd.f32 %v159, %v209
  %214 = vst [vmem:[#allocation2 + $0x10] sm:$0xff] %v212
  %215 = vst [vmem:[#allocation2 + $0x28] sm:$0xff] %v213
  // Predicated region
  $region30: #{know_rgfd_forward.10} parent=0 // pred_check
    %p216 = pneg %p24
  $region31: #{know_rgfd_forward.10} parent=0 // pred_check_branch
    %218 = sbr.rel (%p216) target = $region33
  $region32: #{know_rgfd_forward.10} parent=0 // pred_region
    %v219 = vld [vmem:[%s2] sm:$0xf]
    %v220 = vld [vmem:[%s2 + $0x4] sm:$0xf]
    %v221 = vld [vmem:[%s4] sm:$0xf]
    %v222 = vld [vmem:[%s4 + $0x4] sm:$0xf]
    %v223 = vld [vmem:[%s4 + $0x8] sm:$0xf]
    %v224 = vld [vmem:[%s4 + $0xc] sm:$0xf]
    %v225 = vld [vmem:[%s4 + $0x10] sm:$0xf]
    %v226 = vld [vmem:[%s4 + $0x14] sm:$0xf]
    %v227 = vld [vmem:[%s4 + $0x18] sm:$0xf]
    %v228 = vld [vmem:[%s4 + $0x1c] sm:$0xf]
    %v229 = vld [vmem:[%s4 + $0x20] sm:$0xf]
    %v230 = vld [vmem:[%s4 + $0x24] sm:$0xf]
    %v231 = vld [vmem:[%s4 + $0x28] sm:$0xf]
    %v232 = vld [vmem:[%s4 + $0x2c] sm:$0xf]
    %v233 = vld [vmem:[%s4 + $0x30] sm:$0xf]
    %v234 = vld [vmem:[%s4 + $0x34] sm:$0xf]
    %v235 = vld [vmem:[%s4 + $0x38] sm:$0xf]
    %v236 = vld [vmem:[%s4 + $0x3c] sm:$0xf]
    %v237 = vld [vmem:[%s5] sm:$0x1]
    %v239 = vlaneseq
    %v240 = vshrl.u32 %v239, 7
    %v241 = vsub.s32 0, %v240
    %v242 = vrot.slane %v237, %v241
    %v246 = vunpack.c.l.b16 %v219
    %v247 = vunpack.c.l.b16 %v220
    %v248 = vpack.c.b16 %v247, %v246
    %v266 = vunpack.c.l.b16 %v221
    %v267 = vunpack.c.l.b16 %v222
    %v268 = vunpack.c.l.b16 %v223
    %v269 = vunpack.c.l.b16 %v224
    %v270 = vunpack.c.l.b16 %v225
    %v271 = vunpack.c.l.b16 %v226
    %v272 = vunpack.c.l.b16 %v227
    %v273 = vunpack.c.l.b16 %v228
    %v274 = vunpack.c.l.b16 %v229
    %v275 = vunpack.c.l.b16 %v230
    %v276 = vunpack.c.l.b16 %v231
    %v277 = vunpack.c.l.b16 %v232
    %v278 = vunpack.c.l.b16 %v233
    %v279 = vunpack.c.l.b16 %v234
    %v280 = vunpack.c.l.b16 %v235
    %v281 = vunpack.c.l.b16 %v236
    %v282 = vpack.c.b16 %v267, %v266
    %v283 = vpack.c.b16 %v269, %v268
    %v284 = vpack.c.b16 %v271, %v270
    %v285 = vpack.c.b16 %v273, %v272
    %v286 = vpack.c.b16 %v275, %v274
    %v287 = vpack.c.b16 %v277, %v276
    %v288 = vpack.c.b16 %v279, %v278
    %v289 = vpack.c.b16 %v281, %v280
    %298 = vmatprep.subr.bf16.mxu0 0
    %299 = vmatpush1.bf16.msra.mxu0 %v282
    %300 = vmatprep.subr.bf16.mxu0 0
    %301 = vmatpush1.bf16.msra.mxu0 %v283
    %302 = vmatprep.subr.bf16.mxu0 0
    %303 = vmatpush1.bf16.msra.mxu0 %v284
    %304 = vmatprep.subr.bf16.mxu0 0
    %305 = vmatpush1.bf16.msra.mxu0 %v285
    %306 = vmatprep.subr.bf16.mxu0 0
    %307 = vmatpush1.bf16.msra.mxu0 %v286
    %308 = vmatprep.subr.bf16.mxu0 0
    %309 = vmatpush1.bf16.msra.mxu0 %v287
    %310 = vmatprep.subr.bf16.mxu0 0
    %311 = vmatpush1.bf16.msra.mxu0 %v288
    %312 = vmatprep.subr.bf16.mxu0 0
    %313 = vmatpush1.bf16.msra.mxu0 %v289
    %314 = vmatprep.subr.bf16.mxu0 0
    %315 = vmatpush1.bf16.msra.mxu0 0
    %316 = vmatprep.subr.bf16.mxu0 0
    %317 = vmatpush1.bf16.msra.mxu0 0
    %318 = vmatprep.subr.bf16.mxu0 0
    %319 = vmatpush1.bf16.msra.mxu0 0
    %320 = vmatprep.subr.bf16.mxu0 0
    %321 = vmatpush1.bf16.msra.mxu0 0
    %322 = vmatprep.subr.bf16.mxu0 0
    %323 = vmatpush1.bf16.msra.mxu0 0
    %324 = vmatprep.subr.bf16.mxu0 0
    %325 = vmatpush1.bf16.msra.mxu0 0
    %326 = vmatprep.subr.bf16.mxu0 0
    %327 = vmatpush1.bf16.msra.mxu0 0
    %328 = vmatprep.subr.bf16.mxu0 0
    %329 = vmatpush1.bf16.msra.mxu0 0
    %330 = vmatprep.mubr.bf16.mxu0 0
    %331 = vmatmul.mubr.bf16.gmra.mrb[0].mxu0 %v248
    %v332 = vpop.f32.mrb[0].mxu0
    %v333 = vadd.f32 %v242, %v332
    %v334 = vpop.f32.mrb[0].mxu0
    %v335 = vpop.f32.mrb[0].mxu0
    %v336 = vadd.f32 %v242, %v335
    %v337 = vpop.f32.mrb[0].mxu0
    %338 = vdwg.mxu0
    %v339 = vld [vmem:[#allocation2] sm:$0xff]
    %v340 = vld [vmem:[#allocation2 + $0x8] sm:$0xff]
    %v341 = vld [vmem:[#allocation2 + $0x10] sm:$0xff]
    %v342 = vld [vmem:[#allocation2 + $0x18] sm:$0xff]
    %v343 = vld [vmem:[#allocation2 + $0x20] sm:$0xff]
    %v344 = vld [vmem:[#allocation2 + $0x28] sm:$0xff]
    %v345 = vpack.c.bf16 %v342, %v339
    %v346 = vpack.c.bf16 %v343, %v340
    %v347 = vpack.c.bf16 %v344, %v341
    %v348 = vld [vmem:[%s3] sm:$0xf]
    %v349 = vld [vmem:[%s3 + $0x4] sm:$0xf]
    %v350 = vld [vmem:[%s3 + $0x8] sm:$0xf]
    %v351 = vld [vmem:[%s3 + $0xc] sm:$0xf]
    %v352 = vld [vmem:[%s3 + $0x10] sm:$0xf]
    %v353 = vld [vmem:[%s3 + $0x14] sm:$0xf]
    %v354 = vld [vmem:[%s3 + $0x18] sm:$0xf]
    %v355 = vld [vmem:[%s3 + $0x1c] sm:$0xf]
    %v356 = vld [vmem:[%s3 + $0x20] sm:$0xf]
    %v357 = vld [vmem:[%s3 + $0x24] sm:$0xf]
    %v358 = vld [vmem:[%s3 + $0x28] sm:$0xf]
    %v359 = vld [vmem:[%s3 + $0x2c] sm:$0xf]
    %v360 = vld [vmem:[%s3 + $0x30] sm:$0xf]
    %v361 = vld [vmem:[%s3 + $0x34] sm:$0xf]
    %v362 = vld [vmem:[%s3 + $0x38] sm:$0xf]
    %v363 = vld [vmem:[%s3 + $0x3c] sm:$0xf]
    %v364 = vld [vmem:[%s3 + $0x40] sm:$0xf]
    %v365 = vld [vmem:[%s3 + $0x44] sm:$0xf]
    %v366 = vld [vmem:[%s3 + $0x48] sm:$0xf]
    %v367 = vld [vmem:[%s3 + $0x4c] sm:$0xf]
    %v368 = vld [vmem:[%s3 + $0x50] sm:$0xf]
    %v369 = vld [vmem:[%s3 + $0x54] sm:$0xf]
    %v370 = vld [vmem:[%s3 + $0x58] sm:$0xf]
    %v371 = vld [vmem:[%s3 + $0x5c] sm:$0xf]
    %v372 = vld [vmem:[%s3 + $0x60] sm:$0xf]
    %v373 = vld [vmem:[%s3 + $0x64] sm:$0xf]
    %v374 = vld [vmem:[%s3 + $0x68] sm:$0xf]
    %v375 = vld [vmem:[%s3 + $0x6c] sm:$0xf]
    %v376 = vld [vmem:[%s3 + $0x70] sm:$0xf]
    %v377 = vld [vmem:[%s3 + $0x74] sm:$0xf]
    %v378 = vld [vmem:[%s3 + $0x78] sm:$0xf]
    %v379 = vld [vmem:[%s3 + $0x7c] sm:$0xf]
    %v380 = vld [vmem:[%s3 + $0x80] sm:$0xf]
    %v381 = vld [vmem:[%s3 + $0x84] sm:$0xf]
    %v382 = vld [vmem:[%s3 + $0x88] sm:$0xf]
    %v383 = vld [vmem:[%s3 + $0x8c] sm:$0xf]
    %v384 = vld [vmem:[%s3 + $0x90] sm:$0xf]
    %v385 = vld [vmem:[%s3 + $0x94] sm:$0xf]
    %v386 = vld [vmem:[%s3 + $0x98] sm:$0xf]
    %v387 = vld [vmem:[%s3 + $0x9c] sm:$0xf]
    %v388 = vld [vmem:[%s3 + $0xa0] sm:$0xf]
    %v389 = vld [vmem:[%s3 + $0xa4] sm:$0xf]
    %v390 = vld [vmem:[%s3 + $0xa8] sm:$0xf]
    %v391 = vld [vmem:[%s3 + $0xac] sm:$0xf]
    %v392 = vld [vmem:[%s3 + $0xb0] sm:$0xf]
    %v393 = vld [vmem:[%s3 + $0xb4] sm:$0xf]
    %v394 = vld [vmem:[%s3 + $0xb8] sm:$0xf]
    %v395 = vld [vmem:[%s3 + $0xbc] sm:$0xf]
    %v444 = vunpack.c.l.b16 %v348
    %v445 = vunpack.c.l.b16 %v349
    %v446 = vunpack.c.l.b16 %v350
    %v447 = vunpack.c.l.b16 %v351
    %v448 = vunpack.c.l.b16 %v352
    %v449 = vunpack.c.l.b16 %v353
    %v450 = vunpack.c.l.b16 %v354
    %v451 = vunpack.c.l.b16 %v355
    %v452 = vunpack.c.l.b16 %v356
    %v453 = vunpack.c.l.b16 %v357
    %v454 = vunpack.c.l.b16 %v358
    %v455 = vunpack.c.l.b16 %v359
    %v456 = vunpack.c.l.b16 %v360
    %v457 = vunpack.c.l.b16 %v361
    %v458 = vunpack.c.l.b16 %v362
    %v459 = vunpack.c.l.b16 %v363
    %v460 = vunpack.c.l.b16 %v364
    %v461 = vunpack.c.l.b16 %v365
    %v462 = vunpack.c.l.b16 %v366
    %v463 = vunpack.c.l.b16 %v367
    %v464 = vunpack.c.l.b16 %v368
    %v465 = vunpack.c.l.b16 %v369
    %v466 = vunpack.c.l.b16 %v370
    %v467 = vunpack.c.l.b16 %v371
    %v468 = vunpack.c.l.b16 %v372
    %v469 = vunpack.c.l.b16 %v373
    %v470 = vunpack.c.l.b16 %v374
    %v471 = vunpack.c.l.b16 %v375
    %v472 = vunpack.c.l.b16 %v376
    %v473 = vunpack.c.l.b16 %v377
    %v474 = vunpack.c.l.b16 %v378
    %v475 = vunpack.c.l.b16 %v379
    %v476 = vunpack.c.l.b16 %v380
    %v477 = vunpack.c.l.b16 %v381
    %v478 = vunpack.c.l.b16 %v382
    %v479 = vunpack.c.l.b16 %v383
    %v480 = vunpack.c.l.b16 %v384
    %v481 = vunpack.c.l.b16 %v385
    %v482 = vunpack.c.l.b16 %v386
    %v483 = vunpack.c.l.b16 %v387
    %v484 = vunpack.c.l.b16 %v388
    %v485 = vunpack.c.l.b16 %v389
    %v486 = vunpack.c.l.b16 %v390
    %v487 = vunpack.c.l.b16 %v391
    %v488 = vunpack.c.l.b16 %v392
    %v489 = vunpack.c.l.b16 %v393
    %v490 = vunpack.c.l.b16 %v394
    %v491 = vunpack.c.l.b16 %v395
    %v492 = vpack.c.b16 %v445, %v444
    %v493 = vpack.c.b16 %v447, %v446
    %v494 = vpack.c.b16 %v449, %v448
    %v495 = vpack.c.b16 %v451, %v450
    %v496 = vpack.c.b16 %v453, %v452
    %v497 = vpack.c.b16 %v455, %v454
    %v498 = vpack.c.b16 %v457, %v456
    %v499 = vpack.c.b16 %v459, %v458
    %v500 = vpack.c.b16 %v461, %v460
    %v501 = vpack.c.b16 %v463, %v462
    %v502 = vpack.c.b16 %v465, %v464
    %v503 = vpack.c.b16 %v467, %v466
    %v504 = vpack.c.b16 %v469, %v468
    %v505 = vpack.c.b16 %v471, %v470
    %v506 = vpack.c.b16 %v473, %v472
    %v507 = vpack.c.b16 %v475, %v474
    %v508 = vpack.c.b16 %v477, %v476
    %v509 = vpack.c.b16 %v479, %v478
    %v510 = vpack.c.b16 %v481, %v480
    %v511 = vpack.c.b16 %v483, %v482
    %v512 = vpack.c.b16 %v485, %v484
    %v513 = vpack.c.b16 %v487, %v486
    %v514 = vpack.c.b16 %v489, %v488
    %v515 = vpack.c.b16 %v491, %v490
    %540 = vmatprep.subr.bf16.mxu0 0
    %541 = vmatpush1.bf16.msra.mxu0 %v492
    %542 = vmatprep.subr.bf16.mxu0 0
    %543 = vmatpush1.bf16.msra.mxu0 %v493
    %544 = vmatprep.subr.bf16.mxu0 0
    %545 = vmatpush1.bf16.msra.mxu0 %v494
    %546 = vmatprep.subr.bf16.mxu0 0
    %547 = vmatpush1.bf16.msra.mxu0 %v495
    %548 = vmatprep.subr.bf16.mxu0 0
    %549 = vmatpush1.bf16.msra.mxu0 %v496
    %550 = vmatprep.subr.bf16.mxu0 0
    %551 = vmatpush1.bf16.msra.mxu0 %v497
    %552 = vmatprep.subr.bf16.mxu0 0
    %553 = vmatpush1.bf16.msra.mxu0 %v498
    %554 = vmatprep.subr.bf16.mxu0 0
    %555 = vmatpush1.bf16.msra.mxu0 %v499
    %556 = vmatprep.subr.bf16.mxu0 0
    %557 = vmatpush1.bf16.msra.mxu0 %v500
    %558 = vmatprep.subr.bf16.mxu0 0
    %559 = vmatpush1.bf16.msra.mxu0 %v501
    %560 = vmatprep.subr.bf16.mxu0 0
    %561 = vmatpush1.bf16.msra.mxu0 %v502
    %562 = vmatprep.subr.bf16.mxu0 0
    %563 = vmatpush1.bf16.msra.mxu0 %v503
    %564 = vmatprep.subr.bf16.mxu0 0
    %565 = vmatpush1.bf16.msra.mxu0 %v504
    %566 = vmatprep.subr.bf16.mxu0 0
    %567 = vmatpush1.bf16.msra.mxu0 %v505
    %568 = vmatprep.subr.bf16.mxu0 0
    %569 = vmatpush1.bf16.msra.mxu0 %v506
    %570 = vmatprep.subr.bf16.mxu0 0
    %571 = vmatpush1.bf16.msra.mxu0 %v507
    %572 = vmatprep.mubr.bf16.mxu0 %v346
    %573 = vmatmul.mubr.bf16.gmra.mrb[0].mxu0 %v345
    %v574 = vpop.f32.mrb[0].mxu0
    %v575 = vadd.f32 0.0, %v574
    %v576 = vpop.f32.mrb[0].mxu0
    %v577 = vpop.f32.mrb[0].mxu0
    %v578 = vadd.f32 0.0, %v577
    %v579 = vpop.f32.mrb[0].mxu0
    %580 = vdwg.mxu0
    %581 = vmatprep.subr.bf16.mxu0 0
    %582 = vmatpush1.bf16.msra.mxu0 %v508
    %583 = vmatprep.subr.bf16.mxu0 0
    %584 = vmatpush1.bf16.msra.mxu0 %v509
    %585 = vmatprep.subr.bf16.mxu0 0
    %586 = vmatpush1.bf16.msra.mxu0 %v510
    %587 = vmatprep.subr.bf16.mxu0 0
    %588 = vmatpush1.bf16.msra.mxu0 %v511
    %589 = vmatprep.subr.bf16.mxu0 0
    %590 = vmatpush1.bf16.msra.mxu0 %v512
    %591 = vmatprep.subr.bf16.mxu0 0
    %592 = vmatpush1.bf16.msra.mxu0 %v513
    %593 = vmatprep.subr.bf16.mxu0 0
    %594 = vmatpush1.bf16.msra.mxu0 %v514
    %595 = vmatprep.subr.bf16.mxu0 0
    %596 = vmatpush1.bf16.msra.mxu0 %v515
    %597 = vmatprep.subr.bf16.mxu0 0
    %598 = vmatpush1.bf16.msra.mxu0 0
    %599 = vmatprep.subr.bf16.mxu0 0
    %600 = vmatpush1.bf16.msra.mxu0 0
    %601 = vmatprep.subr.bf16.mxu0 0
    %602 = vmatpush1.bf16.msra.mxu0 0
    %603 = vmatprep.subr.bf16.mxu0 0
    %604 = vmatpush1.bf16.msra.mxu0 0
    %605 = vmatprep.subr.bf16.mxu0 0
    %606 = vmatpush1.bf16.msra.mxu0 0
    %607 = vmatprep.subr.bf16.mxu0 0
    %608 = vmatpush1.bf16.msra.mxu0 0
    %609 = vmatprep.subr.bf16.mxu0 0
    %610 = vmatpush1.bf16.msra.mxu0 0
    %611 = vmatprep.subr.bf16.mxu0 0
    %612 = vmatpush1.bf16.msra.mxu0 0
    %613 = vmatprep.mubr.bf16.mxu0 0
    %614 = vmatmul.mubr.bf16.gmra.mrb[0].mxu0 %v347
    %v615 = vpop.f32.mrb[0].mxu0
    %v616 = vadd.f32 %v575, %v615
    %v617 = vpop.f32.mrb[0].mxu0
    %v618 = vpop.f32.mrb[0].mxu0
    %v619 = vadd.f32 %v578, %v618
    %v620 = vpop.f32.mrb[0].mxu0
    %621 = vdwg.mxu0
    %v622 = vadd.f32 %v333, %v616
    %v623 = vadd.f32 %v336, %v619
    %v624 = vmax.f32 %v622, 0.0
    %v625 = vmax.f32 %v623, 0.0
    %v626 = vpack.c.bf16 %v625, %v624
    %v628 = vunpack.c.l.b16 %v626
    %v629 = vunpack.c.h.b16 %v626
    %v630 = vpack.c.b16 %v628, %v628
    %v631 = vpack.c.b16 %v629, %v629
    %634 = vst [vmem:[%s6] sm:$0xf] %v630
    %635 = vst [vmem:[%s6 + $0x4] sm:$0xf] %v631
  $region33: #{know_rgfd_forward.10} parent=0 // pred_fallthru
    _
  // Predicated region
  $region34: #{know_rgfd_forward.10} parent=0 // pred_check
    _
  $region35: #{know_rgfd_forward.10} parent=0 // pred_check_branch
    %637 = sbr.rel (0) target = $region37
  $region36: #{know_rgfd_forward.10} parent=0 // pred_region
    _
  $region37: #{know_rgfd_forward.10} parent=0 // pred_fallthru
    _
  // Predicated region
  $region38: #{know_rgfd_forward.10} parent=0 // pred_check
    _
  $region39: #{know_rgfd_forward.10} parent=0 // pred_check_branch
    %639 = sbr.rel (0) target = $region41
  $region40: #{know_rgfd_forward.10} parent=0 // pred_region
    _
  $region41: #{know_rgfd_forward.10} parent=0 // pred_fallthru
    _

</llo_original>
